<compile_context>
chip_gen: v5e
topology: v5e:2x2
jax: 0.10.0
libtpu: 0.0.40
codegen_flags: <defaults>
</compile_context>

<pallas_src>
import functools

import jax
import jax.numpy as jnp
from jax.experimental import pallas as pl
from jax.experimental.pallas import tpu as pltpu


# ----------------------------------------------------------------------------
# generation-aware VMEM budgeting
# ----------------------------------------------------------------------------
def _vmem_capacity_bytes():
    try:
        return int(pltpu.get_tpu_info().vmem_capacity_bytes)
    except Exception:
        return 64 * 1024 * 1024            # conservative default (v7x per-core)


_VMEM_BYTES = _vmem_capacity_bytes()
_VMEM_LIMIT = int(min(_VMEM_BYTES * 0.8, 110 * 1024 * 1024))
_MOSAIC = functools.partial(pltpu.CompilerParams, vmem_limit_bytes=_VMEM_LIMIT)


def _round_up(v, m):
    return (v + m - 1) // m * m


def _row_tile(rows, bytes_per_row, fixed_bytes=0):
    """Row tile for the flattened matmul kernels, sized to the chip's VMEM.

    `bytes_per_row` must already account for double-buffering of the row tiles;
    `fixed_bytes` accounts for (double-buffered) weight/bias blocks.
    """
    budget = max(4 * 1024 * 1024, int(0.30 * _VMEM_BYTES) - fixed_bytes)
    tr = 1024 if rows >= 4096 else (512 if rows >= 1024 else 256)
    tr = min(tr, _round_up(rows, 8))
    while tr > 64 and tr * bytes_per_row > budget:
        tr //= 2
    return _round_up(max(tr, 8), 8)


def _pad_rows(a, rows_p):
    rows = a.shape[0]
    return a if rows == rows_p else jnp.pad(a, ((0, rows_p - rows), (0, 0)))


# ----------------------------------------------------------------------------
# Kernel 1: pointwise (1x1) conv + folded-BN bias + ReLU
# ----------------------------------------------------------------------------
def _pw_bn_relu_kernel(x_ref, w_ref, b_ref, o_ref):
    y = jnp.dot(x_ref[...], w_ref[...], preferred_element_type=jnp.float32)
    o_ref[...] = jnp.maximum(y + b_ref[...], 0.0).astype(o_ref.dtype)


def pointwise_conv_bn_relu(x2d, w, b):
    rows, cin = x2d.shape
    cout = w.shape[1]
    bpr = 2 * 2 * cin + 2 * 2 * cout              # dbl-buffered bf16 in/out rows
    tr = _row_tile(rows, bpr, fixed_bytes=2 * 2 * cin * cout)
    rows_p = _round_up(rows, tr)
    out = pl.pallas_call(
        _pw_bn_relu_kernel,
        out_shape=jax.ShapeDtypeStruct((rows_p, cout), jnp.bfloat16),
        grid=(rows_p // tr,),
        in_specs=[
            pl.BlockSpec((tr, cin), lambda i: (i, 0)),
            pl.BlockSpec((cin, cout), lambda i: (0, 0)),
            pl.BlockSpec((1, cout), lambda i: (0, 0)),
        ],
        out_specs=pl.BlockSpec((tr, cout), lambda i: (i, 0)),
        compiler_params=_MOSAIC(dimension_semantics=("parallel",)),
    )(_pad_rows(x2d, rows_p), w, b)
    return out if rows_p == rows else out[:rows]


# ----------------------------------------------------------------------------
# Kernel 2: 3x3 conv (pad 1, stride s) + folded-BN bias + ReLU
#   One image per grid step.  The zero-padded image is built in a VMEM scratch
#   (no jnp.pad HBM pass).  Output rows are processed in tiles of TRo rows so
#   the f32 accumulator stays small; per vertical tap the 3 horizontal taps are
#   concatenated along channels so each matmul has K = 3*C.  Stride and the
#   valid-column trim are folded into the loads / store.
# ----------------------------------------------------------------------------
def _conv3x3_bn_relu_kernel(x_ref, w_ref, b_ref, o_ref, xpad_ref, *,
                            H, W, C, cout, s, Ho, Wo, TRo):
    # Build zero-padded image in VMEM: original (h, w) -> padded (h + 1, w + 1).
    xpad_ref[...] = jnp.zeros(xpad_ref.shape, xpad_ref.dtype)
    xpad_ref[1:H + 1, 1:W + 1, :] = x_ref[...]

    n_tiles = -(-Ho // TRo)
    for tix in range(n_tiles):
        r0 = tix * TRo                      # first output row of this tile
        nr = min(TRo, Ho - r0)              # rows in this tile (static)
        acc = jnp.zeros((nr * Wo, cout), jnp.float32)
        for dy in range(3):
            taps = []
            for dx in range(3):
                if s == 1:
                    v = xpad_ref[r0 + dy:r0 + dy + nr, dx:dx + Wo, :]
                else:
                    # strided loads fold the conv stride into the read itself:
                    # only the (nr, Wo) needed inputs are fetched / multiplied.
                    v = xpad_ref[pl.ds(r0 * s + dy, nr, s),
                                 pl.ds(dx, Wo, s), :]
                taps.append(v)
            # (nr, Wo, 3C) -> (nr*Wo, 3C): K = 3*C feeds the MXU per matmul.
            slab = jnp.concatenate(taps, axis=-1).reshape(nr * Wo, 3 * C)
            acc = acc + jnp.dot(slab, w_ref[dy],
                                preferred_element_type=jnp.float32)
        y = jnp.maximum(acc + b_ref[...], 0.0)
        o_ref[r0 * Wo:r0 * Wo + nr * Wo, :] = y.astype(o_ref.dtype)


def conv3x3_bn_relu(x_nhwc, w2f, b2, stride):
    """3x3 conv (pad 1, stride s) + folded BN + ReLU -> (N, Ho, Wo, cout)."""
    N, H, W, C = x_nhwc.shape
    cout = w2f.shape[-1]
    s = stride
    Ho = (H - 1) // s + 1
    Wo = (W - 1) // s + 1
    Hp, Wp = H + 2, W + 2                    # 1-pixel halo all around
    TRo = max(1, min(Ho, 512 // max(1, Wo)))  # ~512 matmul rows per tile
    # (3, 3, C, cout) -> (dy, dx*C + c, cout): matches the channel-concat slab.
    w3c = w2f.reshape(3, 3 * C, cout)
    kernel = functools.partial(_conv3x3_bn_relu_kernel, H=H, W=W, C=C,
                               cout=cout, s=s, Ho=Ho, Wo=Wo, TRo=TRo)
    out = pl.pallas_call(
        kernel,
        out_shape=jax.ShapeDtypeStruct((N, Ho * Wo, cout), jnp.bfloat16),
        grid=(N,),
        in_specs=[
            pl.BlockSpec((None, H, W, C), lambda n: (n, 0, 0, 0)),
            pl.BlockSpec((3, 3 * C, cout), lambda n: (0, 0, 0)),
            pl.BlockSpec((1, cout), lambda n: (0, 0)),
        ],
        out_specs=pl.BlockSpec((None, Ho * Wo, cout), lambda n: (n, 0, 0)),
        scratch_shapes=[pltpu.VMEM((Hp, Wp, C), jnp.bfloat16)],
        compiler_params=_MOSAIC(dimension_semantics=("parallel",)),
    )(x_nhwc, w3c, b2)
    return out.reshape(N, Ho, Wo, cout)      # free metadata reshape


# ----------------------------------------------------------------------------
# Kernel 3: 1x1 conv + folded-BN bias + shortcut (identity, or fused 1x1
#           projection + BN) + residual add + ReLU  (bf16 output)
# ----------------------------------------------------------------------------
def _conv3_residual_kernel(h_ref, w3_ref, b3_ref, *rest, proj):
    if proj:
        xs_ref, ws_ref, bs_ref, o_ref = rest
    else:
        sc_ref, o_ref = rest
    y = jnp.dot(h_ref[...], w3_ref[...], preferred_element_type=jnp.float32)
    y = y + b3_ref[...]
    if proj:
        y = y + jnp.dot(xs_ref[...], ws_ref[...],
                        preferred_element_type=jnp.float32) + bs_ref[...]
    else:
        y = y + sc_ref[...].astype(jnp.float32)
    o_ref[...] = jnp.maximum(y, 0.0).astype(o_ref.dtype)


def conv3_shortcut_add_relu(h2d, w3, b3, *, sc=None, xs=None, ws=None, bs=None):
    rows, planes = h2d.shape
    cexp = w3.shape[1]
    proj = ws is not None
    in_bytes = 2 * planes + (2 * xs.shape[1] if proj else 2 * cexp)
    bpr = 2 * in_bytes + 2 * 2 * cexp        # bf16 in + bf16 out, double-buffered
    w_bytes = 2 * planes * cexp + (2 * xs.shape[1] * cexp if proj else 0)
    tr = _row_tile(rows, bpr, fixed_bytes=2 * w_bytes)
    rows_p = _round_up(rows, tr)

    in_specs = [
        pl.BlockSpec((tr, planes), lambda i: (i, 0)),
        pl.BlockSpec((planes, cexp), lambda i: (0, 0)),
        pl.BlockSpec((1, cexp), lambda i: (0, 0)),
    ]
    args = [_pad_rows(h2d, rows_p), w3, b3]
    if proj:
        cin = xs.shape[1]
        in_specs += [
            pl.BlockSpec((tr, cin), lambda i: (i, 0)),
            pl.BlockSpec((cin, cexp), lambda i: (0, 0)),
            pl.BlockSpec((1, cexp), lambda i: (0, 0)),
        ]
        args += [_pad_rows(xs, rows_p), ws, bs]
    else:
        in_specs.append(pl.BlockSpec((tr, cexp), lambda i: (i, 0)))
        args.append(_pad_rows(sc, rows_p))

    out = pl.pallas_call(
        functools.partial(_conv3_residual_kernel, proj=proj),
        out_shape=jax.ShapeDtypeStruct((rows_p, cexp), jnp.bfloat16),
        grid=(rows_p // tr,),
        in_specs=in_specs,
        out_specs=pl.BlockSpec((tr, cexp), lambda i: (i, 0)),
        compiler_params=_MOSAIC(dimension_semantics=("parallel",)),
    )(*args)
    return out if rows_p == rows else out[:rows]


# ----------------------------------------------------------------------------
# Bottleneck forward (wrapper)
# ----------------------------------------------------------------------------
def bottleneck_forward(x_nchw, p, stride=1):
    s = stride
    # cast to bf16 BEFORE the layout transpose (halves the transpose traffic)
    x = jnp.transpose(x_nchw.astype(jnp.bfloat16), (0, 2, 3, 1))  # NCHW -> NHWC
    N, H, W, cin = x.shape
    planes = p["w1"].shape[1]
    cexp = p["w3"].shape[1]

    # fold the BN scale into the conv weights once; kernels only add the bias
    w1 = (p["w1"] * p["s1"][None, :]).astype(jnp.bfloat16)
    w2 = (p["w2"] * p["s2"][None, None, None, :]).astype(jnp.bfloat16)
    w3 = (p["w3"] * p["s3"][None, :]).astype(jnp.bfloat16)
    b1 = p["b1"].reshape(1, -1).astype(jnp.float32)
    b2 = p["b2"].reshape(1, -1).astype(jnp.float32)
    b3 = p["b3"].reshape(1, -1).astype(jnp.float32)

    # conv1 (1x1) + bn1 + relu
    out1 = pointwise_conv_bn_relu(x.reshape(N * H * W, cin), w1, b1)
    out1 = out1.reshape(N, H, W, planes)

    # conv2 (3x3, pad 1, stride s) + bn2 + relu
    # stride, halo padding and the valid-column trim are folded into the kernel
    out2 = conv3x3_bn_relu(out1, w2, b2, s)            # (N, Ho, Wo, planes)
    Ho, Wo = out2.shape[1], out2.shape[2]
    rows = N * Ho * Wo

    # conv3 (1x1) + bn3 + shortcut + add + relu, fused in a single kernel
    if p["ws"] is None:                                # identity shortcut
        assert s == 1 and cin == cexp, (
            "identity shortcut requires stride == 1 and in_planes == 4*planes")
        out3 = conv3_shortcut_add_relu(out2.reshape(rows, planes), w3, b3,
                                       sc=x.reshape(rows, cexp))
    else:                                              # 1x1 projection + BN
        ws = (p["ws"] * p["ss"][None, :]).astype(jnp.bfloat16)
        bs = p["bs"].reshape(1, -1).astype(jnp.float32)
        xs = x[:, ::s, ::s, :].reshape(rows, cin)
        out3 = conv3_shortcut_add_relu(out2.reshape(rows, planes), w3, b3,
                                       xs=xs, ws=ws, bs=bs)

    y = out3.reshape(N, Ho, Wo, cexp)
    return jnp.transpose(y, (0, 3, 1, 2))              # NHWC -> NCHW (bf16)


# ----------------------------------------------------------------------------
# Deterministic parameter construction + BN folding
# ----------------------------------------------------------------------------
def _fold_bn(gamma, beta, mean, var, eps=1e-5):
    scale = gamma / jnp.sqrt(var + eps)
    bias = beta - mean * scale
    return scale, bias


def make_params(key, in_planes, planes, stride):
    expansion = 4
    cexp = expansion * planes
    ks = jax.random.split(key, 20)

    def bn_params(k, c):
        k1, k2, k3, k4 = jax.random.split(k, 4)
        gamma = 1.0 + 0.1 * jax.random.normal(k1, (c,), jnp.float32)
        beta = 0.1 * jax.random.normal(k2, (c,), jnp.float32)
        mean = 0.1 * jax.random.normal(k3, (c,), jnp.float32)
        var = 0.5 + jnp.abs(jax.random.normal(k4, (c,), jnp.float32)) * 0.5
        return _fold_bn(gamma, beta, mean, var)

    p = {}
    p["w1"] = 0.2 * jax.random.normal(ks[0], (in_planes, planes), jnp.float32)
    p["s1"], p["b1"] = bn_params(ks[1], planes)
    p["w2"] = 0.2 * jax.random.normal(ks[2], (3, 3, planes, planes), jnp.float32)
    p["s2"], p["b2"] = bn_params(ks[3], planes)
    p["w3"] = 0.2 * jax.random.normal(ks[4], (planes, cexp), jnp.float32)
    p["s3"], p["b3"] = bn_params(ks[5], cexp)
    if stride != 1 or in_planes != cexp:
        p["ws"] = 0.2 * jax.random.normal(ks[6], (in_planes, cexp), jnp.float32)
        p["ss"], p["bs"] = bn_params(ks[7], cexp)
    else:
        p["ws"] = p["ss"] = p["bs"] = None
    return p


# ----------------------------------------------------------------------------
# Pure-JAX reference (same eval-mode BN folding, same bf16 operand precision)
# ----------------------------------------------------------------------------
def reference_forward(x_nchw, p, stride):
    dn = ("NHWC", "HWIO", "NHWC")
    x = jnp.transpose(x_nchw.astype(jnp.bfloat16), (0, 2, 3, 1))

    def conv(y, w_f32, strides, padding):
        return jax.lax.conv_general_dilated(
            y, w_f32.astype(jnp.bfloat16), strides, padding,
            dimension_numbers=dn, preferred_element_type=jnp.float32)

    w1 = (p["w1"] * p["s1"][None, :]).reshape(1, 1, *p["w1"].shape)
    out = jax.nn.relu(conv(x, w1, (1, 1), "VALID") + p["b1"]).astype(jnp.bfloat16)

    w2 = p["w2"] * p["s2"][None, None, None, :]
    out = jax.nn.relu(conv(out, w2, (stride, stride), ((1, 1), (1, 1))) + p["b2"]
                      ).astype(jnp.bfloat16)

    w3 = (p["w3"] * p["s3"][None, :]).reshape(1, 1, *p["w3"].shape)
    out = conv(out, w3, (1, 1), "VALID") + p["b3"]

    if p["ws"] is None:
        sc = x.astype(jnp.float32)[:, ::stride, ::stride, :]
    else:
        ws = (p["ws"] * p["ss"][None, :]).reshape(1, 1, *p["ws"].shape)
        sc = conv(x, ws, (stride, stride), "VALID") + p["bs"]

    out = jax.nn.relu(out + sc)
    return jnp.transpose(out, (0, 3, 1, 2))


if __name__ == "__main__":
    N, in_planes, H, W = 2, 4, 16, 16
    planes, stride = 4, 1

    key = jax.random.PRNGKey(0)
    k_params, k_x = jax.random.split(key)
    params = make_params(k_params, in_planes, planes, stride)
    x = jax.random.normal(k_x, (N, in_planes, H, W), jnp.float32)

    fwd = jax.jit(lambda xx, pp: bottleneck_forward(xx, pp, stride))
    out = jax.block_until_ready(fwd(x, params))

    ref = reference_forward(x, params, stride)
    assert out.shape == ref.shape == (N, 4 * planes, H, W), (out.shape, ref.shape)

    out_f = out.astype(jnp.float32)
    ref_f = ref.astype(jnp.float32)
    max_err = float(jnp.max(jnp.abs(out_f - ref_f)))
    ok = bool(jnp.allclose(out_f, ref_f, atol=5e-2, rtol=5e-2))
    assert ok, f"max abs error {max_err}"

    print("KERNEL_OK")
</pallas_src>

<mosaic_0001>
module attributes {stable_mosaic.version = 11 : i64} {
  func.func @_pw_bn_relu_kernel(%arg0: i32, %arg1: memref<256x4xbf16, #tpu.memory_space<vmem>>, %arg2: memref<4x4xbf16, #tpu.memory_space<vmem>>, %arg3: memref<1x4xf32, #tpu.memory_space<vmem>>, %arg4: memref<256x4xbf16, #tpu.memory_space<vmem>>) attributes {dimension_semantics = [#tpu.dimension_semantics<parallel>], iteration_bounds = array<i64: 2>, scalar_prefetch = 0 : i64, scratch_operands = 0 : i64, tpu.core_type = #tpu.core_type<tc>, window_params = [{transform_indices = @transform_0, window_bounds = array<i64: 256, 4>}, {pipeline_mode = #tpu.pipeline_mode<synchronous>, transform_indices = @transform_1, window_bounds = array<i64: 4, 4>}, {pipeline_mode = #tpu.pipeline_mode<synchronous>, transform_indices = @transform_2, window_bounds = array<i64: 1, 4>}, {transform_indices = @transform_3, window_bounds = array<i64: 256, 4>}]} {
    %c0 = arith.constant 0 : index
    %c0_0 = arith.constant 0 : index
    %0 = vector.load %arg1[%c0, %c0_0] : memref<256x4xbf16, #tpu.memory_space<vmem>>, vector<256x4xbf16>
    %c0_1 = arith.constant 0 : index
    %c0_2 = arith.constant 0 : index
    %1 = vector.load %arg2[%c0_1, %c0_2] : memref<4x4xbf16, #tpu.memory_space<vmem>>, vector<4x4xbf16>
    %cst = arith.constant dense<0.000000e+00> : vector<256x4xf32>
    %2 = tpu.matmul %0, %1, %cst {dimension_numbers = #tpu.dot_dimension_numbers<[1], [0], [0], [1], [0, 0, 1, 1], [], []>} : vector<256x4xbf16>, vector<4x4xbf16>, vector<256x4xf32> -> vector<256x4xf32>
    %c0_3 = arith.constant 0 : index
    %c0_4 = arith.constant 0 : index
    %3 = vector.load %arg3[%c0_3, %c0_4] : memref<1x4xf32, #tpu.memory_space<vmem>>, vector<1x4xf32>
    %4 = vector.broadcast %3 : vector<1x4xf32> to vector<256x4xf32>
    %5 = arith.addf %2, %4 : vector<256x4xf32>
    %cst_5 = arith.constant 0.000000e+00 : f32
    %6 = vector.broadcast %cst_5 : f32 to vector<256x4xf32>
    %7 = arith.maximumf %5, %6 : vector<256x4xf32>
    %8 = arith.truncf %7 : vector<256x4xf32> to vector<256x4xbf16>
    %c0_6 = arith.constant 0 : index
    %c0_7 = arith.constant 0 : index
    %9 = vector.load %arg4[%c0_6, %c0_7] : memref<256x4xbf16, #tpu.memory_space<vmem>>, vector<256x4xbf16>
    tpu.vector_store %arg4[%c0_6, %c0_7], %8 {strides = array<i32>} : memref<256x4xbf16, #tpu.memory_space<vmem>>, vector<256x4xbf16>,
    return
  }
  func.func @transform_0(%arg0: i32) -> (i32, i32) {
    %c0_i32 = arith.constant 0 : i32
    %c0_i32_0 = arith.constant 0 : i32
    return %arg0, %c0_i32 : i32, i32
  }
  func.func @transform_1(%arg0: i32) -> (i32, i32) {
    %c0_i32 = arith.constant 0 : i32
    %c0_i32_0 = arith.constant 0 : i32
    %c0_i32_1 = arith.constant 0 : i32
    return %c0_i32, %c0_i32_0 : i32, i32
  }
  func.func @transform_2(%arg0: i32) -> (i32, i32) {
    %c0_i32 = arith.constant 0 : i32
    %c0_i32_0 = arith.constant 0 : i32
    %c0_i32_1 = arith.constant 0 : i32
    return %c0_i32, %c0_i32_0 : i32, i32
  }
  func.func @transform_3(%arg0: i32) -> (i32, i32) {
    %c0_i32 = arith.constant 0 : i32
    %c0_i32_0 = arith.constant 0 : i32
    return %arg0, %c0_i32 : i32, i32
  }
}

module attributes {stable_mosaic.version = 11 : i64} {
  func.func @_conv3_residual_kernel(%arg0: i32, %arg1: memref<256x4xbf16, #tpu.memory_space<vmem>>, %arg2: memref<4x16xbf16, #tpu.memory_space<vmem>>, %arg3: memref<1x16xf32, #tpu.memory_space<vmem>>, %arg4: memref<256x4xbf16, #tpu.memory_space<vmem>>, %arg5: memref<4x16xbf16, #tpu.memory_space<vmem>>, %arg6: memref<1x16xf32, #tpu.memory_space<vmem>>, %arg7: memref<256x16xbf16, #tpu.memory_space<vmem>>) attributes {dimension_semantics = [#tpu.dimension_semantics<parallel>], iteration_bounds = array<i64: 2>, scalar_prefetch = 0 : i64, scratch_operands = 0 : i64, tpu.core_type = #tpu.core_type<tc>, window_params = [{transform_indices = @transform_0, window_bounds = array<i64: 256, 4>}, {pipeline_mode = #tpu.pipeline_mode<synchronous>, transform_indices = @transform_1, window_bounds = array<i64: 4, 16>}, {pipeline_mode = #tpu.pipeline_mode<synchronous>, transform_indices = @transform_2, window_bounds = array<i64: 1, 16>}, {transform_indices = @transform_3, window_bounds = array<i64: 256, 4>}, {pipeline_mode = #tpu.pipeline_mode<synchronous>, transform_indices = @transform_4, window_bounds = array<i64: 4, 16>}, {pipeline_mode = #tpu.pipeline_mode<synchronous>, transform_indices = @transform_5, window_bounds = array<i64: 1, 16>}, {transform_indices = @transform_6, window_bounds = array<i64: 256, 16>}]} {
    %c0 = arith.constant 0 : index
    %c0_0 = arith.constant 0 : index
    %0 = vector.load %arg1[%c0, %c0_0] : memref<256x4xbf16, #tpu.memory_space<vmem>>, vector<256x4xbf16>
    %c0_1 = arith.constant 0 : index
    %c0_2 = arith.constant 0 : index
    %1 = vector.load %arg2[%c0_1, %c0_2] : memref<4x16xbf16, #tpu.memory_space<vmem>>, vector<4x16xbf16>
    %cst = arith.constant dense<0.000000e+00> : vector<256x16xf32>
    %2 = tpu.matmul %0, %1, %cst {dimension_numbers = #tpu.dot_dimension_numbers<[1], [0], [0], [1], [0, 0, 1, 1], [], []>} : vector<256x4xbf16>, vector<4x16xbf16>, vector<256x16xf32> -> vector<256x16xf32>
    %c0_3 = arith.constant 0 : index
    %c0_4 = arith.constant 0 : index
    %3 = vector.load %arg3[%c0_3, %c0_4] : memref<1x16xf32, #tpu.memory_space<vmem>>, vector<1x16xf32>
    %4 = vector.broadcast %3 : vector<1x16xf32> to vector<256x16xf32>
    %5 = arith.addf %2, %4 : vector<256x16xf32>
    %c0_5 = arith.constant 0 : index
    %c0_6 = arith.constant 0 : index
    %6 = vector.load %arg4[%c0_5, %c0_6] : memref<256x4xbf16, #tpu.memory_space<vmem>>, vector<256x4xbf16>
    %c0_7 = arith.constant 0 : index
    %c0_8 = arith.constant 0 : index
    %7 = vector.load %arg5[%c0_7, %c0_8] : memref<4x16xbf16, #tpu.memory_space<vmem>>, vector<4x16xbf16>
    %cst_9 = arith.constant dense<0.000000e+00> : vector<256x16xf32>
    %8 = tpu.matmul %6, %7, %cst_9 {dimension_numbers = #tpu.dot_dimension_numbers<[1], [0], [0], [1], [0, 0, 1, 1], [], []>} : vector<256x4xbf16>, vector<4x16xbf16>, vector<256x16xf32> -> vector<256x16xf32>
    %9 = arith.addf %5, %8 : vector<256x16xf32>
    %c0_10 = arith.constant 0 : index
    %c0_11 = arith.constant 0 : index
    %10 = vector.load %arg6[%c0_10, %c0_11] : memref<1x16xf32, #tpu.memory_space<vmem>>, vector<1x16xf32>
    %11 = vector.broadcast %10 : vector<1x16xf32> to vector<256x16xf32>
    %12 = arith.addf %9, %11 : vector<256x16xf32>
    %cst_12 = arith.constant 0.000000e+00 : f32
    %13 = vector.broadcast %cst_12 : f32 to vector<256x16xf32>
    %14 = arith.maximumf %12, %13 : vector<256x16xf32>
    %15 = arith.truncf %14 : vector<256x16xf32> to vector<256x16xbf16>
    %c0_13 = arith.constant 0 : index
    %c0_14 = arith.constant 0 : index
    %16 = vector.load %arg7[%c0_13, %c0_14] : memref<256x16xbf16, #tpu.memory_space<vmem>>, vector<256x16xbf16>
    tpu.vector_store %arg7[%c0_13, %c0_14], %15 {strides = array<i32>} : memref<256x16xbf16, #tpu.memory_space<vmem>>, vector<256x16xbf16>,
    return
  }
  func.func @transform_0(%arg0: i32) -> (i32, i32) {
    %c0_i32 = arith.constant 0 : i32
    %c0_i32_0 = arith.constant 0 : i32
    return %arg0, %c0_i32 : i32, i32
  }
  func.func @transform_1(%arg0: i32) -> (i32, i32) {
    %c0_i32 = arith.constant 0 : i32
    %c0_i32_0 = arith.constant 0 : i32
    %c0_i32_1 = arith.constant 0 : i32
    return %c0_i32, %c0_i32_0 : i32, i32
  }
  func.func @transform_2(%arg0: i32) -> (i32, i32) {
    %c0_i32 = arith.constant 0 : i32
    %c0_i32_0 = arith.constant 0 : i32
    %c0_i32_1 = arith.constant 0 : i32
    return %c0_i32, %c0_i32_0 : i32, i32
  }
  func.func @transform_3(%arg0: i32) -> (i32, i32) {
    %c0_i32 = arith.constant 0 : i32
    %c0_i32_0 = arith.constant 0 : i32
    return %arg0, %c0_i32 : i32, i32
  }
  func.func @transform_4(%arg0: i32) -> (i32, i32) {
    %c0_i32 = arith.constant 0 : i32
    %c0_i32_0 = arith.constant 0 : i32
    %c0_i32_1 = arith.constant 0 : i32
    return %c0_i32, %c0_i32_0 : i32, i32
  }
  func.func @transform_5(%arg0: i32) -> (i32, i32) {
    %c0_i32 = arith.constant 0 : i32
    %c0_i32_0 = arith.constant 0 : i32
    %c0_i32_1 = arith.constant 0 : i32
    return %c0_i32, %c0_i32_0 : i32, i32
  }
  func.func @transform_6(%arg0: i32) -> (i32, i32) {
    %c0_i32 = arith.constant 0 : i32
    %c0_i32_0 = arith.constant 0 : i32
    return %arg0, %c0_i32 : i32, i32
  }
}

module attributes {stable_mosaic.version = 11 : i64} {
  func.func @_conv3x3_bn_relu_kernel(%arg0: i32, %arg1: memref<1x16x16x4xbf16, #tpu.memory_space<vmem>>, %arg2: memref<3x12x4xbf16, #tpu.memory_space<vmem>>, %arg3: memref<1x4xf32, #tpu.memory_space<vmem>>, %arg4: memref<1x256x4xbf16, #tpu.memory_space<vmem>>, %arg5: memref<18x18x4xbf16, #tpu.memory_space<vmem>>) attributes {dimension_semantics = [#tpu.dimension_semantics<parallel>], iteration_bounds = array<i64: 2>, scalar_prefetch = 0 : i64, scratch_operands = 1 : i64, tpu.core_type = #tpu.core_type<tc>, window_params = [{transform_indices = @transform_0, window_bounds = array<i64: 1, 16, 16, 4>}, {pipeline_mode = #tpu.pipeline_mode<synchronous>, transform_indices = @transform_1, window_bounds = array<i64: 3, 12, 4>}, {pipeline_mode = #tpu.pipeline_mode<synchronous>, transform_indices = @transform_2, window_bounds = array<i64: 1, 4>}, {transform_indices = @transform_3, window_bounds = array<i64: 1, 256, 4>}]} {
    %cst = arith.constant 0.000000e+00 : bf16
    %0 = vector.broadcast %cst : bf16 to vector<18x18x4xbf16>
    %c0 = arith.constant 0 : index
    %c0_0 = arith.constant 0 : index
    %c0_1 = arith.constant 0 : index
    %1 = vector.load %arg5[%c0, %c0_0, %c0_1] : memref<18x18x4xbf16, #tpu.memory_space<vmem>>, vector<18x18x4xbf16>
    tpu.vector_store %arg5[%c0, %c0_0, %c0_1], %0 {strides = array<i32>} : memref<18x18x4xbf16, #tpu.memory_space<vmem>>, vector<18x18x4xbf16>,
    %c0_2 = arith.constant 0 : index
    %c0_3 = arith.constant 0 : index
    %c0_4 = arith.constant 0 : index
    %c0_5 = arith.constant 0 : index
    %2 = vector.load %arg1[%c0_2, %c0_3, %c0_4, %c0_5] : memref<1x16x16x4xbf16, #tpu.memory_space<vmem>>, vector<1x16x16x4xbf16>
    %3 = vector.shape_cast %2 : vector<1x16x16x4xbf16> to vector<16x16x4xbf16>
    %c1 = arith.constant 1 : index
    %c1_6 = arith.constant 1 : index
    %c0_7 = arith.constant 0 : index
    %4 = vector.load %arg5[%c1, %c1_6, %c0_7] : memref<18x18x4xbf16, #tpu.memory_space<vmem>>, vector<16x16x4xbf16>
    tpu.vector_store %arg5[%c1, %c1_6, %c0_7], %3 {strides = array<i32>} : memref<18x18x4xbf16, #tpu.memory_space<vmem>>, vector<16x16x4xbf16>,
    %cst_8 = arith.constant 0.000000e+00 : f32
    %5 = vector.broadcast %cst_8 : f32 to vector<256x4xf32>
    %c0_9 = arith.constant 0 : index
    %c0_10 = arith.constant 0 : index
    %c0_11 = arith.constant 0 : index
    %6 = vector.load %arg5[%c0_9, %c0_10, %c0_11] : memref<18x18x4xbf16, #tpu.memory_space<vmem>>, vector<16x16x4xbf16>
    %c0_12 = arith.constant 0 : index
    %c1_13 = arith.constant 1 : index
    %c0_14 = arith.constant 0 : index
    %7 = vector.load %arg5[%c0_12, %c1_13, %c0_14] : memref<18x18x4xbf16, #tpu.memory_space<vmem>>, vector<16x16x4xbf16>
    %c0_15 = arith.constant 0 : index
    %c2 = arith.constant 2 : index
    %c0_16 = arith.constant 0 : index
    %8 = vector.load %arg5[%c0_15, %c2, %c0_16] : memref<18x18x4xbf16, #tpu.memory_space<vmem>>, vector<16x16x4xbf16>
    %9 = tpu.concatenate %6, %7, %8 in 2 : vector<16x16x4xbf16>, vector<16x16x4xbf16>, vector<16x16x4xbf16> -> vector<16x16x12xbf16>
    %10 = vector.shape_cast %9 : vector<16x16x12xbf16> to vector<256x12xbf16>
    %c0_17 = arith.constant 0 : index
    %c0_18 = arith.constant 0 : index
    %c0_19 = arith.constant 0 : index
    %11 = vector.load %arg2[%c0_17, %c0_18, %c0_19] : memref<3x12x4xbf16, #tpu.memory_space<vmem>>, vector<1x12x4xbf16>
    %12 = vector.shape_cast %11 : vector<1x12x4xbf16> to vector<12x4xbf16>
    %cst_20 = arith.constant dense<0.000000e+00> : vector<256x4xf32>
    %13 = tpu.matmul %10, %12, %cst_20 {dimension_numbers = #tpu.dot_dimension_numbers<[1], [0], [0], [1], [0, 0, 1, 1], [], []>} : vector<256x12xbf16>, vector<12x4xbf16>, vector<256x4xf32> -> vector<256x4xf32>
    %14 = arith.addf %5, %13 : vector<256x4xf32>
    %c1_21 = arith.constant 1 : index
    %c0_22 = arith.constant 0 : index
    %c0_23 = arith.constant 0 : index
    %15 = vector.load %arg5[%c1_21, %c0_22, %c0_23] : memref<18x18x4xbf16, #tpu.memory_space<vmem>>, vector<16x16x4xbf16>
    %c1_24 = arith.constant 1 : index
    %c1_25 = arith.constant 1 : index
    %c0_26 = arith.constant 0 : index
    %16 = vector.load %arg5[%c1_24, %c1_25, %c0_26] : memref<18x18x4xbf16, #tpu.memory_space<vmem>>, vector<16x16x4xbf16>
    %c1_27 = arith.constant 1 : index
    %c2_28 = arith.constant 2 : index
    %c0_29 = arith.constant 0 : index
    %17 = vector.load %arg5[%c1_27, %c2_28, %c0_29] : memref<18x18x4xbf16, #tpu.memory_space<vmem>>, vector<16x16x4xbf16>
    %18 = tpu.concatenate %15, %16, %17 in 2 : vector<16x16x4xbf16>, vector<16x16x4xbf16>, vector<16x16x4xbf16> -> vector<16x16x12xbf16>
    %19 = vector.shape_cast %18 : vector<16x16x12xbf16> to vector<256x12xbf16>
    %c1_30 = arith.constant 1 : index
    %c0_31 = arith.constant 0 : index
    %c0_32 = arith.constant 0 : index
    %20 = vector.load %arg2[%c1_30, %c0_31, %c0_32] : memref<3x12x4xbf16, #tpu.memory_space<vmem>>, vector<1x12x4xbf16>
    %21 = vector.shape_cast %20 : vector<1x12x4xbf16> to vector<12x4xbf16>
    %cst_33 = arith.constant dense<0.000000e+00> : vector<256x4xf32>
    %22 = tpu.matmul %19, %21, %cst_33 {dimension_numbers = #tpu.dot_dimension_numbers<[1], [0], [0], [1], [0, 0, 1, 1], [], []>} : vector<256x12xbf16>, vector<12x4xbf16>, vector<256x4xf32> -> vector<256x4xf32>
    %23 = arith.addf %14, %22 : vector<256x4xf32>
    %c2_34 = arith.constant 2 : index
    %c0_35 = arith.constant 0 : index
    %c0_36 = arith.constant 0 : index
    %24 = vector.load %arg5[%c2_34, %c0_35, %c0_36] : memref<18x18x4xbf16, #tpu.memory_space<vmem>>, vector<16x16x4xbf16>
    %c2_37 = arith.constant 2 : index
    %c1_38 = arith.constant 1 : index
    %c0_39 = arith.constant 0 : index
    %25 = vector.load %arg5[%c2_37, %c1_38, %c0_39] : memref<18x18x4xbf16, #tpu.memory_space<vmem>>, vector<16x16x4xbf16>
    %c2_40 = arith.constant 2 : index
    %c2_41 = arith.constant 2 : index
    %c0_42 = arith.constant 0 : index
    %26 = vector.load %arg5[%c2_40, %c2_41, %c0_42] : memref<18x18x4xbf16, #tpu.memory_space<vmem>>, vector<16x16x4xbf16>
    %27 = tpu.concatenate %24, %25, %26 in 2 : vector<16x16x4xbf16>, vector<16x16x4xbf16>, vector<16x16x4xbf16> -> vector<16x16x12xbf16>
    %28 = vector.shape_cast %27 : vector<16x16x12xbf16> to vector<256x12xbf16>
    %c2_43 = arith.constant 2 : index
    %c0_44 = arith.constant 0 : index
    %c0_45 = arith.constant 0 : index
    %29 = vector.load %arg2[%c2_43, %c0_44, %c0_45] : memref<3x12x4xbf16, #tpu.memory_space<vmem>>, vector<1x12x4xbf16>
    %30 = vector.shape_cast %29 : vector<1x12x4xbf16> to vector<12x4xbf16>
    %cst_46 = arith.constant dense<0.000000e+00> : vector<256x4xf32>
    %31 = tpu.matmul %28, %30, %cst_46 {dimension_numbers = #tpu.dot_dimension_numbers<[1], [0], [0], [1], [0, 0, 1, 1], [], []>} : vector<256x12xbf16>, vector<12x4xbf16>, vector<256x4xf32> -> vector<256x4xf32>
    %32 = arith.addf %23, %31 : vector<256x4xf32>
    %c0_47 = arith.constant 0 : index
    %c0_48 = arith.constant 0 : index
    %33 = vector.load %arg3[%c0_47, %c0_48] : memref<1x4xf32, #tpu.memory_space<vmem>>, vector<1x4xf32>
    %34 = vector.broadcast %33 : vector<1x4xf32> to vector<256x4xf32>
    %35 = arith.addf %32, %34 : vector<256x4xf32>
    %cst_49 = arith.constant 0.000000e+00 : f32
    %36 = vector.broadcast %cst_49 : f32 to vector<256x4xf32>
    %37 = arith.maximumf %35, %36 : vector<256x4xf32>
    %38 = arith.truncf %37 : vector<256x4xf32> to vector<256x4xbf16>
    %c0_50 = arith.constant 0 : index
    %c0_51 = arith.constant 0 : index
    %c0_52 = arith.constant 0 : index
    %39 = vector.load %arg4[%c0_50, %c0_51, %c0_52] : memref<1x256x4xbf16, #tpu.memory_space<vmem>>, vector<1x256x4xbf16>
    %40 = vector.shape_cast %39 : vector<1x256x4xbf16> to vector<256x4xbf16>
    %41 = vector.shape_cast %38 : vector<256x4xbf16> to vector<1x256x4xbf16>
    tpu.vector_store %arg4[%c0_50, %c0_51, %c0_52], %41 {strides = array<i32>} : memref<1x256x4xbf16, #tpu.memory_space<vmem>>, vector<1x256x4xbf16>,
    return
  }
  func.func @transform_0(%arg0: i32) -> (i32, i32, i32, i32) {
    %c0_i32 = arith.constant 0 : i32
    %c0_i32_0 = arith.constant 0 : i32
    %c0_i32_1 = arith.constant 0 : i32
    %c0_i32_2 = arith.constant 0 : i32
    return %arg0, %c0_i32, %c0_i32_0, %c0_i32_1 : i32, i32, i32, i32
  }
  func.func @transform_1(%arg0: i32) -> (i32, i32, i32) {
    %c0_i32 = arith.constant 0 : i32
    %c0_i32_0 = arith.constant 0 : i32
    %c0_i32_1 = arith.constant 0 : i32
    %c0_i32_2 = arith.constant 0 : i32
    return %c0_i32, %c0_i32_0, %c0_i32_1 : i32, i32, i32
  }
  func.func @transform_2(%arg0: i32) -> (i32, i32) {
    %c0_i32 = arith.constant 0 : i32
    %c0_i32_0 = arith.constant 0 : i32
    %c0_i32_1 = arith.constant 0 : i32
    return %c0_i32, %c0_i32_0 : i32, i32
  }
  func.func @transform_3(%arg0: i32) -> (i32, i32, i32) {
    %c0_i32 = arith.constant 0 : i32
    %c0_i32_0 = arith.constant 0 : i32
    %c0_i32_1 = arith.constant 0 : i32
    return %arg0, %c0_i32, %c0_i32_0 : i32, i32, i32
  }
}

</mosaic_0001>

<llo_original>
// kernel: _lambda_.3
$region0: #{_lambda_.3}
  #allocation0 [shape = 'u32[]', space=smem, size = 0x4, offset = 0x4, fixed_abs, tag = 'smem constant byte address 0x4 - core index']
  #allocation1 [shape = 'u32[72,128]{1,0:T(1,128)}', space=vmem, size = 0x9000, scoped, tag = 'internal scratch']
  %s0 = inlined_call_operand.vmem [shape: bf16[512,4], index: 0, kind: input, shape index: {}]
  %s1 = inlined_call_operand.vmem [shape: bf16[4,4], index: 1, kind: input, shape index: {}]
  %s2 = inlined_call_operand.vmem [shape: f32[1,4], index: 2, kind: input, shape index: {}]
  %s3 = inlined_call_operand.vmem [shape: bf16[512,4], index: 3, kind: output, shape index: {}]
  %s4 = sld [smem:[#allocation0]]
  $region45: #{_lambda_.3} parent=0
    _
  %s6 = ssub.s32 1, %s4
  %s7 = scalar_select 0, %s6, %s4
  loop: start=0, step=1, limit=4
  $region2: #{_lambda_.3} parent=0 // loop_pre_header
    _
  $region3: #{_lambda_.3} parent=0 // loop_header
    %s9 = sphi 0, %s13
    %p10 = scmp.ge.s32.totalorder %s9, 4
    %s19 = sphi 0, %s21
    %s22 = sphi 0, %s19
    %s23 = sphi 0, %s22
    %s39 = sphi 0, %s23
    %s43 = sphi 0, %s43
    %s45 = sphi 0, %s43
    %s46 = sphi 0, %s45
    %s60 = sphi 0, %s46
    %s64 = sphi 0, %s64
    %s66 = sphi 0, %s64
    %s67 = sphi 0, %s66
    %s81 = sphi 0, %s67
    %s87 = sphi 0, %s89
    %s90 = sphi 0, %s87
    %s91 = sphi 0, %s90
    %s107 = sphi 0, %s91
  $region4: #{_lambda_.3} parent=0 // loop_header_branch
    %12 = sbr.rel (%p10) target = $region8
  $region5: #{_lambda_.3} parent=0 // loop_body
    %s14 = ssub.s32 %s9, 1
    %s15 = ssub.s32 %s9, 2
    %s16 = sadd.s32 %s9, 1
    %s17 = ssub.s32 %s9, %s16
    %p18 = scmp.eq.s32.totalorder %s17, 0
    %s20 = sadd.s32 %s19, 1
    %s21 = scalar_select %p18, %s19, %s20
    %p24 = pneg %p18
    %p25 = scmp.eq.s32.totalorder %s9, 1
    %p26 = por %p24, %p25
    %p27 = scmp.ne.s32.totalorder %s19, %s22
    %p28 = scmp.eq.s32.totalorder %s9, 0
    %p29 = por %p27, %p28
    %p30 = scmp.ne.s32.totalorder %s19, %s22
    %p31 = scmp.eq.s32.totalorder %s14, 1
    %p32 = por %p30, %p31
    %p33 = scmp.ne.s32.totalorder %s22, %s23
    %p34 = scmp.eq.s32.totalorder %s14, 0
    %p35 = por %p33, %p34
    %p36 = scmp.ne.s32.totalorder %s22, %s23
    %p37 = scmp.eq.s32.totalorder %s15, 1
    %p38 = por %p36, %p37
    %p40 = scmp.ne.s32.totalorder %s23, %s39
    %p41 = scmp.eq.s32.totalorder %s15, 0
    %p42 = por %p40, %p41
    %s44 = sadd.s32 %s43, 1
    %p47 = scmp.eq.s32.totalorder %s9, 1
    %p48 = scmp.ne.s32.totalorder %s43, %s45
    %p49 = scmp.eq.s32.totalorder %s9, 0
    %p50 = por %p48, %p49
    %p51 = scmp.ne.s32.totalorder %s43, %s45
    %p52 = scmp.eq.s32.totalorder %s14, 1
    %p53 = por %p51, %p52
    %p54 = scmp.ne.s32.totalorder %s45, %s46
    %p55 = scmp.eq.s32.totalorder %s14, 0
    %p56 = por %p54, %p55
    %p57 = scmp.ne.s32.totalorder %s45, %s46
    %p58 = scmp.eq.s32.totalorder %s15, 1
    %p59 = por %p57, %p58
    %p61 = scmp.ne.s32.totalorder %s46, %s60
    %p62 = scmp.eq.s32.totalorder %s15, 0
    %p63 = por %p61, %p62
    %s65 = sadd.s32 %s64, 1
    %p68 = scmp.eq.s32.totalorder %s9, 1
    %p69 = scmp.ne.s32.totalorder %s64, %s66
    %p70 = scmp.eq.s32.totalorder %s9, 0
    %p71 = por %p69, %p70
    %p72 = scmp.ne.s32.totalorder %s64, %s66
    %p73 = scmp.eq.s32.totalorder %s14, 1
    %p74 = por %p72, %p73
    %p75 = scmp.ne.s32.totalorder %s66, %s67
    %p76 = scmp.eq.s32.totalorder %s14, 0
    %p77 = por %p75, %p76
    %p78 = scmp.ne.s32.totalorder %s66, %s67
    %p79 = scmp.eq.s32.totalorder %s15, 1
    %p80 = por %p78, %p79
    %p82 = scmp.ne.s32.totalorder %s67, %s81
    %p83 = scmp.eq.s32.totalorder %s15, 0
    %p84 = por %p82, %p83
    %s85 = ssub.s32 %s9, %s16
    %p86 = scmp.eq.s32.totalorder %s85, 0
    %s88 = sadd.s32 %s87, 1
    %s89 = scalar_select %p86, %s87, %s88
    %p92 = pneg %p86
    %p93 = scmp.eq.s32.totalorder %s9, 1
    %p94 = por %p92, %p93
    %p95 = scmp.ne.s32.totalorder %s87, %s90
    %p96 = scmp.eq.s32.totalorder %s9, 0
    %p97 = por %p95, %p96
    %p98 = scmp.ne.s32.totalorder %s87, %s90
    %p99 = scmp.eq.s32.totalorder %s14, 1
    %p100 = por %p98, %p99
    %p101 = scmp.ne.s32.totalorder %s90, %s91
    %p102 = scmp.eq.s32.totalorder %s14, 0
    %p103 = por %p101, %p102
    %p104 = scmp.ne.s32.totalorder %s90, %s91
    %p105 = scmp.eq.s32.totalorder %s15, 1
    %p106 = por %p104, %p105
    %p108 = scmp.ne.s32.totalorder %s91, %s107
    %p109 = scmp.eq.s32.totalorder %s15, 0
    %p110 = por %p108, %p109
    %p111 = scmp.le.s32.totalorder 1, %s9
    %p112 = scmp.lt.s32.totalorder %s9, 3
    %p113 = pnand %p111, %p112
    %p114 = pneg %p113
    // Predicated region
    $region9: #{_lambda_.3} parent=5 // pred_check
      _
    $region10: #{_lambda_.3} parent=5 // pred_check_branch
      %116 = sbr.rel (%p113) target = $region12
    $region11: #{_lambda_.3} parent=5 // pred_region
      %s117 = ssub.s32 %s9, 1
      // Predicated region
      $region13: #{_lambda_.3} parent=11 // pred_check
        %p118 = pneg %p56
      $region14: #{_lambda_.3} parent=11 // pred_check_branch
        %120 = sbr.rel (%p118) target = $region16
      $region15: #{_lambda_.3} parent=11 // pred_region
        _
      $region16: #{_lambda_.3} parent=11 // pred_fallthru
        _
      // Predicated region
      $region17: #{_lambda_.3} parent=11 // pred_check
        %p121 = pneg %p77
      $region18: #{_lambda_.3} parent=11 // pred_check_branch
        %123 = sbr.rel (%p121) target = $region20
      $region19: #{_lambda_.3} parent=11 // pred_region
        _
      $region20: #{_lambda_.3} parent=11 // pred_fallthru
        _
    $region12: #{_lambda_.3} parent=5 // pred_fallthru
      _
    %p124 = scmp.lt.s32.totalorder %s9, 2
    // Predicated region
    $region21: #{_lambda_.3} parent=5 // pred_check
      %p125 = pneg %p124
    $region22: #{_lambda_.3} parent=5 // pred_check_branch
      %127 = sbr.rel (%p125) target = $region24
    $region23: #{_lambda_.3} parent=5 // pred_region
      // Predicated region
      $region25: #{_lambda_.3} parent=23 // pred_check
        %p128 = pneg %p29
      $region26: #{_lambda_.3} parent=23 // pred_check_branch
        %130 = sbr.rel (%p128) target = $region28
      $region27: #{_lambda_.3} parent=23 // pred_region
        %s131 = smul.u32 32, %s9
        %p132 = scmp.lt.s32.totalorder %s131, 63
        %s133 = scalar_select %p132, %s131, 63
        %s134 = smul.addr %s133, 4
        %s135 = scalar_lea.vmem %s0, %s134
        %s136 = smul.u32 32, %s9
      $region28: #{_lambda_.3} parent=23 // pred_fallthru
        _
    $region24: #{_lambda_.3} parent=5 // pred_fallthru
      _
    %p137 = scmp.le.s32.totalorder 1, %s9
    %p138 = scmp.lt.s32.totalorder %s9, 3
    %p139 = pnand %p137, %p138
    %p140 = pneg %p139
    // Predicated region
    $region29: #{_lambda_.3} parent=5 // pred_check
      _
    $region30: #{_lambda_.3} parent=5 // pred_check_branch
      %142 = sbr.rel (%p139) target = $region32
    $region31: #{_lambda_.3} parent=5 // pred_region
      %s143 = ssub.s32 %s9, 1
      %s144 = smul.u32 32, %s14
      %p145 = scmp.lt.s32.totalorder %s144, 63
      %s146 = scalar_select %p145, %s144, 63
      %s147 = smul.addr %s146, 4
      %s148 = scalar_lea.vmem %s0, %s147
      %p149 = pneg %p35
      %p150 = pneg %p32
      %p151 = pneg %p56
      %p152 = pneg %p53
      %p153 = pneg %p77
      %p154 = pneg %p74
      %p155 = pneg %p103
      %p156 = pneg %p100
      %s157 = smul.u32 32, %s14
      %p158 = scmp.lt.s32.totalorder %s157, 63
      %s159 = scalar_select %p158, %s157, 63
      %s160 = smul.addr %s159, 4
      %s161 = scalar_lea.vmem %s3, %s160
      %s162 = smul.u32 32, %s14
      %p163 = scmp.lt.s32.totalorder %s162, 63
      %s164 = scalar_select %p163, %s162, 63
      %s165 = smul.addr %s164, 4
      %s166 = scalar_lea.vmem %s0, %s165
      %s167 = smul.u32 32, %s14
      %s168 = smul.u32 32, %s14
      %p169 = scmp.lt.s32.totalorder %s168, 63
      %s170 = scalar_select %p169, %s168, 63
      %s171 = smul.addr %s170, 4
      %s172 = scalar_lea.vmem %s3, %s171
      %s173 = smul.u32 32, %s14
      %v175 = vld [vmem:[%s166] sm:$0xf]
      %v176 = vld [vmem:[%s166 + $0x4] sm:$0xf]
      %v177 = vld [vmem:[%s166 + $0x8] sm:$0xf]
      %v178 = vld [vmem:[%s166 + $0xc] sm:$0xf]
      %v179 = vld [vmem:[%s166 + $0x10] sm:$0xf]
      %v180 = vld [vmem:[%s166 + $0x14] sm:$0xf]
      %v181 = vld [vmem:[%s166 + $0x18] sm:$0xf]
      %v182 = vld [vmem:[%s166 + $0x1c] sm:$0xf]
      %v183 = vld [vmem:[%s166 + $0x20] sm:$0xf]
      %v184 = vld [vmem:[%s166 + $0x24] sm:$0xf]
      %v185 = vld [vmem:[%s166 + $0x28] sm:$0xf]
      %v186 = vld [vmem:[%s166 + $0x2c] sm:$0xf]
      %v187 = vld [vmem:[%s166 + $0x30] sm:$0xf]
      %v188 = vld [vmem:[%s166 + $0x34] sm:$0xf]
      %v189 = vld [vmem:[%s166 + $0x38] sm:$0xf]
      %v190 = vld [vmem:[%s166 + $0x3c] sm:$0xf]
      %v191 = vld [vmem:[%s166 + $0x40] sm:$0xf]
      %v192 = vld [vmem:[%s166 + $0x44] sm:$0xf]
      %v193 = vld [vmem:[%s166 + $0x48] sm:$0xf]
      %v194 = vld [vmem:[%s166 + $0x4c] sm:$0xf]
      %v195 = vld [vmem:[%s166 + $0x50] sm:$0xf]
      %v196 = vld [vmem:[%s166 + $0x54] sm:$0xf]
      %v197 = vld [vmem:[%s166 + $0x58] sm:$0xf]
      %v198 = vld [vmem:[%s166 + $0x5c] sm:$0xf]
      %v199 = vld [vmem:[%s166 + $0x60] sm:$0xf]
      %v200 = vld [vmem:[%s166 + $0x64] sm:$0xf]
      %v201 = vld [vmem:[%s166 + $0x68] sm:$0xf]
      %v202 = vld [vmem:[%s166 + $0x6c] sm:$0xf]
      %v203 = vld [vmem:[%s166 + $0x70] sm:$0xf]
      %v204 = vld [vmem:[%s166 + $0x74] sm:$0xf]
      %v205 = vld [vmem:[%s166 + $0x78] sm:$0xf]
      %v206 = vld [vmem:[%s166 + $0x7c] sm:$0xf]
      %v207 = vld [vmem:[%s1] sm:$0x3]
      %v208 = vld [vmem:[%s2] sm:$0x1]
      %v210 = vperm.slane %v208, 0
      %v244 = vunpack.c.l.b16 %v175
      %v245 = vunpack.c.l.b16 %v176
      %v246 = vunpack.c.l.b16 %v177
      %v247 = vunpack.c.l.b16 %v178
      %v248 = vunpack.c.l.b16 %v179
      %v249 = vunpack.c.l.b16 %v180
      %v250 = vunpack.c.l.b16 %v181
      %v251 = vunpack.c.l.b16 %v182
      %v252 = vunpack.c.l.b16 %v183
      %v253 = vunpack.c.l.b16 %v184
      %v254 = vunpack.c.l.b16 %v185
      %v255 = vunpack.c.l.b16 %v186
      %v256 = vunpack.c.l.b16 %v187
      %v257 = vunpack.c.l.b16 %v188
      %v258 = vunpack.c.l.b16 %v189
      %v259 = vunpack.c.l.b16 %v190
      %v260 = vunpack.c.l.b16 %v191
      %v261 = vunpack.c.l.b16 %v192
      %v262 = vunpack.c.l.b16 %v193
      %v263 = vunpack.c.l.b16 %v194
      %v264 = vunpack.c.l.b16 %v195
      %v265 = vunpack.c.l.b16 %v196
      %v266 = vunpack.c.l.b16 %v197
      %v267 = vunpack.c.l.b16 %v198
      %v268 = vunpack.c.l.b16 %v199
      %v269 = vunpack.c.l.b16 %v200
      %v270 = vunpack.c.l.b16 %v201
      %v271 = vunpack.c.l.b16 %v202
      %v272 = vunpack.c.l.b16 %v203
      %v273 = vunpack.c.l.b16 %v204
      %v274 = vunpack.c.l.b16 %v205
      %v275 = vunpack.c.l.b16 %v206
      %v276 = vpack.c.b16 %v245, %v244
      %v277 = vpack.c.b16 %v247, %v246
      %v278 = vpack.c.b16 %v249, %v248
      %v279 = vpack.c.b16 %v251, %v250
      %v280 = vpack.c.b16 %v253, %v252
      %v281 = vpack.c.b16 %v255, %v254
      %v282 = vpack.c.b16 %v257, %v256
      %v283 = vpack.c.b16 %v259, %v258
      %v284 = vpack.c.b16 %v261, %v260
      %v285 = vpack.c.b16 %v263, %v262
      %v286 = vpack.c.b16 %v265, %v264
      %v287 = vpack.c.b16 %v267, %v266
      %v288 = vpack.c.b16 %v269, %v268
      %v289 = vpack.c.b16 %v271, %v270
      %v290 = vpack.c.b16 %v273, %v272
      %v291 = vpack.c.b16 %v275, %v274
      %vm292 = vcmask 31744
      %v294 = vsel %vm292, %v276, 0
      %v297 = vsel %vm292, %v277, 0
      %v300 = vsel %vm292, %v278, 0
      %v303 = vsel %vm292, %v279, 0
      %v306 = vsel %vm292, %v280, 0
      %v309 = vsel %vm292, %v281, 0
      %v312 = vsel %vm292, %v282, 0
      %v315 = vsel %vm292, %v283, 0
      %v318 = vsel %vm292, %v284, 0
      %v321 = vsel %vm292, %v285, 0
      %v324 = vsel %vm292, %v286, 0
      %v327 = vsel %vm292, %v287, 0
      %v330 = vsel %vm292, %v288, 0
      %v333 = vsel %vm292, %v289, 0
      %v336 = vsel %vm292, %v290, 0
      %v339 = vsel %vm292, %v291, 0
      %vm341 = vcmask 1041408
      %v343 = vsel %vm341, %v207, 0
      %345 = vmatpush.bf16.msra.mxu0 0
      %346 = vmatpush.bf16.msra.mxu0 0
      %347 = vmatpush.bf16.msra.mxu0 0
      %348 = vmatpush.bf16.msra.mxu0 0
      %349 = vmatpush.bf16.msra.mxu0 0
      %350 = vmatpush.bf16.msra.mxu0 0
      %351 = vmatpush.bf16.msra.mxu0 0
      %352 = vmatpush.bf16.msra.mxu0 %v343
      %353 = vmatmul.bf16.gmra.mxu0 %v294
      %v354 = vpop.f32.mrf.mxu0
      %v355 = vadd.f32 %v210, %v354
      %v356 = vpop.f32.mrf.mxu0
      %v357 = vadd.f32 %v210, %v356
      %358 = vmatmul.bf16.gmra.mxu0 %v297
      %v359 = vpop.f32.mrf.mxu0
      %v360 = vadd.f32 %v210, %v359
      %v361 = vpop.f32.mrf.mxu0
      %v362 = vadd.f32 %v210, %v361
      %363 = vmatmul.bf16.gmra.mxu0 %v300
      %v364 = vpop.f32.mrf.mxu0
      %v365 = vadd.f32 %v210, %v364
      %v366 = vpop.f32.mrf.mxu0
      %v367 = vadd.f32 %v210, %v366
      %368 = vmatmul.bf16.gmra.mxu0 %v303
      %v369 = vpop.f32.mrf.mxu0
      %v370 = vadd.f32 %v210, %v369
      %v371 = vpop.f32.mrf.mxu0
      %v372 = vadd.f32 %v210, %v371
      %373 = vmatmul.bf16.gmra.mxu0 %v306
      %v374 = vpop.f32.mrf.mxu0
      %v375 = vadd.f32 %v210, %v374
      %v376 = vpop.f32.mrf.mxu0
      %v377 = vadd.f32 %v210, %v376
      %378 = vmatmul.bf16.gmra.mxu0 %v309
      %v379 = vpop.f32.mrf.mxu0
      %v380 = vadd.f32 %v210, %v379
      %v381 = vpop.f32.mrf.mxu0
      %v382 = vadd.f32 %v210, %v381
      %383 = vmatmul.bf16.gmra.mxu0 %v312
      %v384 = vpop.f32.mrf.mxu0
      %v385 = vadd.f32 %v210, %v384
      %v386 = vpop.f32.mrf.mxu0
      %v387 = vadd.f32 %v210, %v386
      %388 = vmatmul.bf16.gmra.mxu0 %v315
      %v389 = vpop.f32.mrf.mxu0
      %v390 = vadd.f32 %v210, %v389
      %v391 = vpop.f32.mrf.mxu0
      %v392 = vadd.f32 %v210, %v391
      %393 = vmatmul.bf16.gmra.mxu0 %v318
      %v394 = vpop.f32.mrf.mxu0
      %v395 = vadd.f32 %v210, %v394
      %v396 = vpop.f32.mrf.mxu0
      %v397 = vadd.f32 %v210, %v396
      %398 = vmatmul.bf16.gmra.mxu0 %v321
      %v399 = vpop.f32.mrf.mxu0
      %v400 = vadd.f32 %v210, %v399
      %v401 = vpop.f32.mrf.mxu0
      %v402 = vadd.f32 %v210, %v401
      %403 = vmatmul.bf16.gmra.mxu0 %v324
      %v404 = vpop.f32.mrf.mxu0
      %v405 = vadd.f32 %v210, %v404
      %v406 = vpop.f32.mrf.mxu0
      %v407 = vadd.f32 %v210, %v406
      %408 = vmatmul.bf16.gmra.mxu0 %v327
      %v409 = vpop.f32.mrf.mxu0
      %v410 = vadd.f32 %v210, %v409
      %v411 = vpop.f32.mrf.mxu0
      %v412 = vadd.f32 %v210, %v411
      %413 = vmatmul.bf16.gmra.mxu0 %v330
      %v414 = vpop.f32.mrf.mxu0
      %v415 = vadd.f32 %v210, %v414
      %v416 = vpop.f32.mrf.mxu0
      %v417 = vadd.f32 %v210, %v416
      %418 = vmatmul.bf16.gmra.mxu0 %v333
      %v419 = vpop.f32.mrf.mxu0
      %v420 = vadd.f32 %v210, %v419
      %v421 = vpop.f32.mrf.mxu0
      %v422 = vadd.f32 %v210, %v421
      %423 = vmatmul.bf16.gmra.mxu0 %v336
      %v424 = vpop.f32.mrf.mxu0
      %v425 = vadd.f32 %v210, %v424
      %v426 = vpop.f32.mrf.mxu0
      %v427 = vadd.f32 %v210, %v426
      %428 = vmatmul.bf16.gmra.mxu0 %v339
      %v429 = vpop.f32.mrf.mxu0
      %v430 = vadd.f32 %v210, %v429
      %v431 = vpop.f32.mrf.mxu0
      %v432 = vadd.f32 %v210, %v431
      %433 = vdwg.mxu0
      %v434 = vmax.f32 %v355, 0.0
      %v435 = vmax.f32 %v357, 0.0
      %v436 = vmax.f32 %v360, 0.0
      %v437 = vmax.f32 %v362, 0.0
      %v438 = vmax.f32 %v365, 0.0
      %v439 = vmax.f32 %v367, 0.0
      %v440 = vmax.f32 %v370, 0.0
      %v441 = vmax.f32 %v372, 0.0
      %v442 = vmax.f32 %v375, 0.0
      %v443 = vmax.f32 %v377, 0.0
      %v444 = vmax.f32 %v380, 0.0
      %v445 = vmax.f32 %v382, 0.0
      %v446 = vmax.f32 %v385, 0.0
      %v447 = vmax.f32 %v387, 0.0
      %v448 = vmax.f32 %v390, 0.0
      %v449 = vmax.f32 %v392, 0.0
      %v450 = vmax.f32 %v395, 0.0
      %v451 = vmax.f32 %v397, 0.0
      %v452 = vmax.f32 %v400, 0.0
      %v453 = vmax.f32 %v402, 0.0
      %v454 = vmax.f32 %v405, 0.0
      %v455 = vmax.f32 %v407, 0.0
      %v456 = vmax.f32 %v410, 0.0
      %v457 = vmax.f32 %v412, 0.0
      %v458 = vmax.f32 %v415, 0.0
      %v459 = vmax.f32 %v417, 0.0
      %v460 = vmax.f32 %v420, 0.0
      %v461 = vmax.f32 %v422, 0.0
      %v462 = vmax.f32 %v425, 0.0
      %v463 = vmax.f32 %v427, 0.0
      %v464 = vmax.f32 %v430, 0.0
      %v465 = vmax.f32 %v432, 0.0
      %v466 = vpack.c.bf16 %v434, %v434
      %v467 = vpack.c.bf16 %v435, %v435
      %v468 = vpack.c.bf16 %v436, %v436
      %v469 = vpack.c.bf16 %v437, %v437
      %v470 = vpack.c.bf16 %v438, %v438
      %v471 = vpack.c.bf16 %v439, %v439
      %v472 = vpack.c.bf16 %v440, %v440
      %v473 = vpack.c.bf16 %v441, %v441
      %v474 = vpack.c.bf16 %v442, %v442
      %v475 = vpack.c.bf16 %v443, %v443
      %v476 = vpack.c.bf16 %v444, %v444
      %v477 = vpack.c.bf16 %v445, %v445
      %v478 = vpack.c.bf16 %v446, %v446
      %v479 = vpack.c.bf16 %v447, %v447
      %v480 = vpack.c.bf16 %v448, %v448
      %v481 = vpack.c.bf16 %v449, %v449
      %v482 = vpack.c.bf16 %v450, %v450
      %v483 = vpack.c.bf16 %v451, %v451
      %v484 = vpack.c.bf16 %v452, %v452
      %v485 = vpack.c.bf16 %v453, %v453
      %v486 = vpack.c.bf16 %v454, %v454
      %v487 = vpack.c.bf16 %v455, %v455
      %v488 = vpack.c.bf16 %v456, %v456
      %v489 = vpack.c.bf16 %v457, %v457
      %v490 = vpack.c.bf16 %v458, %v458
      %v491 = vpack.c.bf16 %v459, %v459
      %v492 = vpack.c.bf16 %v460, %v460
      %v493 = vpack.c.bf16 %v461, %v461
      %v494 = vpack.c.bf16 %v462, %v462
      %v495 = vpack.c.bf16 %v463, %v463
      %v496 = vpack.c.bf16 %v464, %v464
      %v497 = vpack.c.bf16 %v465, %v465
      %vm498 = vcmask 27648
      %499 = vst.msk [vmem:[%s172] sm:$0xf] %vm498, %v466
      %500 = vst.msk [vmem:[%s172 + $0x4] sm:$0xf] %vm498, %v467
      %501 = vst.msk [vmem:[%s172 + $0x8] sm:$0xf] %vm498, %v468
      %502 = vst.msk [vmem:[%s172 + $0xc] sm:$0xf] %vm498, %v469
      %503 = vst.msk [vmem:[%s172 + $0x10] sm:$0xf] %vm498, %v470
      %504 = vst.msk [vmem:[%s172 + $0x14] sm:$0xf] %vm498, %v471
      %505 = vst.msk [vmem:[%s172 + $0x18] sm:$0xf] %vm498, %v472
      %506 = vst.msk [vmem:[%s172 + $0x1c] sm:$0xf] %vm498, %v473
      %507 = vst.msk [vmem:[%s172 + $0x20] sm:$0xf] %vm498, %v474
      %508 = vst.msk [vmem:[%s172 + $0x24] sm:$0xf] %vm498, %v475
      %509 = vst.msk [vmem:[%s172 + $0x28] sm:$0xf] %vm498, %v476
      %510 = vst.msk [vmem:[%s172 + $0x2c] sm:$0xf] %vm498, %v477
      %511 = vst.msk [vmem:[%s172 + $0x30] sm:$0xf] %vm498, %v478
      %512 = vst.msk [vmem:[%s172 + $0x34] sm:$0xf] %vm498, %v479
      %513 = vst.msk [vmem:[%s172 + $0x38] sm:$0xf] %vm498, %v480
      %514 = vst.msk [vmem:[%s172 + $0x3c] sm:$0xf] %vm498, %v481
      %515 = vst.msk [vmem:[%s172 + $0x40] sm:$0xf] %vm498, %v482
      %516 = vst.msk [vmem:[%s172 + $0x44] sm:$0xf] %vm498, %v483
      %517 = vst.msk [vmem:[%s172 + $0x48] sm:$0xf] %vm498, %v484
      %518 = vst.msk [vmem:[%s172 + $0x4c] sm:$0xf] %vm498, %v485
      %519 = vst.msk [vmem:[%s172 + $0x50] sm:$0xf] %vm498, %v486
      %520 = vst.msk [vmem:[%s172 + $0x54] sm:$0xf] %vm498, %v487
      %521 = vst.msk [vmem:[%s172 + $0x58] sm:$0xf] %vm498, %v488
      %522 = vst.msk [vmem:[%s172 + $0x5c] sm:$0xf] %vm498, %v489
      %523 = vst.msk [vmem:[%s172 + $0x60] sm:$0xf] %vm498, %v490
      %524 = vst.msk [vmem:[%s172 + $0x64] sm:$0xf] %vm498, %v491
      %525 = vst.msk [vmem:[%s172 + $0x68] sm:$0xf] %vm498, %v492
      %526 = vst.msk [vmem:[%s172 + $0x6c] sm:$0xf] %vm498, %v493
      %527 = vst.msk [vmem:[%s172 + $0x70] sm:$0xf] %vm498, %v494
      %528 = vst.msk [vmem:[%s172 + $0x74] sm:$0xf] %vm498, %v495
      %529 = vst.msk [vmem:[%s172 + $0x78] sm:$0xf] %vm498, %v496
      %530 = vst.msk [vmem:[%s172 + $0x7c] sm:$0xf] %vm498, %v497
      %s531 = smul.u32 32, %s14
      %p532 = scmp.lt.s32.totalorder %s531, 63
      %s533 = scalar_select %p532, %s531, 63
      %s534 = smul.addr %s533, 4
      %s535 = scalar_lea.vmem %s3, %s534
      // Predicated region
      $region33: #{_lambda_.3} parent=31 // pred_check
        %p536 = pneg %p100
      $region34: #{_lambda_.3} parent=31 // pred_check_branch
        %538 = sbr.rel (%p536) target = $region36
      $region35: #{_lambda_.3} parent=31 // pred_region
        %s539 = smul.u32 32, %s14
      $region36: #{_lambda_.3} parent=31 // pred_fallthru
        _
    $region32: #{_lambda_.3} parent=5 // pred_fallthru
      _
    %p540 = scmp.le.s32.totalorder 2, %s9
    // Predicated region
    $region37: #{_lambda_.3} parent=5 // pred_check
      %p541 = pneg %p540
    $region38: #{_lambda_.3} parent=5 // pred_check_branch
      %543 = sbr.rel (%p541) target = $region40
    $region39: #{_lambda_.3} parent=5 // pred_region
      %s544 = ssub.s32 %s9, 2
      // Predicated region
      $region41: #{_lambda_.3} parent=39 // pred_check
        %p545 = pneg %p106
      $region42: #{_lambda_.3} parent=39 // pred_check_branch
        %547 = sbr.rel (%p545) target = $region44
      $region43: #{_lambda_.3} parent=39 // pred_region
        %s548 = smul.u32 32, %s15
        %p549 = scmp.lt.s32.totalorder %s548, 63
        %s550 = scalar_select %p549, %s548, 63
        %s551 = smul.addr %s550, 4
        %s552 = scalar_lea.vmem %s3, %s551
      $region44: #{_lambda_.3} parent=39 // pred_fallthru
        _
    $region40: #{_lambda_.3} parent=5 // pred_fallthru
      _
  $region6: #{_lambda_.3} parent=0 // loop_footer
    %s13 = sadd.s32 1, %s9
  $region7: #{_lambda_.3} parent=0 // loop_footer_branch
    %8 = sbr.rel target = $region3
  $region8: #{_lambda_.3} parent=0 // loop_exit
    _

// kernel: _lambda_.5
$region0: #{_lambda_.5}
  #allocation0 [shape = 'u32[]', space=smem, size = 0x4, offset = 0x4, fixed_abs, tag = 'smem constant byte address 0x4 - core index']
  #allocation1 [shape = 'u32[72,128]{1,0:T(1,128)}', space=vmem, size = 0x9000, scoped, tag = 'internal scratch']
  %s0 = inlined_call_operand.vmem [shape: bf16[512,4], index: 0, kind: input, shape index: {}]
  %s1 = inlined_call_operand.vmem [shape: bf16[4,16], index: 1, kind: input, shape index: {}]
  %s2 = inlined_call_operand.vmem [shape: f32[1,16], index: 2, kind: input, shape index: {}]
  %s3 = inlined_call_operand.vmem [shape: bf16[512,4], index: 3, kind: input, shape index: {}]
  %s4 = inlined_call_operand.vmem [shape: bf16[4,16], index: 4, kind: input, shape index: {}]
  %s5 = inlined_call_operand.vmem [shape: f32[1,16], index: 5, kind: input, shape index: {}]
  %s6 = inlined_call_operand.vmem [shape: bf16[512,16], index: 6, kind: output, shape index: {}]
  %s7 = sld [smem:[#allocation0]]
  $region57: #{_lambda_.5} parent=0
    _
  %s9 = ssub.s32 1, %s7
  %s10 = scalar_select 0, %s9, %s7
  loop: start=0, step=1, limit=4
  $region2: #{_lambda_.5} parent=0 // loop_pre_header
    _
  $region3: #{_lambda_.5} parent=0 // loop_header
    %s12 = sphi 0, %s16
    %p13 = scmp.ge.s32.totalorder %s12, 4
    %s22 = sphi 0, %s24
    %s25 = sphi 0, %s22
    %s26 = sphi 0, %s25
    %s42 = sphi 0, %s26
    %s46 = sphi 0, %s46
    %s48 = sphi 0, %s46
    %s49 = sphi 0, %s48
    %s63 = sphi 0, %s49
    %s67 = sphi 0, %s67
    %s69 = sphi 0, %s67
    %s70 = sphi 0, %s69
    %s84 = sphi 0, %s70
    %s90 = sphi 0, %s92
    %s93 = sphi 0, %s90
    %s94 = sphi 0, %s93
    %s110 = sphi 0, %s94
    %s114 = sphi 0, %s114
    %s116 = sphi 0, %s114
    %s117 = sphi 0, %s116
    %s131 = sphi 0, %s117
    %s135 = sphi 0, %s135
    %s137 = sphi 0, %s135
    %s138 = sphi 0, %s137
    %s152 = sphi 0, %s138
    %s158 = sphi 0, %s160
    %s161 = sphi 0, %s158
    %s162 = sphi 0, %s161
    %s178 = sphi 0, %s162
  $region4: #{_lambda_.5} parent=0 // loop_header_branch
    %15 = sbr.rel (%p13) target = $region8
  $region5: #{_lambda_.5} parent=0 // loop_body
    %s17 = ssub.s32 %s12, 1
    %s18 = ssub.s32 %s12, 2
    %s19 = sadd.s32 %s12, 1
    %s20 = ssub.s32 %s12, %s19
    %p21 = scmp.eq.s32.totalorder %s20, 0
    %s23 = sadd.s32 %s22, 1
    %s24 = scalar_select %p21, %s22, %s23
    %p27 = pneg %p21
    %p28 = scmp.eq.s32.totalorder %s12, 1
    %p29 = por %p27, %p28
    %p30 = scmp.ne.s32.totalorder %s22, %s25
    %p31 = scmp.eq.s32.totalorder %s12, 0
    %p32 = por %p30, %p31
    %p33 = scmp.ne.s32.totalorder %s22, %s25
    %p34 = scmp.eq.s32.totalorder %s17, 1
    %p35 = por %p33, %p34
    %p36 = scmp.ne.s32.totalorder %s25, %s26
    %p37 = scmp.eq.s32.totalorder %s17, 0
    %p38 = por %p36, %p37
    %p39 = scmp.ne.s32.totalorder %s25, %s26
    %p40 = scmp.eq.s32.totalorder %s18, 1
    %p41 = por %p39, %p40
    %p43 = scmp.ne.s32.totalorder %s26, %s42
    %p44 = scmp.eq.s32.totalorder %s18, 0
    %p45 = por %p43, %p44
    %s47 = sadd.s32 %s46, 1
    %p50 = scmp.eq.s32.totalorder %s12, 1
    %p51 = scmp.ne.s32.totalorder %s46, %s48
    %p52 = scmp.eq.s32.totalorder %s12, 0
    %p53 = por %p51, %p52
    %p54 = scmp.ne.s32.totalorder %s46, %s48
    %p55 = scmp.eq.s32.totalorder %s17, 1
    %p56 = por %p54, %p55
    %p57 = scmp.ne.s32.totalorder %s48, %s49
    %p58 = scmp.eq.s32.totalorder %s17, 0
    %p59 = por %p57, %p58
    %p60 = scmp.ne.s32.totalorder %s48, %s49
    %p61 = scmp.eq.s32.totalorder %s18, 1
    %p62 = por %p60, %p61
    %p64 = scmp.ne.s32.totalorder %s49, %s63
    %p65 = scmp.eq.s32.totalorder %s18, 0
    %p66 = por %p64, %p65
    %s68 = sadd.s32 %s67, 1
    %p71 = scmp.eq.s32.totalorder %s12, 1
    %p72 = scmp.ne.s32.totalorder %s67, %s69
    %p73 = scmp.eq.s32.totalorder %s12, 0
    %p74 = por %p72, %p73
    %p75 = scmp.ne.s32.totalorder %s67, %s69
    %p76 = scmp.eq.s32.totalorder %s17, 1
    %p77 = por %p75, %p76
    %p78 = scmp.ne.s32.totalorder %s69, %s70
    %p79 = scmp.eq.s32.totalorder %s17, 0
    %p80 = por %p78, %p79
    %p81 = scmp.ne.s32.totalorder %s69, %s70
    %p82 = scmp.eq.s32.totalorder %s18, 1
    %p83 = por %p81, %p82
    %p85 = scmp.ne.s32.totalorder %s70, %s84
    %p86 = scmp.eq.s32.totalorder %s18, 0
    %p87 = por %p85, %p86
    %s88 = ssub.s32 %s12, %s19
    %p89 = scmp.eq.s32.totalorder %s88, 0
    %s91 = sadd.s32 %s90, 1
    %s92 = scalar_select %p89, %s90, %s91
    %p95 = pneg %p89
    %p96 = scmp.eq.s32.totalorder %s12, 1
    %p97 = por %p95, %p96
    %p98 = scmp.ne.s32.totalorder %s90, %s93
    %p99 = scmp.eq.s32.totalorder %s12, 0
    %p100 = por %p98, %p99
    %p101 = scmp.ne.s32.totalorder %s90, %s93
    %p102 = scmp.eq.s32.totalorder %s17, 1
    %p103 = por %p101, %p102
    %p104 = scmp.ne.s32.totalorder %s93, %s94
    %p105 = scmp.eq.s32.totalorder %s17, 0
    %p106 = por %p104, %p105
    %p107 = scmp.ne.s32.totalorder %s93, %s94
    %p108 = scmp.eq.s32.totalorder %s18, 1
    %p109 = por %p107, %p108
    %p111 = scmp.ne.s32.totalorder %s94, %s110
    %p112 = scmp.eq.s32.totalorder %s18, 0
    %p113 = por %p111, %p112
    %s115 = sadd.s32 %s114, 1
    %p118 = scmp.eq.s32.totalorder %s12, 1
    %p119 = scmp.ne.s32.totalorder %s114, %s116
    %p120 = scmp.eq.s32.totalorder %s12, 0
    %p121 = por %p119, %p120
    %p122 = scmp.ne.s32.totalorder %s114, %s116
    %p123 = scmp.eq.s32.totalorder %s17, 1
    %p124 = por %p122, %p123
    %p125 = scmp.ne.s32.totalorder %s116, %s117
    %p126 = scmp.eq.s32.totalorder %s17, 0
    %p127 = por %p125, %p126
    %p128 = scmp.ne.s32.totalorder %s116, %s117
    %p129 = scmp.eq.s32.totalorder %s18, 1
    %p130 = por %p128, %p129
    %p132 = scmp.ne.s32.totalorder %s117, %s131
    %p133 = scmp.eq.s32.totalorder %s18, 0
    %p134 = por %p132, %p133
    %s136 = sadd.s32 %s135, 1
    %p139 = scmp.eq.s32.totalorder %s12, 1
    %p140 = scmp.ne.s32.totalorder %s135, %s137
    %p141 = scmp.eq.s32.totalorder %s12, 0
    %p142 = por %p140, %p141
    %p143 = scmp.ne.s32.totalorder %s135, %s137
    %p144 = scmp.eq.s32.totalorder %s17, 1
    %p145 = por %p143, %p144
    %p146 = scmp.ne.s32.totalorder %s137, %s138
    %p147 = scmp.eq.s32.totalorder %s17, 0
    %p148 = por %p146, %p147
    %p149 = scmp.ne.s32.totalorder %s137, %s138
    %p150 = scmp.eq.s32.totalorder %s18, 1
    %p151 = por %p149, %p150
    %p153 = scmp.ne.s32.totalorder %s138, %s152
    %p154 = scmp.eq.s32.totalorder %s18, 0
    %p155 = por %p153, %p154
    %s156 = ssub.s32 %s12, %s19
    %p157 = scmp.eq.s32.totalorder %s156, 0
    %s159 = sadd.s32 %s158, 1
    %s160 = scalar_select %p157, %s158, %s159
    %p163 = pneg %p157
    %p164 = scmp.eq.s32.totalorder %s12, 1
    %p165 = por %p163, %p164
    %p166 = scmp.ne.s32.totalorder %s158, %s161
    %p167 = scmp.eq.s32.totalorder %s12, 0
    %p168 = por %p166, %p167
    %p169 = scmp.ne.s32.totalorder %s158, %s161
    %p170 = scmp.eq.s32.totalorder %s17, 1
    %p171 = por %p169, %p170
    %p172 = scmp.ne.s32.totalorder %s161, %s162
    %p173 = scmp.eq.s32.totalorder %s17, 0
    %p174 = por %p172, %p173
    %p175 = scmp.ne.s32.totalorder %s161, %s162
    %p176 = scmp.eq.s32.totalorder %s18, 1
    %p177 = por %p175, %p176
    %p179 = scmp.ne.s32.totalorder %s162, %s178
    %p180 = scmp.eq.s32.totalorder %s18, 0
    %p181 = por %p179, %p180
    %p182 = scmp.le.s32.totalorder 1, %s12
    %p183 = scmp.lt.s32.totalorder %s12, 3
    %p184 = pnand %p182, %p183
    %p185 = pneg %p184
    // Predicated region
    $region9: #{_lambda_.5} parent=5 // pred_check
      _
    $region10: #{_lambda_.5} parent=5 // pred_check_branch
      %187 = sbr.rel (%p184) target = $region12
    $region11: #{_lambda_.5} parent=5 // pred_region
      %s188 = ssub.s32 %s12, 1
      // Predicated region
      $region13: #{_lambda_.5} parent=11 // pred_check
        %p189 = pneg %p59
      $region14: #{_lambda_.5} parent=11 // pred_check_branch
        %191 = sbr.rel (%p189) target = $region16
      $region15: #{_lambda_.5} parent=11 // pred_region
        _
      $region16: #{_lambda_.5} parent=11 // pred_fallthru
        _
      // Predicated region
      $region17: #{_lambda_.5} parent=11 // pred_check
        %p192 = pneg %p80
      $region18: #{_lambda_.5} parent=11 // pred_check_branch
        %194 = sbr.rel (%p192) target = $region20
      $region19: #{_lambda_.5} parent=11 // pred_region
        _
      $region20: #{_lambda_.5} parent=11 // pred_fallthru
        _
      // Predicated region
      $region21: #{_lambda_.5} parent=11 // pred_check
        %p195 = pneg %p127
      $region22: #{_lambda_.5} parent=11 // pred_check_branch
        %197 = sbr.rel (%p195) target = $region24
      $region23: #{_lambda_.5} parent=11 // pred_region
        _
      $region24: #{_lambda_.5} parent=11 // pred_fallthru
        _
      // Predicated region
      $region25: #{_lambda_.5} parent=11 // pred_check
        %p198 = pneg %p148
      $region26: #{_lambda_.5} parent=11 // pred_check_branch
        %200 = sbr.rel (%p198) target = $region28
      $region27: #{_lambda_.5} parent=11 // pred_region
        _
      $region28: #{_lambda_.5} parent=11 // pred_fallthru
        _
    $region12: #{_lambda_.5} parent=5 // pred_fallthru
      _
    %p201 = scmp.lt.s32.totalorder %s12, 2
    // Predicated region
    $region29: #{_lambda_.5} parent=5 // pred_check
      %p202 = pneg %p201
    $region30: #{_lambda_.5} parent=5 // pred_check_branch
      %204 = sbr.rel (%p202) target = $region32
    $region31: #{_lambda_.5} parent=5 // pred_region
      // Predicated region
      $region33: #{_lambda_.5} parent=31 // pred_check
        %p205 = pneg %p32
      $region34: #{_lambda_.5} parent=31 // pred_check_branch
        %207 = sbr.rel (%p205) target = $region36
      $region35: #{_lambda_.5} parent=31 // pred_region
        %s208 = smul.u32 32, %s12
        %p209 = scmp.lt.s32.totalorder %s208, 63
        %s210 = scalar_select %p209, %s208, 63
        %s211 = smul.addr %s210, 4
        %s212 = scalar_lea.vmem %s0, %s211
        %s213 = smul.u32 32, %s12
      $region36: #{_lambda_.5} parent=31 // pred_fallthru
        _
      // Predicated region
      $region37: #{_lambda_.5} parent=31 // pred_check
        %p214 = pneg %p100
      $region38: #{_lambda_.5} parent=31 // pred_check_branch
        %216 = sbr.rel (%p214) target = $region40
      $region39: #{_lambda_.5} parent=31 // pred_region
        %s217 = smul.u32 32, %s12
        %p218 = scmp.lt.s32.totalorder %s217, 63
        %s219 = scalar_select %p218, %s217, 63
        %s220 = smul.addr %s219, 4
        %s221 = scalar_lea.vmem %s3, %s220
        %s222 = smul.u32 32, %s12
      $region40: #{_lambda_.5} parent=31 // pred_fallthru
        _
    $region32: #{_lambda_.5} parent=5 // pred_fallthru
      _
    %p223 = scmp.le.s32.totalorder 1, %s12
    %p224 = scmp.lt.s32.totalorder %s12, 3
    %p225 = pnand %p223, %p224
    %p226 = pneg %p225
    // Predicated region
    $region41: #{_lambda_.5} parent=5 // pred_check
      _
    $region42: #{_lambda_.5} parent=5 // pred_check_branch
      %228 = sbr.rel (%p225) target = $region44
    $region43: #{_lambda_.5} parent=5 // pred_region
      %s229 = ssub.s32 %s12, 1
      %s230 = smul.u32 32, %s17
      %p231 = scmp.lt.s32.totalorder %s230, 63
      %s232 = scalar_select %p231, %s230, 63
      %s233 = smul.addr %s232, 4
      %s234 = scalar_lea.vmem %s0, %s233
      %p235 = pneg %p38
      %p236 = pneg %p35
      %p237 = pneg %p59
      %p238 = pneg %p56
      %p239 = pneg %p80
      %p240 = pneg %p77
      %s241 = smul.u32 32, %s17
      %p242 = scmp.lt.s32.totalorder %s241, 63
      %s243 = scalar_select %p242, %s241, 63
      %s244 = smul.addr %s243, 4
      %s245 = scalar_lea.vmem %s3, %s244
      %p246 = pneg %p106
      %p247 = pneg %p103
      %p248 = pneg %p127
      %p249 = pneg %p124
      %p250 = pneg %p148
      %p251 = pneg %p145
      %p252 = pneg %p174
      %p253 = pneg %p171
      %s254 = smul.u32 32, %s17
      %p255 = scmp.lt.s32.totalorder %s254, 63
      %s256 = scalar_select %p255, %s254, 63
      %s257 = smul.addr %s256, 4
      %s258 = scalar_lea.vmem %s6, %s257
      %s259 = smul.u32 32, %s17
      %p260 = scmp.lt.s32.totalorder %s259, 63
      %s261 = scalar_select %p260, %s259, 63
      %s262 = smul.addr %s261, 4
      %s263 = scalar_lea.vmem %s0, %s262
      %s264 = smul.u32 32, %s17
      %s265 = smul.u32 32, %s17
      %p266 = scmp.lt.s32.totalorder %s265, 63
      %s267 = scalar_select %p266, %s265, 63
      %s268 = smul.addr %s267, 4
      %s269 = scalar_lea.vmem %s3, %s268
      %s270 = smul.u32 32, %s17
      %s271 = smul.u32 32, %s17
      %p272 = scmp.lt.s32.totalorder %s271, 63
      %s273 = scalar_select %p272, %s271, 63
      %s274 = smul.addr %s273, 4
      %s275 = scalar_lea.vmem %s6, %s274
      %s276 = smul.u32 32, %s17
      %v278 = vld [vmem:[%s263] sm:$0xf]
      %v279 = vld [vmem:[%s263 + $0x4] sm:$0xf]
      %v280 = vld [vmem:[%s263 + $0x8] sm:$0xf]
      %v281 = vld [vmem:[%s263 + $0xc] sm:$0xf]
      %v282 = vld [vmem:[%s263 + $0x10] sm:$0xf]
      %v283 = vld [vmem:[%s263 + $0x14] sm:$0xf]
      %v284 = vld [vmem:[%s263 + $0x18] sm:$0xf]
      %v285 = vld [vmem:[%s263 + $0x1c] sm:$0xf]
      %v286 = vld [vmem:[%s263 + $0x20] sm:$0xf]
      %v287 = vld [vmem:[%s263 + $0x24] sm:$0xf]
      %v288 = vld [vmem:[%s263 + $0x28] sm:$0xf]
      %v289 = vld [vmem:[%s263 + $0x2c] sm:$0xf]
      %v290 = vld [vmem:[%s263 + $0x30] sm:$0xf]
      %v291 = vld [vmem:[%s263 + $0x34] sm:$0xf]
      %v292 = vld [vmem:[%s263 + $0x38] sm:$0xf]
      %v293 = vld [vmem:[%s263 + $0x3c] sm:$0xf]
      %v294 = vld [vmem:[%s263 + $0x40] sm:$0xf]
      %v295 = vld [vmem:[%s263 + $0x44] sm:$0xf]
      %v296 = vld [vmem:[%s263 + $0x48] sm:$0xf]
      %v297 = vld [vmem:[%s263 + $0x4c] sm:$0xf]
      %v298 = vld [vmem:[%s263 + $0x50] sm:$0xf]
      %v299 = vld [vmem:[%s263 + $0x54] sm:$0xf]
      %v300 = vld [vmem:[%s263 + $0x58] sm:$0xf]
      %v301 = vld [vmem:[%s263 + $0x5c] sm:$0xf]
      %v302 = vld [vmem:[%s263 + $0x60] sm:$0xf]
      %v303 = vld [vmem:[%s263 + $0x64] sm:$0xf]
      %v304 = vld [vmem:[%s263 + $0x68] sm:$0xf]
      %v305 = vld [vmem:[%s263 + $0x6c] sm:$0xf]
      %v306 = vld [vmem:[%s263 + $0x70] sm:$0xf]
      %v307 = vld [vmem:[%s263 + $0x74] sm:$0xf]
      %v308 = vld [vmem:[%s263 + $0x78] sm:$0xf]
      %v309 = vld [vmem:[%s263 + $0x7c] sm:$0xf]
      %v310 = vld [vmem:[%s1] sm:$0x3]
      %v311 = vld [vmem:[%s2] sm:$0x1]
      %v313 = vperm.slane %v311, 0
      %v347 = vunpack.c.l.b16 %v278
      %v348 = vunpack.c.l.b16 %v279
      %v349 = vunpack.c.l.b16 %v280
      %v350 = vunpack.c.l.b16 %v281
      %v351 = vunpack.c.l.b16 %v282
      %v352 = vunpack.c.l.b16 %v283
      %v353 = vunpack.c.l.b16 %v284
      %v354 = vunpack.c.l.b16 %v285
      %v355 = vunpack.c.l.b16 %v286
      %v356 = vunpack.c.l.b16 %v287
      %v357 = vunpack.c.l.b16 %v288
      %v358 = vunpack.c.l.b16 %v289
      %v359 = vunpack.c.l.b16 %v290
      %v360 = vunpack.c.l.b16 %v291
      %v361 = vunpack.c.l.b16 %v292
      %v362 = vunpack.c.l.b16 %v293
      %v363 = vunpack.c.l.b16 %v294
      %v364 = vunpack.c.l.b16 %v295
      %v365 = vunpack.c.l.b16 %v296
      %v366 = vunpack.c.l.b16 %v297
      %v367 = vunpack.c.l.b16 %v298
      %v368 = vunpack.c.l.b16 %v299
      %v369 = vunpack.c.l.b16 %v300
      %v370 = vunpack.c.l.b16 %v301
      %v371 = vunpack.c.l.b16 %v302
      %v372 = vunpack.c.l.b16 %v303
      %v373 = vunpack.c.l.b16 %v304
      %v374 = vunpack.c.l.b16 %v305
      %v375 = vunpack.c.l.b16 %v306
      %v376 = vunpack.c.l.b16 %v307
      %v377 = vunpack.c.l.b16 %v308
      %v378 = vunpack.c.l.b16 %v309
      %v379 = vpack.c.b16 %v348, %v347
      %v380 = vpack.c.b16 %v350, %v349
      %v381 = vpack.c.b16 %v352, %v351
      %v382 = vpack.c.b16 %v354, %v353
      %v383 = vpack.c.b16 %v356, %v355
      %v384 = vpack.c.b16 %v358, %v357
      %v385 = vpack.c.b16 %v360, %v359
      %v386 = vpack.c.b16 %v362, %v361
      %v387 = vpack.c.b16 %v364, %v363
      %v388 = vpack.c.b16 %v366, %v365
      %v389 = vpack.c.b16 %v368, %v367
      %v390 = vpack.c.b16 %v370, %v369
      %v391 = vpack.c.b16 %v372, %v371
      %v392 = vpack.c.b16 %v374, %v373
      %v393 = vpack.c.b16 %v376, %v375
      %v394 = vpack.c.b16 %v378, %v377
      %vm395 = vcmask 31744
      %v397 = vsel %vm395, %v379, 0
      %v400 = vsel %vm395, %v380, 0
      %v403 = vsel %vm395, %v381, 0
      %v406 = vsel %vm395, %v382, 0
      %v409 = vsel %vm395, %v383, 0
      %v412 = vsel %vm395, %v384, 0
      %v415 = vsel %vm395, %v385, 0
      %v418 = vsel %vm395, %v386, 0
      %v421 = vsel %vm395, %v387, 0
      %v424 = vsel %vm395, %v388, 0
      %v427 = vsel %vm395, %v389, 0
      %v430 = vsel %vm395, %v390, 0
      %v433 = vsel %vm395, %v391, 0
      %v436 = vsel %vm395, %v392, 0
      %v439 = vsel %vm395, %v393, 0
      %v442 = vsel %vm395, %v394, 0
      %vm444 = vcmask 1041408
      %v446 = vsel %vm444, %v310, 0
      %448 = vmatpush.bf16.msra.mxu0 0
      %449 = vmatpush.bf16.msra.mxu0 0
      %450 = vmatpush.bf16.msra.mxu0 0
      %451 = vmatpush.bf16.msra.mxu0 0
      %452 = vmatpush.bf16.msra.mxu0 0
      %453 = vmatpush.bf16.msra.mxu0 0
      %454 = vmatpush.bf16.msra.mxu0 0
      %455 = vmatpush.bf16.msra.mxu0 %v446
      %456 = vmatmul.bf16.gmra.mxu0 %v397
      %v457 = vpop.f32.mrf.mxu0
      %v458 = vadd.f32 %v313, %v457
      %v459 = vpop.f32.mrf.mxu0
      %v460 = vadd.f32 %v313, %v459
      %461 = vmatmul.bf16.gmra.mxu0 %v400
      %v462 = vpop.f32.mrf.mxu0
      %v463 = vadd.f32 %v313, %v462
      %v464 = vpop.f32.mrf.mxu0
      %v465 = vadd.f32 %v313, %v464
      %466 = vmatmul.bf16.gmra.mxu0 %v403
      %v467 = vpop.f32.mrf.mxu0
      %v468 = vadd.f32 %v313, %v467
      %v469 = vpop.f32.mrf.mxu0
      %v470 = vadd.f32 %v313, %v469
      %471 = vmatmul.bf16.gmra.mxu0 %v406
      %v472 = vpop.f32.mrf.mxu0
      %v473 = vadd.f32 %v313, %v472
      %v474 = vpop.f32.mrf.mxu0
      %v475 = vadd.f32 %v313, %v474
      %476 = vmatmul.bf16.gmra.mxu0 %v409
      %v477 = vpop.f32.mrf.mxu0
      %v478 = vadd.f32 %v313, %v477
      %v479 = vpop.f32.mrf.mxu0
      %v480 = vadd.f32 %v313, %v479
      %481 = vmatmul.bf16.gmra.mxu0 %v412
      %v482 = vpop.f32.mrf.mxu0
      %v483 = vadd.f32 %v313, %v482
      %v484 = vpop.f32.mrf.mxu0
      %v485 = vadd.f32 %v313, %v484
      %486 = vmatmul.bf16.gmra.mxu0 %v415
      %v487 = vpop.f32.mrf.mxu0
      %v488 = vadd.f32 %v313, %v487
      %v489 = vpop.f32.mrf.mxu0
      %v490 = vadd.f32 %v313, %v489
      %491 = vmatmul.bf16.gmra.mxu0 %v418
      %v492 = vpop.f32.mrf.mxu0
      %v493 = vadd.f32 %v313, %v492
      %v494 = vpop.f32.mrf.mxu0
      %v495 = vadd.f32 %v313, %v494
      %496 = vmatmul.bf16.gmra.mxu0 %v421
      %v497 = vpop.f32.mrf.mxu0
      %v498 = vadd.f32 %v313, %v497
      %v499 = vpop.f32.mrf.mxu0
      %v500 = vadd.f32 %v313, %v499
      %501 = vmatmul.bf16.gmra.mxu0 %v424
      %v502 = vpop.f32.mrf.mxu0
      %v503 = vadd.f32 %v313, %v502
      %v504 = vpop.f32.mrf.mxu0
      %v505 = vadd.f32 %v313, %v504
      %506 = vmatmul.bf16.gmra.mxu0 %v427
      %v507 = vpop.f32.mrf.mxu0
      %v508 = vadd.f32 %v313, %v507
      %v509 = vpop.f32.mrf.mxu0
      %v510 = vadd.f32 %v313, %v509
      %511 = vmatmul.bf16.gmra.mxu0 %v430
      %v512 = vpop.f32.mrf.mxu0
      %v513 = vadd.f32 %v313, %v512
      %v514 = vpop.f32.mrf.mxu0
      %v515 = vadd.f32 %v313, %v514
      %516 = vmatmul.bf16.gmra.mxu0 %v433
      %v517 = vpop.f32.mrf.mxu0
      %v518 = vadd.f32 %v313, %v517
      %v519 = vpop.f32.mrf.mxu0
      %v520 = vadd.f32 %v313, %v519
      %521 = vmatmul.bf16.gmra.mxu0 %v436
      %v522 = vpop.f32.mrf.mxu0
      %v523 = vadd.f32 %v313, %v522
      %v524 = vpop.f32.mrf.mxu0
      %v525 = vadd.f32 %v313, %v524
      %526 = vmatmul.bf16.gmra.mxu0 %v439
      %v527 = vpop.f32.mrf.mxu0
      %v528 = vadd.f32 %v313, %v527
      %v529 = vpop.f32.mrf.mxu0
      %v530 = vadd.f32 %v313, %v529
      %531 = vmatmul.bf16.gmra.mxu0 %v442
      %v532 = vpop.f32.mrf.mxu0
      %v533 = vadd.f32 %v313, %v532
      %v534 = vpop.f32.mrf.mxu0
      %v535 = vadd.f32 %v313, %v534
      %536 = vdwg.mxu0
      %v537 = vld [vmem:[%s269] sm:$0xf]
      %v538 = vld [vmem:[%s269 + $0x4] sm:$0xf]
      %v539 = vld [vmem:[%s269 + $0x8] sm:$0xf]
      %v540 = vld [vmem:[%s269 + $0xc] sm:$0xf]
      %v541 = vld [vmem:[%s269 + $0x10] sm:$0xf]
      %v542 = vld [vmem:[%s269 + $0x14] sm:$0xf]
      %v543 = vld [vmem:[%s269 + $0x18] sm:$0xf]
      %v544 = vld [vmem:[%s269 + $0x1c] sm:$0xf]
      %v545 = vld [vmem:[%s269 + $0x20] sm:$0xf]
      %v546 = vld [vmem:[%s269 + $0x24] sm:$0xf]
      %v547 = vld [vmem:[%s269 + $0x28] sm:$0xf]
      %v548 = vld [vmem:[%s269 + $0x2c] sm:$0xf]
      %v549 = vld [vmem:[%s269 + $0x30] sm:$0xf]
      %v550 = vld [vmem:[%s269 + $0x34] sm:$0xf]
      %v551 = vld [vmem:[%s269 + $0x38] sm:$0xf]
      %v552 = vld [vmem:[%s269 + $0x3c] sm:$0xf]
      %v553 = vld [vmem:[%s269 + $0x40] sm:$0xf]
      %v554 = vld [vmem:[%s269 + $0x44] sm:$0xf]
      %v555 = vld [vmem:[%s269 + $0x48] sm:$0xf]
      %v556 = vld [vmem:[%s269 + $0x4c] sm:$0xf]
      %v557 = vld [vmem:[%s269 + $0x50] sm:$0xf]
      %v558 = vld [vmem:[%s269 + $0x54] sm:$0xf]
      %v559 = vld [vmem:[%s269 + $0x58] sm:$0xf]
      %v560 = vld [vmem:[%s269 + $0x5c] sm:$0xf]
      %v561 = vld [vmem:[%s269 + $0x60] sm:$0xf]
      %v562 = vld [vmem:[%s269 + $0x64] sm:$0xf]
      %v563 = vld [vmem:[%s269 + $0x68] sm:$0xf]
      %v564 = vld [vmem:[%s269 + $0x6c] sm:$0xf]
      %v565 = vld [vmem:[%s269 + $0x70] sm:$0xf]
      %v566 = vld [vmem:[%s269 + $0x74] sm:$0xf]
      %v567 = vld [vmem:[%s269 + $0x78] sm:$0xf]
      %v568 = vld [vmem:[%s269 + $0x7c] sm:$0xf]
      %v569 = vld [vmem:[%s4] sm:$0x3]
      %v602 = vunpack.c.l.b16 %v537
      %v603 = vunpack.c.l.b16 %v538
      %v604 = vunpack.c.l.b16 %v539
      %v605 = vunpack.c.l.b16 %v540
      %v606 = vunpack.c.l.b16 %v541
      %v607 = vunpack.c.l.b16 %v542
      %v608 = vunpack.c.l.b16 %v543
      %v609 = vunpack.c.l.b16 %v544
      %v610 = vunpack.c.l.b16 %v545
      %v611 = vunpack.c.l.b16 %v546
      %v612 = vunpack.c.l.b16 %v547
      %v613 = vunpack.c.l.b16 %v548
      %v614 = vunpack.c.l.b16 %v549
      %v615 = vunpack.c.l.b16 %v550
      %v616 = vunpack.c.l.b16 %v551
      %v617 = vunpack.c.l.b16 %v552
      %v618 = vunpack.c.l.b16 %v553
      %v619 = vunpack.c.l.b16 %v554
      %v620 = vunpack.c.l.b16 %v555
      %v621 = vunpack.c.l.b16 %v556
      %v622 = vunpack.c.l.b16 %v557
      %v623 = vunpack.c.l.b16 %v558
      %v624 = vunpack.c.l.b16 %v559
      %v625 = vunpack.c.l.b16 %v560
      %v626 = vunpack.c.l.b16 %v561
      %v627 = vunpack.c.l.b16 %v562
      %v628 = vunpack.c.l.b16 %v563
      %v629 = vunpack.c.l.b16 %v564
      %v630 = vunpack.c.l.b16 %v565
      %v631 = vunpack.c.l.b16 %v566
      %v632 = vunpack.c.l.b16 %v567
      %v633 = vunpack.c.l.b16 %v568
      %v634 = vpack.c.b16 %v603, %v602
      %v635 = vpack.c.b16 %v605, %v604
      %v636 = vpack.c.b16 %v607, %v606
      %v637 = vpack.c.b16 %v609, %v608
      %v638 = vpack.c.b16 %v611, %v610
      %v639 = vpack.c.b16 %v613, %v612
      %v640 = vpack.c.b16 %v615, %v614
      %v641 = vpack.c.b16 %v617, %v616
      %v642 = vpack.c.b16 %v619, %v618
      %v643 = vpack.c.b16 %v621, %v620
      %v644 = vpack.c.b16 %v623, %v622
      %v645 = vpack.c.b16 %v625, %v624
      %v646 = vpack.c.b16 %v627, %v626
      %v647 = vpack.c.b16 %v629, %v628
      %v648 = vpack.c.b16 %v631, %v630
      %v649 = vpack.c.b16 %v633, %v632
      %v651 = vsel %vm395, %v634, 0
      %v654 = vsel %vm395, %v635, 0
      %v657 = vsel %vm395, %v636, 0
      %v660 = vsel %vm395, %v637, 0
      %v663 = vsel %vm395, %v638, 0
      %v666 = vsel %vm395, %v639, 0
      %v669 = vsel %vm395, %v640, 0
      %v672 = vsel %vm395, %v641, 0
      %v675 = vsel %vm395, %v642, 0
      %v678 = vsel %vm395, %v643, 0
      %v681 = vsel %vm395, %v644, 0
      %v684 = vsel %vm395, %v645, 0
      %v687 = vsel %vm395, %v646, 0
      %v690 = vsel %vm395, %v647, 0
      %v693 = vsel %vm395, %v648, 0
      %v696 = vsel %vm395, %v649, 0
      %v699 = vsel %vm444, %v569, 0
      %701 = vmatpush.bf16.msra.mxu0 0
      %702 = vmatpush.bf16.msra.mxu0 0
      %703 = vmatpush.bf16.msra.mxu0 0
      %704 = vmatpush.bf16.msra.mxu0 0
      %705 = vmatpush.bf16.msra.mxu0 0
      %706 = vmatpush.bf16.msra.mxu0 0
      %707 = vmatpush.bf16.msra.mxu0 0
      %708 = vmatpush.bf16.msra.mxu0 %v699
      %709 = vmatmul.bf16.gmra.mxu0 %v651
      %v710 = vpop.f32.mrf.mxu0
      %v711 = vadd.f32 0.0, %v710
      %v712 = vpop.f32.mrf.mxu0
      %v713 = vadd.f32 0.0, %v712
      %714 = vmatmul.bf16.gmra.mxu0 %v654
      %v715 = vpop.f32.mrf.mxu0
      %v716 = vadd.f32 0.0, %v715
      %v717 = vpop.f32.mrf.mxu0
      %v718 = vadd.f32 0.0, %v717
      %719 = vmatmul.bf16.gmra.mxu0 %v657
      %v720 = vpop.f32.mrf.mxu0
      %v721 = vadd.f32 0.0, %v720
      %v722 = vpop.f32.mrf.mxu0
      %v723 = vadd.f32 0.0, %v722
      %724 = vmatmul.bf16.gmra.mxu0 %v660
      %v725 = vpop.f32.mrf.mxu0
      %v726 = vadd.f32 0.0, %v725
      %v727 = vpop.f32.mrf.mxu0
      %v728 = vadd.f32 0.0, %v727
      %729 = vmatmul.bf16.gmra.mxu0 %v663
      %v730 = vpop.f32.mrf.mxu0
      %v731 = vadd.f32 0.0, %v730
      %v732 = vpop.f32.mrf.mxu0
      %v733 = vadd.f32 0.0, %v732
      %734 = vmatmul.bf16.gmra.mxu0 %v666
      %v735 = vpop.f32.mrf.mxu0
      %v736 = vadd.f32 0.0, %v735
      %v737 = vpop.f32.mrf.mxu0
      %v738 = vadd.f32 0.0, %v737
      %739 = vmatmul.bf16.gmra.mxu0 %v669
      %v740 = vpop.f32.mrf.mxu0
      %v741 = vadd.f32 0.0, %v740
      %v742 = vpop.f32.mrf.mxu0
      %v743 = vadd.f32 0.0, %v742
      %744 = vmatmul.bf16.gmra.mxu0 %v672
      %v745 = vpop.f32.mrf.mxu0
      %v746 = vadd.f32 0.0, %v745
      %v747 = vpop.f32.mrf.mxu0
      %v748 = vadd.f32 0.0, %v747
      %749 = vmatmul.bf16.gmra.mxu0 %v675
      %v750 = vpop.f32.mrf.mxu0
      %v751 = vadd.f32 0.0, %v750
      %v752 = vpop.f32.mrf.mxu0
      %v753 = vadd.f32 0.0, %v752
      %754 = vmatmul.bf16.gmra.mxu0 %v678
      %v755 = vpop.f32.mrf.mxu0
      %v756 = vadd.f32 0.0, %v755
      %v757 = vpop.f32.mrf.mxu0
      %v758 = vadd.f32 0.0, %v757
      %759 = vmatmul.bf16.gmra.mxu0 %v681
      %v760 = vpop.f32.mrf.mxu0
      %v761 = vadd.f32 0.0, %v760
      %v762 = vpop.f32.mrf.mxu0
      %v763 = vadd.f32 0.0, %v762
      %764 = vmatmul.bf16.gmra.mxu0 %v684
      %v765 = vpop.f32.mrf.mxu0
      %v766 = vadd.f32 0.0, %v765
      %v767 = vpop.f32.mrf.mxu0
      %v768 = vadd.f32 0.0, %v767
      %769 = vmatmul.bf16.gmra.mxu0 %v687
      %v770 = vpop.f32.mrf.mxu0
      %v771 = vadd.f32 0.0, %v770
      %v772 = vpop.f32.mrf.mxu0
      %v773 = vadd.f32 0.0, %v772
      %774 = vmatmul.bf16.gmra.mxu0 %v690
      %v775 = vpop.f32.mrf.mxu0
      %v776 = vadd.f32 0.0, %v775
      %v777 = vpop.f32.mrf.mxu0
      %v778 = vadd.f32 0.0, %v777
      %779 = vmatmul.bf16.gmra.mxu0 %v693
      %v780 = vpop.f32.mrf.mxu0
      %v781 = vadd.f32 0.0, %v780
      %v782 = vpop.f32.mrf.mxu0
      %v783 = vadd.f32 0.0, %v782
      %784 = vmatmul.bf16.gmra.mxu0 %v696
      %v785 = vpop.f32.mrf.mxu0
      %v786 = vadd.f32 0.0, %v785
      %v787 = vpop.f32.mrf.mxu0
      %v788 = vadd.f32 0.0, %v787
      %789 = vdwg.mxu0
      %v790 = vadd.f32 %v458, %v711
      %v791 = vadd.f32 %v460, %v713
      %v792 = vadd.f32 %v463, %v716
      %v793 = vadd.f32 %v465, %v718
      %v794 = vadd.f32 %v468, %v721
      %v795 = vadd.f32 %v470, %v723
      %v796 = vadd.f32 %v473, %v726
      %v797 = vadd.f32 %v475, %v728
      %v798 = vadd.f32 %v478, %v731
      %v799 = vadd.f32 %v480, %v733
      %v800 = vadd.f32 %v483, %v736
      %v801 = vadd.f32 %v485, %v738
      %v802 = vadd.f32 %v488, %v741
      %v803 = vadd.f32 %v490, %v743
      %v804 = vadd.f32 %v493, %v746
      %v805 = vadd.f32 %v495, %v748
      %v806 = vadd.f32 %v498, %v751
      %v807 = vadd.f32 %v500, %v753
      %v808 = vadd.f32 %v503, %v756
      %v809 = vadd.f32 %v505, %v758
      %v810 = vadd.f32 %v508, %v761
      %v811 = vadd.f32 %v510, %v763
      %v812 = vadd.f32 %v513, %v766
      %v813 = vadd.f32 %v515, %v768
      %v814 = vadd.f32 %v518, %v771
      %v815 = vadd.f32 %v520, %v773
      %v816 = vadd.f32 %v523, %v776
      %v817 = vadd.f32 %v525, %v778
      %v818 = vadd.f32 %v528, %v781
      %v819 = vadd.f32 %v530, %v783
      %v820 = vadd.f32 %v533, %v786
      %v821 = vadd.f32 %v535, %v788
      %v822 = vld [vmem:[%s5] sm:$0x1]
      %v824 = vperm.slane %v822, 0
      %v826 = vadd.f32 %v790, %v824
      %v827 = vadd.f32 %v791, %v824
      %v828 = vadd.f32 %v792, %v824
      %v829 = vadd.f32 %v793, %v824
      %v830 = vadd.f32 %v794, %v824
      %v831 = vadd.f32 %v795, %v824
      %v832 = vadd.f32 %v796, %v824
      %v833 = vadd.f32 %v797, %v824
      %v834 = vadd.f32 %v798, %v824
      %v835 = vadd.f32 %v799, %v824
      %v836 = vadd.f32 %v800, %v824
      %v837 = vadd.f32 %v801, %v824
      %v838 = vadd.f32 %v802, %v824
      %v839 = vadd.f32 %v803, %v824
      %v840 = vadd.f32 %v804, %v824
      %v841 = vadd.f32 %v805, %v824
      %v842 = vadd.f32 %v806, %v824
      %v843 = vadd.f32 %v807, %v824
      %v844 = vadd.f32 %v808, %v824
      %v845 = vadd.f32 %v809, %v824
      %v846 = vadd.f32 %v810, %v824
      %v847 = vadd.f32 %v811, %v824
      %v848 = vadd.f32 %v812, %v824
      %v849 = vadd.f32 %v813, %v824
      %v850 = vadd.f32 %v814, %v824
      %v851 = vadd.f32 %v815, %v824
      %v852 = vadd.f32 %v816, %v824
      %v853 = vadd.f32 %v817, %v824
      %v854 = vadd.f32 %v818, %v824
      %v855 = vadd.f32 %v819, %v824
      %v856 = vadd.f32 %v820, %v824
      %v857 = vadd.f32 %v821, %v824
      %v858 = vmax.f32 %v826, 0.0
      %v859 = vmax.f32 %v827, 0.0
      %v860 = vmax.f32 %v828, 0.0
      %v861 = vmax.f32 %v829, 0.0
      %v862 = vmax.f32 %v830, 0.0
      %v863 = vmax.f32 %v831, 0.0
      %v864 = vmax.f32 %v832, 0.0
      %v865 = vmax.f32 %v833, 0.0
      %v866 = vmax.f32 %v834, 0.0
      %v867 = vmax.f32 %v835, 0.0
      %v868 = vmax.f32 %v836, 0.0
      %v869 = vmax.f32 %v837, 0.0
      %v870 = vmax.f32 %v838, 0.0
      %v871 = vmax.f32 %v839, 0.0
      %v872 = vmax.f32 %v840, 0.0
      %v873 = vmax.f32 %v841, 0.0
      %v874 = vmax.f32 %v842, 0.0
      %v875 = vmax.f32 %v843, 0.0
      %v876 = vmax.f32 %v844, 0.0
      %v877 = vmax.f32 %v845, 0.0
      %v878 = vmax.f32 %v846, 0.0
      %v879 = vmax.f32 %v847, 0.0
      %v880 = vmax.f32 %v848, 0.0
      %v881 = vmax.f32 %v849, 0.0
      %v882 = vmax.f32 %v850, 0.0
      %v883 = vmax.f32 %v851, 0.0
      %v884 = vmax.f32 %v852, 0.0
      %v885 = vmax.f32 %v853, 0.0
      %v886 = vmax.f32 %v854, 0.0
      %v887 = vmax.f32 %v855, 0.0
      %v888 = vmax.f32 %v856, 0.0
      %v889 = vmax.f32 %v857, 0.0
      %v890 = vpack.c.bf16 %v858, %v858
      %v891 = vpack.c.bf16 %v859, %v859
      %v892 = vpack.c.bf16 %v860, %v860
      %v893 = vpack.c.bf16 %v861, %v861
      %v894 = vpack.c.bf16 %v862, %v862
      %v895 = vpack.c.bf16 %v863, %v863
      %v896 = vpack.c.bf16 %v864, %v864
      %v897 = vpack.c.bf16 %v865, %v865
      %v898 = vpack.c.bf16 %v866, %v866
      %v899 = vpack.c.bf16 %v867, %v867
      %v900 = vpack.c.bf16 %v868, %v868
      %v901 = vpack.c.bf16 %v869, %v869
      %v902 = vpack.c.bf16 %v870, %v870
      %v903 = vpack.c.bf16 %v871, %v871
      %v904 = vpack.c.bf16 %v872, %v872
      %v905 = vpack.c.bf16 %v873, %v873
      %v906 = vpack.c.bf16 %v874, %v874
      %v907 = vpack.c.bf16 %v875, %v875
      %v908 = vpack.c.bf16 %v876, %v876
      %v909 = vpack.c.bf16 %v877, %v877
      %v910 = vpack.c.bf16 %v878, %v878
      %v911 = vpack.c.bf16 %v879, %v879
      %v912 = vpack.c.bf16 %v880, %v880
      %v913 = vpack.c.bf16 %v881, %v881
      %v914 = vpack.c.bf16 %v882, %v882
      %v915 = vpack.c.bf16 %v883, %v883
      %v916 = vpack.c.bf16 %v884, %v884
      %v917 = vpack.c.bf16 %v885, %v885
      %v918 = vpack.c.bf16 %v886, %v886
      %v919 = vpack.c.bf16 %v887, %v887
      %v920 = vpack.c.bf16 %v888, %v888
      %v921 = vpack.c.bf16 %v889, %v889
      %vm922 = vcmask 125952
      %923 = vst.msk [vmem:[%s275] sm:$0xf] %vm922, %v890
      %924 = vst.msk [vmem:[%s275 + $0x4] sm:$0xf] %vm922, %v891
      %925 = vst.msk [vmem:[%s275 + $0x8] sm:$0xf] %vm922, %v892
      %926 = vst.msk [vmem:[%s275 + $0xc] sm:$0xf] %vm922, %v893
      %927 = vst.msk [vmem:[%s275 + $0x10] sm:$0xf] %vm922, %v894
      %928 = vst.msk [vmem:[%s275 + $0x14] sm:$0xf] %vm922, %v895
      %929 = vst.msk [vmem:[%s275 + $0x18] sm:$0xf] %vm922, %v896
      %930 = vst.msk [vmem:[%s275 + $0x1c] sm:$0xf] %vm922, %v897
      %931 = vst.msk [vmem:[%s275 + $0x20] sm:$0xf] %vm922, %v898
      %932 = vst.msk [vmem:[%s275 + $0x24] sm:$0xf] %vm922, %v899
      %933 = vst.msk [vmem:[%s275 + $0x28] sm:$0xf] %vm922, %v900
      %934 = vst.msk [vmem:[%s275 + $0x2c] sm:$0xf] %vm922, %v901
      %935 = vst.msk [vmem:[%s275 + $0x30] sm:$0xf] %vm922, %v902
      %936 = vst.msk [vmem:[%s275 + $0x34] sm:$0xf] %vm922, %v903
      %937 = vst.msk [vmem:[%s275 + $0x38] sm:$0xf] %vm922, %v904
      %938 = vst.msk [vmem:[%s275 + $0x3c] sm:$0xf] %vm922, %v905
      %939 = vst.msk [vmem:[%s275 + $0x40] sm:$0xf] %vm922, %v906
      %940 = vst.msk [vmem:[%s275 + $0x44] sm:$0xf] %vm922, %v907
      %941 = vst.msk [vmem:[%s275 + $0x48] sm:$0xf] %vm922, %v908
      %942 = vst.msk [vmem:[%s275 + $0x4c] sm:$0xf] %vm922, %v909
      %943 = vst.msk [vmem:[%s275 + $0x50] sm:$0xf] %vm922, %v910
      %944 = vst.msk [vmem:[%s275 + $0x54] sm:$0xf] %vm922, %v911
      %945 = vst.msk [vmem:[%s275 + $0x58] sm:$0xf] %vm922, %v912
      %946 = vst.msk [vmem:[%s275 + $0x5c] sm:$0xf] %vm922, %v913
      %947 = vst.msk [vmem:[%s275 + $0x60] sm:$0xf] %vm922, %v914
      %948 = vst.msk [vmem:[%s275 + $0x64] sm:$0xf] %vm922, %v915
      %949 = vst.msk [vmem:[%s275 + $0x68] sm:$0xf] %vm922, %v916
      %950 = vst.msk [vmem:[%s275 + $0x6c] sm:$0xf] %vm922, %v917
      %951 = vst.msk [vmem:[%s275 + $0x70] sm:$0xf] %vm922, %v918
      %952 = vst.msk [vmem:[%s275 + $0x74] sm:$0xf] %vm922, %v919
      %953 = vst.msk [vmem:[%s275 + $0x78] sm:$0xf] %vm922, %v920
      %954 = vst.msk [vmem:[%s275 + $0x7c] sm:$0xf] %vm922, %v921
      %s955 = smul.u32 32, %s17
      %p956 = scmp.lt.s32.totalorder %s955, 63
      %s957 = scalar_select %p956, %s955, 63
      %s958 = smul.addr %s957, 4
      %s959 = scalar_lea.vmem %s6, %s958
      // Predicated region
      $region45: #{_lambda_.5} parent=43 // pred_check
        %p960 = pneg %p171
      $region46: #{_lambda_.5} parent=43 // pred_check_branch
        %962 = sbr.rel (%p960) target = $region48
      $region47: #{_lambda_.5} parent=43 // pred_region
        %s963 = smul.u32 32, %s17
      $region48: #{_lambda_.5} parent=43 // pred_fallthru
        _
    $region44: #{_lambda_.5} parent=5 // pred_fallthru
      _
    %p964 = scmp.le.s32.totalorder 2, %s12
    // Predicated region
    $region49: #{_lambda_.5} parent=5 // pred_check
      %p965 = pneg %p964
    $region50: #{_lambda_.5} parent=5 // pred_check_branch
      %967 = sbr.rel (%p965) target = $region52
    $region51: #{_lambda_.5} parent=5 // pred_region
      %s968 = ssub.s32 %s12, 2
      // Predicated region
      $region53: #{_lambda_.5} parent=51 // pred_check
        %p969 = pneg %p177
      $region54: #{_lambda_.5} parent=51 // pred_check_branch
        %971 = sbr.rel (%p969) target = $region56
      $region55: #{_lambda_.5} parent=51 // pred_region
        %s972 = smul.u32 32, %s18
        %p973 = scmp.lt.s32.totalorder %s972, 63
        %s974 = scalar_select %p973, %s972, 63
        %s975 = smul.addr %s974, 4
        %s976 = scalar_lea.vmem %s6, %s975
      $region56: #{_lambda_.5} parent=51 // pred_fallthru
        _
    $region52: #{_lambda_.5} parent=5 // pred_fallthru
      _
  $region6: #{_lambda_.5} parent=0 // loop_footer
    %s16 = sadd.s32 1, %s12
  $region7: #{_lambda_.5} parent=0 // loop_footer_branch
    %11 = sbr.rel target = $region3
  $region8: #{_lambda_.5} parent=0 // loop_exit
    _

// kernel: _lambda_.4
$region0: #{_lambda_.4}
  #allocation0 [shape = 'u32[]', space=smem, size = 0x4, offset = 0x4, fixed_abs, tag = 'smem constant byte address 0x4 - core index']
  #allocation1 [shape = 'u32[72,128]{1,0:T(1,128)}', space=vmem, size = 0x9000, scoped, tag = 'internal scratch']
  #allocation2 [shape = 'bf16[18,18,4]{2,1,0:T(8,128)(2,1)}', space=vmem, size = 0x1b000, scoped, tag = 'scratch operand']
  %s0 = inlined_call_operand.vmem [shape: bf16[2,16,16,4], index: 0, kind: input, shape index: {}]
  %s1 = inlined_call_operand.vmem [shape: bf16[3,12,4], index: 1, kind: input, shape index: {}]
  %s2 = inlined_call_operand.vmem [shape: f32[1,4], index: 2, kind: input, shape index: {}]
  %s3 = inlined_call_operand.vmem [shape: bf16[2,256,4], index: 3, kind: output, shape index: {}]
  %s4 = sld [smem:[#allocation0]]
  $region45: #{_lambda_.4} parent=0
    _
  %s6 = ssub.s32 1, %s4
  %s7 = scalar_select 0, %s6, %s4
  loop: start=0, step=1, limit=4
  $region2: #{_lambda_.4} parent=0 // loop_pre_header
    _
  $region3: #{_lambda_.4} parent=0 // loop_header
    %s9 = sphi 0, %s13
    %p10 = scmp.ge.s32.totalorder %s9, 4
    %s19 = sphi 0, %s21
    %s22 = sphi 0, %s19
    %s23 = sphi 0, %s22
    %s39 = sphi 0, %s23
    %s43 = sphi 0, %s43
    %s45 = sphi 0, %s43
    %s46 = sphi 0, %s45
    %s60 = sphi 0, %s46
    %s64 = sphi 0, %s64
    %s66 = sphi 0, %s64
    %s67 = sphi 0, %s66
    %s81 = sphi 0, %s67
    %s87 = sphi 0, %s89
    %s90 = sphi 0, %s87
    %s91 = sphi 0, %s90
    %s107 = sphi 0, %s91
  $region4: #{_lambda_.4} parent=0 // loop_header_branch
    %12 = sbr.rel (%p10) target = $region8
  $region5: #{_lambda_.4} parent=0 // loop_body
    %s14 = ssub.s32 %s9, 1
    %s15 = ssub.s32 %s9, 2
    %s16 = sadd.s32 %s9, 1
    %s17 = ssub.s32 %s9, %s16
    %p18 = scmp.eq.s32.totalorder %s17, 0
    %s20 = sadd.s32 %s19, 1
    %s21 = scalar_select %p18, %s19, %s20
    %p24 = pneg %p18
    %p25 = scmp.eq.s32.totalorder %s9, 1
    %p26 = por %p24, %p25
    %p27 = scmp.ne.s32.totalorder %s19, %s22
    %p28 = scmp.eq.s32.totalorder %s9, 0
    %p29 = por %p27, %p28
    %p30 = scmp.ne.s32.totalorder %s19, %s22
    %p31 = scmp.eq.s32.totalorder %s14, 1
    %p32 = por %p30, %p31
    %p33 = scmp.ne.s32.totalorder %s22, %s23
    %p34 = scmp.eq.s32.totalorder %s14, 0
    %p35 = por %p33, %p34
    %p36 = scmp.ne.s32.totalorder %s22, %s23
    %p37 = scmp.eq.s32.totalorder %s15, 1
    %p38 = por %p36, %p37
    %p40 = scmp.ne.s32.totalorder %s23, %s39
    %p41 = scmp.eq.s32.totalorder %s15, 0
    %p42 = por %p40, %p41
    %s44 = sadd.s32 %s43, 1
    %p47 = scmp.eq.s32.totalorder %s9, 1
    %p48 = scmp.ne.s32.totalorder %s43, %s45
    %p49 = scmp.eq.s32.totalorder %s9, 0
    %p50 = por %p48, %p49
    %p51 = scmp.ne.s32.totalorder %s43, %s45
    %p52 = scmp.eq.s32.totalorder %s14, 1
    %p53 = por %p51, %p52
    %p54 = scmp.ne.s32.totalorder %s45, %s46
    %p55 = scmp.eq.s32.totalorder %s14, 0
    %p56 = por %p54, %p55
    %p57 = scmp.ne.s32.totalorder %s45, %s46
    %p58 = scmp.eq.s32.totalorder %s15, 1
    %p59 = por %p57, %p58
    %p61 = scmp.ne.s32.totalorder %s46, %s60
    %p62 = scmp.eq.s32.totalorder %s15, 0
    %p63 = por %p61, %p62
    %s65 = sadd.s32 %s64, 1
    %p68 = scmp.eq.s32.totalorder %s9, 1
    %p69 = scmp.ne.s32.totalorder %s64, %s66
    %p70 = scmp.eq.s32.totalorder %s9, 0
    %p71 = por %p69, %p70
    %p72 = scmp.ne.s32.totalorder %s64, %s66
    %p73 = scmp.eq.s32.totalorder %s14, 1
    %p74 = por %p72, %p73
    %p75 = scmp.ne.s32.totalorder %s66, %s67
    %p76 = scmp.eq.s32.totalorder %s14, 0
    %p77 = por %p75, %p76
    %p78 = scmp.ne.s32.totalorder %s66, %s67
    %p79 = scmp.eq.s32.totalorder %s15, 1
    %p80 = por %p78, %p79
    %p82 = scmp.ne.s32.totalorder %s67, %s81
    %p83 = scmp.eq.s32.totalorder %s15, 0
    %p84 = por %p82, %p83
    %s85 = ssub.s32 %s9, %s16
    %p86 = scmp.eq.s32.totalorder %s85, 0
    %s88 = sadd.s32 %s87, 1
    %s89 = scalar_select %p86, %s87, %s88
    %p92 = pneg %p86
    %p93 = scmp.eq.s32.totalorder %s9, 1
    %p94 = por %p92, %p93
    %p95 = scmp.ne.s32.totalorder %s87, %s90
    %p96 = scmp.eq.s32.totalorder %s9, 0
    %p97 = por %p95, %p96
    %p98 = scmp.ne.s32.totalorder %s87, %s90
    %p99 = scmp.eq.s32.totalorder %s14, 1
    %p100 = por %p98, %p99
    %p101 = scmp.ne.s32.totalorder %s90, %s91
    %p102 = scmp.eq.s32.totalorder %s14, 0
    %p103 = por %p101, %p102
    %p104 = scmp.ne.s32.totalorder %s90, %s91
    %p105 = scmp.eq.s32.totalorder %s15, 1
    %p106 = por %p104, %p105
    %p108 = scmp.ne.s32.totalorder %s91, %s107
    %p109 = scmp.eq.s32.totalorder %s15, 0
    %p110 = por %p108, %p109
    %p111 = scmp.le.s32.totalorder 1, %s9
    %p112 = scmp.lt.s32.totalorder %s9, 3
    %p113 = pnand %p111, %p112
    %p114 = pneg %p113
    // Predicated region
    $region9: #{_lambda_.4} parent=5 // pred_check
      _
    $region10: #{_lambda_.4} parent=5 // pred_check_branch
      %116 = sbr.rel (%p113) target = $region12
    $region11: #{_lambda_.4} parent=5 // pred_region
      %s117 = ssub.s32 %s9, 1
      // Predicated region
      $region13: #{_lambda_.4} parent=11 // pred_check
        %p118 = pneg %p56
      $region14: #{_lambda_.4} parent=11 // pred_check_branch
        %120 = sbr.rel (%p118) target = $region16
      $region15: #{_lambda_.4} parent=11 // pred_region
        _
      $region16: #{_lambda_.4} parent=11 // pred_fallthru
        _
      // Predicated region
      $region17: #{_lambda_.4} parent=11 // pred_check
        %p121 = pneg %p77
      $region18: #{_lambda_.4} parent=11 // pred_check_branch
        %123 = sbr.rel (%p121) target = $region20
      $region19: #{_lambda_.4} parent=11 // pred_region
        _
      $region20: #{_lambda_.4} parent=11 // pred_fallthru
        _
    $region12: #{_lambda_.4} parent=5 // pred_fallthru
      _
    %p124 = scmp.lt.s32.totalorder %s9, 2
    // Predicated region
    $region21: #{_lambda_.4} parent=5 // pred_check
      %p125 = pneg %p124
    $region22: #{_lambda_.4} parent=5 // pred_check_branch
      %127 = sbr.rel (%p125) target = $region24
    $region23: #{_lambda_.4} parent=5 // pred_region
      // Predicated region
      $region25: #{_lambda_.4} parent=23 // pred_check
        %p128 = pneg %p29
      $region26: #{_lambda_.4} parent=23 // pred_check_branch
        %130 = sbr.rel (%p128) target = $region28
      $region27: #{_lambda_.4} parent=23 // pred_region
        %p131 = scmp.lt.s32.totalorder %s9, 1
        %s132 = scalar_select %p131, %s9, 1
        %s133 = smul.addr %s132, 32
        %s134 = smul.addr %s133, 4
        %s135 = scalar_lea.vmem %s0, %s134
      $region28: #{_lambda_.4} parent=23 // pred_fallthru
        _
    $region24: #{_lambda_.4} parent=5 // pred_fallthru
      _
    %p136 = scmp.le.s32.totalorder 1, %s9
    %p137 = scmp.lt.s32.totalorder %s9, 3
    %p138 = pnand %p136, %p137
    %p139 = pneg %p138
    // Predicated region
    $region29: #{_lambda_.4} parent=5 // pred_check
      _
    $region30: #{_lambda_.4} parent=5 // pred_check_branch
      %141 = sbr.rel (%p138) target = $region32
    $region31: #{_lambda_.4} parent=5 // pred_region
      %s142 = ssub.s32 %s9, 1
      %p143 = scmp.lt.s32.totalorder %s14, 1
      %s144 = scalar_select %p143, %s14, 1
      %s145 = smul.addr %s144, 32
      %s146 = smul.addr %s145, 4
      %s147 = scalar_lea.vmem %s0, %s146
      %p148 = pneg %p35
      %p149 = pneg %p32
      %p150 = pneg %p56
      %p151 = pneg %p53
      %p152 = pneg %p77
      %p153 = pneg %p74
      %p154 = pneg %p103
      %p155 = pneg %p100
      %p156 = scmp.lt.s32.totalorder %s14, 1
      %s157 = scalar_select %p156, %s14, 1
      %s158 = smul.addr %s157, 32
      %s159 = smul.addr %s158, 4
      %s160 = scalar_lea.vmem %s3, %s159
      %p161 = scmp.lt.s32.totalorder %s14, 1
      %s162 = scalar_select %p161, %s14, 1
      %s163 = smul.addr %s162, 32
      %s164 = smul.addr %s163, 4
      %s165 = scalar_lea.vmem %s0, %s164
      %p166 = scmp.lt.s32.totalorder %s14, 1
      %s167 = scalar_select %p166, %s14, 1
      %s168 = smul.addr %s167, 32
      %s169 = smul.addr %s168, 4
      %s170 = scalar_lea.vmem %s3, %s169
      %vm172 = vcmask 27648
      %173 = vst.msk [vmem:[#allocation2] sm:$0xf] %vm172, 0
      %174 = vst.msk [vmem:[#allocation2 + $0x4] sm:$0xf] %vm172, 0
      %vm175 = vcmask 24576
      %176 = vst.msk [vmem:[#allocation2 + $0x8] sm:$0x1] %vm175, 0
      %177 = vst.msk [vmem:[#allocation2 + $0xc] sm:$0xf] %vm172, 0
      %178 = vst.msk [vmem:[#allocation2 + $0x10] sm:$0xf] %vm172, 0
      %179 = vst.msk [vmem:[#allocation2 + $0x14] sm:$0x1] %vm175, 0
      %180 = vst.msk [vmem:[#allocation2 + $0x18] sm:$0xf] %vm172, 0
      %181 = vst.msk [vmem:[#allocation2 + $0x1c] sm:$0xf] %vm172, 0
      %182 = vst.msk [vmem:[#allocation2 + $0x20] sm:$0x1] %vm175, 0
      %183 = vst.msk [vmem:[#allocation2 + $0x24] sm:$0xf] %vm172, 0
      %184 = vst.msk [vmem:[#allocation2 + $0x28] sm:$0xf] %vm172, 0
      %185 = vst.msk [vmem:[#allocation2 + $0x2c] sm:$0x1] %vm175, 0
      %186 = vst.msk [vmem:[#allocation2 + $0x30] sm:$0xf] %vm172, 0
      %187 = vst.msk [vmem:[#allocation2 + $0x34] sm:$0xf] %vm172, 0
      %188 = vst.msk [vmem:[#allocation2 + $0x38] sm:$0x1] %vm175, 0
      %189 = vst.msk [vmem:[#allocation2 + $0x3c] sm:$0xf] %vm172, 0
      %190 = vst.msk [vmem:[#allocation2 + $0x40] sm:$0xf] %vm172, 0
      %191 = vst.msk [vmem:[#allocation2 + $0x44] sm:$0x1] %vm175, 0
      %192 = vst.msk [vmem:[#allocation2 + $0x48] sm:$0xf] %vm172, 0
      %193 = vst.msk [vmem:[#allocation2 + $0x4c] sm:$0xf] %vm172, 0
      %194 = vst.msk [vmem:[#allocation2 + $0x50] sm:$0x1] %vm175, 0
      %195 = vst.msk [vmem:[#allocation2 + $0x54] sm:$0xf] %vm172, 0
      %196 = vst.msk [vmem:[#allocation2 + $0x58] sm:$0xf] %vm172, 0
      %197 = vst.msk [vmem:[#allocation2 + $0x5c] sm:$0x1] %vm175, 0
      %198 = vst.msk [vmem:[#allocation2 + $0x60] sm:$0xf] %vm172, 0
      %199 = vst.msk [vmem:[#allocation2 + $0x64] sm:$0xf] %vm172, 0
      %200 = vst.msk [vmem:[#allocation2 + $0x68] sm:$0x1] %vm175, 0
      %201 = vst.msk [vmem:[#allocation2 + $0x6c] sm:$0xf] %vm172, 0
      %202 = vst.msk [vmem:[#allocation2 + $0x70] sm:$0xf] %vm172, 0
      %203 = vst.msk [vmem:[#allocation2 + $0x74] sm:$0x1] %vm175, 0
      %204 = vst.msk [vmem:[#allocation2 + $0x78] sm:$0xf] %vm172, 0
      %205 = vst.msk [vmem:[#allocation2 + $0x7c] sm:$0xf] %vm172, 0
      %206 = vst.msk [vmem:[#allocation2 + $0x80] sm:$0x1] %vm175, 0
      %207 = vst.msk [vmem:[#allocation2 + $0x84] sm:$0xf] %vm172, 0
      %208 = vst.msk [vmem:[#allocation2 + $0x88] sm:$0xf] %vm172, 0
      %209 = vst.msk [vmem:[#allocation2 + $0x8c] sm:$0x1] %vm175, 0
      %210 = vst.msk [vmem:[#allocation2 + $0x90] sm:$0xf] %vm172, 0
      %211 = vst.msk [vmem:[#allocation2 + $0x94] sm:$0xf] %vm172, 0
      %212 = vst.msk [vmem:[#allocation2 + $0x98] sm:$0x1] %vm175, 0
      %213 = vst.msk [vmem:[#allocation2 + $0x9c] sm:$0xf] %vm172, 0
      %214 = vst.msk [vmem:[#allocation2 + $0xa0] sm:$0xf] %vm172, 0
      %215 = vst.msk [vmem:[#allocation2 + $0xa4] sm:$0x1] %vm175, 0
      %216 = vst.msk [vmem:[#allocation2 + $0xa8] sm:$0xf] %vm172, 0
      %217 = vst.msk [vmem:[#allocation2 + $0xac] sm:$0xf] %vm172, 0
      %218 = vst.msk [vmem:[#allocation2 + $0xb0] sm:$0x1] %vm175, 0
      %219 = vst.msk [vmem:[#allocation2 + $0xb4] sm:$0xf] %vm172, 0
      %220 = vst.msk [vmem:[#allocation2 + $0xb8] sm:$0xf] %vm172, 0
      %221 = vst.msk [vmem:[#allocation2 + $0xbc] sm:$0x1] %vm175, 0
      %222 = vst.msk [vmem:[#allocation2 + $0xc0] sm:$0xf] %vm172, 0
      %223 = vst.msk [vmem:[#allocation2 + $0xc4] sm:$0xf] %vm172, 0
      %224 = vst.msk [vmem:[#allocation2 + $0xc8] sm:$0x1] %vm175, 0
      %225 = vst.msk [vmem:[#allocation2 + $0xcc] sm:$0xf] %vm172, 0
      %226 = vst.msk [vmem:[#allocation2 + $0xd0] sm:$0xf] %vm172, 0
      %227 = vst.msk [vmem:[#allocation2 + $0xd4] sm:$0x1] %vm175, 0
      %v228 = vld [vmem:[%s165] sm:$0xf]
      %v229 = vld [vmem:[%s165 + $0x4] sm:$0xf]
      %v230 = vld [vmem:[%s165 + $0x8] sm:$0xf]
      %v231 = vld [vmem:[%s165 + $0xc] sm:$0xf]
      %v232 = vld [vmem:[%s165 + $0x10] sm:$0xf]
      %v233 = vld [vmem:[%s165 + $0x14] sm:$0xf]
      %v234 = vld [vmem:[%s165 + $0x18] sm:$0xf]
      %v235 = vld [vmem:[%s165 + $0x1c] sm:$0xf]
      %v236 = vld [vmem:[%s165 + $0x20] sm:$0xf]
      %v237 = vld [vmem:[%s165 + $0x24] sm:$0xf]
      %v238 = vld [vmem:[%s165 + $0x28] sm:$0xf]
      %v239 = vld [vmem:[%s165 + $0x2c] sm:$0xf]
      %v240 = vld [vmem:[%s165 + $0x30] sm:$0xf]
      %v241 = vld [vmem:[%s165 + $0x34] sm:$0xf]
      %v242 = vld [vmem:[%s165 + $0x38] sm:$0xf]
      %v243 = vld [vmem:[%s165 + $0x3c] sm:$0xf]
      %v244 = vld [vmem:[%s165 + $0x40] sm:$0xf]
      %v245 = vld [vmem:[%s165 + $0x44] sm:$0xf]
      %v246 = vld [vmem:[%s165 + $0x48] sm:$0xf]
      %v247 = vld [vmem:[%s165 + $0x4c] sm:$0xf]
      %v248 = vld [vmem:[%s165 + $0x50] sm:$0xf]
      %v249 = vld [vmem:[%s165 + $0x54] sm:$0xf]
      %v250 = vld [vmem:[%s165 + $0x58] sm:$0xf]
      %v251 = vld [vmem:[%s165 + $0x5c] sm:$0xf]
      %v252 = vld [vmem:[%s165 + $0x60] sm:$0xf]
      %v253 = vld [vmem:[%s165 + $0x64] sm:$0xf]
      %v254 = vld [vmem:[%s165 + $0x68] sm:$0xf]
      %v255 = vld [vmem:[%s165 + $0x6c] sm:$0xf]
      %v256 = vld [vmem:[%s165 + $0x70] sm:$0xf]
      %v257 = vld [vmem:[%s165 + $0x74] sm:$0xf]
      %v258 = vld [vmem:[%s165 + $0x78] sm:$0xf]
      %v259 = vld [vmem:[%s165 + $0x7c] sm:$0xf]
      %vm260 = vsmask.f32 256
      %vm261 = vsmask.f32 4368
      %vm262 = vmor %vm260, %vm261
      %v264 = vshrl.u32 %v228, 16
      %v266 = vrot.slane %v264, 7
      %v267 = vshll.u32 %v228, 16
      %v269 = vor.u32 %v266, %v267
      %v270 = vrot.slane %v266, 4
      %v272 = vshrl.u32 %v229, 16
      %v274 = vrot.slane %v272, 7
      %v275 = vshll.u32 %v229, 16
      %v277 = vor.u32 %v274, %v275
      %v278 = vsel %vm262, %v270, %v277
      %v279 = vrot.slane %v274, 4
      %v281 = vshrl.u32 %v230, 16
      %v283 = vrot.slane %v281, 7
      %v284 = vshll.u32 %v230, 16
      %v286 = vor.u32 %v283, %v284
      %v287 = vrot.slane %v283, 4
      %v289 = vshrl.u32 %v231, 16
      %v291 = vrot.slane %v289, 7
      %v292 = vshll.u32 %v231, 16
      %v294 = vor.u32 %v291, %v292
      %v295 = vsel %vm262, %v287, %v294
      %v296 = vrot.slane %v291, 4
      %v298 = vshrl.u32 %v232, 16
      %v300 = vrot.slane %v298, 7
      %v301 = vshll.u32 %v232, 16
      %v303 = vor.u32 %v300, %v301
      %v304 = vrot.slane %v300, 4
      %v306 = vshrl.u32 %v233, 16
      %v308 = vrot.slane %v306, 7
      %v309 = vshll.u32 %v233, 16
      %v311 = vor.u32 %v308, %v309
      %v312 = vsel %vm262, %v304, %v311
      %v313 = vrot.slane %v308, 4
      %v315 = vshrl.u32 %v234, 16
      %v317 = vrot.slane %v315, 7
      %v318 = vshll.u32 %v234, 16
      %v320 = vor.u32 %v317, %v318
      %v321 = vrot.slane %v317, 4
      %v323 = vshrl.u32 %v235, 16
      %v325 = vrot.slane %v323, 7
      %v326 = vshll.u32 %v235, 16
      %v328 = vor.u32 %v325, %v326
      %v329 = vsel %vm262, %v321, %v328
      %v330 = vrot.slane %v325, 4
      %v332 = vshrl.u32 %v236, 16
      %v334 = vrot.slane %v332, 7
      %v335 = vshll.u32 %v236, 16
      %v337 = vor.u32 %v334, %v335
      %v338 = vrot.slane %v334, 4
      %v340 = vshrl.u32 %v237, 16
      %v342 = vrot.slane %v340, 7
      %v343 = vshll.u32 %v237, 16
      %v345 = vor.u32 %v342, %v343
      %v346 = vsel %vm262, %v338, %v345
      %v347 = vrot.slane %v342, 4
      %v349 = vshrl.u32 %v238, 16
      %v351 = vrot.slane %v349, 7
      %v352 = vshll.u32 %v238, 16
      %v354 = vor.u32 %v351, %v352
      %v355 = vrot.slane %v351, 4
      %v357 = vshrl.u32 %v239, 16
      %v359 = vrot.slane %v357, 7
      %v360 = vshll.u32 %v239, 16
      %v362 = vor.u32 %v359, %v360
      %v363 = vsel %vm262, %v355, %v362
      %v364 = vrot.slane %v359, 4
      %v366 = vshrl.u32 %v240, 16
      %v368 = vrot.slane %v366, 7
      %v369 = vshll.u32 %v240, 16
      %v371 = vor.u32 %v368, %v369
      %v372 = vrot.slane %v368, 4
      %v374 = vshrl.u32 %v241, 16
      %v376 = vrot.slane %v374, 7
      %v377 = vshll.u32 %v241, 16
      %v379 = vor.u32 %v376, %v377
      %v380 = vsel %vm262, %v372, %v379
      %v381 = vrot.slane %v376, 4
      %v383 = vshrl.u32 %v242, 16
      %v385 = vrot.slane %v383, 7
      %v386 = vshll.u32 %v242, 16
      %v388 = vor.u32 %v385, %v386
      %v389 = vrot.slane %v385, 4
      %v391 = vshrl.u32 %v243, 16
      %v393 = vrot.slane %v391, 7
      %v394 = vshll.u32 %v243, 16
      %v396 = vor.u32 %v393, %v394
      %v397 = vsel %vm262, %v389, %v396
      %v398 = vrot.slane %v393, 4
      %v400 = vshrl.u32 %v244, 16
      %v402 = vrot.slane %v400, 7
      %v403 = vshll.u32 %v244, 16
      %v405 = vor.u32 %v402, %v403
      %v406 = vrot.slane %v402, 4
      %v408 = vshrl.u32 %v245, 16
      %v410 = vrot.slane %v408, 7
      %v411 = vshll.u32 %v245, 16
      %v413 = vor.u32 %v410, %v411
      %v414 = vsel %vm262, %v406, %v413
      %v415 = vrot.slane %v410, 4
      %v417 = vshrl.u32 %v246, 16
      %v419 = vrot.slane %v417, 7
      %v420 = vshll.u32 %v246, 16
      %v422 = vor.u32 %v419, %v420
      %v423 = vrot.slane %v419, 4
      %v425 = vshrl.u32 %v247, 16
      %v427 = vrot.slane %v425, 7
      %v428 = vshll.u32 %v247, 16
      %v430 = vor.u32 %v427, %v428
      %v431 = vsel %vm262, %v423, %v430
      %v432 = vrot.slane %v427, 4
      %v434 = vshrl.u32 %v248, 16
      %v436 = vrot.slane %v434, 7
      %v437 = vshll.u32 %v248, 16
      %v439 = vor.u32 %v436, %v437
      %v440 = vrot.slane %v436, 4
      %v442 = vshrl.u32 %v249, 16
      %v444 = vrot.slane %v442, 7
      %v445 = vshll.u32 %v249, 16
      %v447 = vor.u32 %v444, %v445
      %v448 = vsel %vm262, %v440, %v447
      %v449 = vrot.slane %v444, 4
      %v451 = vshrl.u32 %v250, 16
      %v453 = vrot.slane %v451, 7
      %v454 = vshll.u32 %v250, 16
      %v456 = vor.u32 %v453, %v454
      %v457 = vrot.slane %v453, 4
      %v459 = vshrl.u32 %v251, 16
      %v461 = vrot.slane %v459, 7
      %v462 = vshll.u32 %v251, 16
      %v464 = vor.u32 %v461, %v462
      %v465 = vsel %vm262, %v457, %v464
      %v466 = vrot.slane %v461, 4
      %v468 = vshrl.u32 %v252, 16
      %v470 = vrot.slane %v468, 7
      %v471 = vshll.u32 %v252, 16
      %v473 = vor.u32 %v470, %v471
      %v474 = vrot.slane %v470, 4
      %v476 = vshrl.u32 %v253, 16
      %v478 = vrot.slane %v476, 7
      %v479 = vshll.u32 %v253, 16
      %v481 = vor.u32 %v478, %v479
      %v482 = vsel %vm262, %v474, %v481
      %v483 = vrot.slane %v478, 4
      %v485 = vshrl.u32 %v254, 16
      %v487 = vrot.slane %v485, 7
      %v488 = vshll.u32 %v254, 16
      %v490 = vor.u32 %v487, %v488
      %v491 = vrot.slane %v487, 4
      %v493 = vshrl.u32 %v255, 16
      %v495 = vrot.slane %v493, 7
      %v496 = vshll.u32 %v255, 16
      %v498 = vor.u32 %v495, %v496
      %v499 = vsel %vm262, %v491, %v498
      %v500 = vrot.slane %v495, 4
      %v502 = vshrl.u32 %v256, 16
      %v504 = vrot.slane %v502, 7
      %v505 = vshll.u32 %v256, 16
      %v507 = vor.u32 %v504, %v505
      %v508 = vrot.slane %v504, 4
      %v510 = vshrl.u32 %v257, 16
      %v512 = vrot.slane %v510, 7
      %v513 = vshll.u32 %v257, 16
      %v515 = vor.u32 %v512, %v513
      %v516 = vsel %vm262, %v508, %v515
      %v517 = vrot.slane %v512, 4
      %v519 = vshrl.u32 %v258, 16
      %v521 = vrot.slane %v519, 7
      %v522 = vshll.u32 %v258, 16
      %v524 = vor.u32 %v521, %v522
      %v525 = vrot.slane %v521, 4
      %v527 = vshrl.u32 %v259, 16
      %v529 = vrot.slane %v527, 7
      %v530 = vshll.u32 %v259, 16
      %v532 = vor.u32 %v529, %v530
      %v533 = vsel %vm262, %v525, %v532
      %v534 = vrot.slane %v529, 4
      %s583 = scalar_lea.vmem [#allocation2], 12
      %vm584 = vcmask 27648
      %vm585 = vsmask.f32 7938
      %vm586 = vmand %vm584, %vm585
      %v587 = vld [vmem:[%s583] sm:$0xf]
      %v588 = vsel %vm586, %v269, %v587
      %589 = vst [vmem:[%s583] sm:$0xf] %v588
      %590 = vst.msk [vmem:[%s583 + $0x4] sm:$0xf] %vm172, %v278
      %vm591 = vcmask 24576
      %vm592 = vmand %vm591, %vm260
      %v593 = vld [vmem:[%s583 + $0x8] sm:$0x1]
      %v594 = vsel %vm592, %v279, %v593
      %595 = vst [vmem:[%s583 + $0x8] sm:$0x1] %v594
      %v596 = vld [vmem:[%s583 + $0xc] sm:$0xf]
      %v597 = vsel %vm586, %v286, %v596
      %598 = vst [vmem:[%s583 + $0xc] sm:$0xf] %v597
      %599 = vst.msk [vmem:[%s583 + $0x10] sm:$0xf] %vm172, %v295
      %v600 = vld [vmem:[%s583 + $0x14] sm:$0x1]
      %v601 = vsel %vm592, %v296, %v600
      %602 = vst [vmem:[%s583 + $0x14] sm:$0x1] %v601
      %v603 = vld [vmem:[%s583 + $0x18] sm:$0xf]
      %v604 = vsel %vm586, %v303, %v603
      %605 = vst [vmem:[%s583 + $0x18] sm:$0xf] %v604
      %606 = vst.msk [vmem:[%s583 + $0x1c] sm:$0xf] %vm172, %v312
      %v607 = vld [vmem:[%s583 + $0x20] sm:$0x1]
      %v608 = vsel %vm592, %v313, %v607
      %609 = vst [vmem:[%s583 + $0x20] sm:$0x1] %v608
      %v610 = vld [vmem:[%s583 + $0x24] sm:$0xf]
      %v611 = vsel %vm586, %v320, %v610
      %612 = vst [vmem:[%s583 + $0x24] sm:$0xf] %v611
      %613 = vst.msk [vmem:[%s583 + $0x28] sm:$0xf] %vm172, %v329
      %v614 = vld [vmem:[%s583 + $0x2c] sm:$0x1]
      %v615 = vsel %vm592, %v330, %v614
      %616 = vst [vmem:[%s583 + $0x2c] sm:$0x1] %v615
      %v617 = vld [vmem:[%s583 + $0x30] sm:$0xf]
      %v618 = vsel %vm586, %v337, %v617
      %619 = vst [vmem:[%s583 + $0x30] sm:$0xf] %v618
      %620 = vst.msk [vmem:[%s583 + $0x34] sm:$0xf] %vm172, %v346
      %v621 = vld [vmem:[%s583 + $0x38] sm:$0x1]
      %v622 = vsel %vm592, %v347, %v621
      %623 = vst [vmem:[%s583 + $0x38] sm:$0x1] %v622
      %v624 = vld [vmem:[%s583 + $0x3c] sm:$0xf]
      %v625 = vsel %vm586, %v354, %v624
      %626 = vst [vmem:[%s583 + $0x3c] sm:$0xf] %v625
      %627 = vst.msk [vmem:[%s583 + $0x40] sm:$0xf] %vm172, %v363
      %v628 = vld [vmem:[%s583 + $0x44] sm:$0x1]
      %v629 = vsel %vm592, %v364, %v628
      %630 = vst [vmem:[%s583 + $0x44] sm:$0x1] %v629
      %v631 = vld [vmem:[%s583 + $0x48] sm:$0xf]
      %v632 = vsel %vm586, %v371, %v631
      %633 = vst [vmem:[%s583 + $0x48] sm:$0xf] %v632
      %634 = vst.msk [vmem:[%s583 + $0x4c] sm:$0xf] %vm172, %v380
      %v635 = vld [vmem:[%s583 + $0x50] sm:$0x1]
      %v636 = vsel %vm592, %v381, %v635
      %637 = vst [vmem:[%s583 + $0x50] sm:$0x1] %v636
      %v638 = vld [vmem:[%s583 + $0x54] sm:$0xf]
      %v639 = vsel %vm586, %v388, %v638
      %640 = vst [vmem:[%s583 + $0x54] sm:$0xf] %v639
      %641 = vst.msk [vmem:[%s583 + $0x58] sm:$0xf] %vm172, %v397
      %v642 = vld [vmem:[%s583 + $0x5c] sm:$0x1]
      %v643 = vsel %vm592, %v398, %v642
      %644 = vst [vmem:[%s583 + $0x5c] sm:$0x1] %v643
      %v645 = vld [vmem:[%s583 + $0x60] sm:$0xf]
      %v646 = vsel %vm586, %v405, %v645
      %647 = vst [vmem:[%s583 + $0x60] sm:$0xf] %v646
      %648 = vst.msk [vmem:[%s583 + $0x64] sm:$0xf] %vm172, %v414
      %v649 = vld [vmem:[%s583 + $0x68] sm:$0x1]
      %v650 = vsel %vm592, %v415, %v649
      %651 = vst [vmem:[%s583 + $0x68] sm:$0x1] %v650
      %v652 = vld [vmem:[%s583 + $0x6c] sm:$0xf]
      %v653 = vsel %vm586, %v422, %v652
      %654 = vst [vmem:[%s583 + $0x6c] sm:$0xf] %v653
      %655 = vst.msk [vmem:[%s583 + $0x70] sm:$0xf] %vm172, %v431
      %v656 = vld [vmem:[%s583 + $0x74] sm:$0x1]
      %v657 = vsel %vm592, %v432, %v656
      %658 = vst [vmem:[%s583 + $0x74] sm:$0x1] %v657
      %v659 = vld [vmem:[%s583 + $0x78] sm:$0xf]
      %v660 = vsel %vm586, %v439, %v659
      %661 = vst [vmem:[%s583 + $0x78] sm:$0xf] %v660
      %662 = vst.msk [vmem:[%s583 + $0x7c] sm:$0xf] %vm172, %v448
      %v663 = vld [vmem:[%s583 + $0x80] sm:$0x1]
      %v664 = vsel %vm592, %v449, %v663
      %665 = vst [vmem:[%s583 + $0x80] sm:$0x1] %v664
      %v666 = vld [vmem:[%s583 + $0x84] sm:$0xf]
      %v667 = vsel %vm586, %v456, %v666
      %668 = vst [vmem:[%s583 + $0x84] sm:$0xf] %v667
      %669 = vst.msk [vmem:[%s583 + $0x88] sm:$0xf] %vm172, %v465
      %v670 = vld [vmem:[%s583 + $0x8c] sm:$0x1]
      %v671 = vsel %vm592, %v466, %v670
      %672 = vst [vmem:[%s583 + $0x8c] sm:$0x1] %v671
      %v673 = vld [vmem:[%s583 + $0x90] sm:$0xf]
      %v674 = vsel %vm586, %v473, %v673
      %675 = vst [vmem:[%s583 + $0x90] sm:$0xf] %v674
      %676 = vst.msk [vmem:[%s583 + $0x94] sm:$0xf] %vm172, %v482
      %v677 = vld [vmem:[%s583 + $0x98] sm:$0x1]
      %v678 = vsel %vm592, %v483, %v677
      %679 = vst [vmem:[%s583 + $0x98] sm:$0x1] %v678
      %v680 = vld [vmem:[%s583 + $0x9c] sm:$0xf]
      %v681 = vsel %vm586, %v490, %v680
      %682 = vst [vmem:[%s583 + $0x9c] sm:$0xf] %v681
      %683 = vst.msk [vmem:[%s583 + $0xa0] sm:$0xf] %vm172, %v499
      %v684 = vld [vmem:[%s583 + $0xa4] sm:$0x1]
      %v685 = vsel %vm592, %v500, %v684
      %686 = vst [vmem:[%s583 + $0xa4] sm:$0x1] %v685
      %v687 = vld [vmem:[%s583 + $0xa8] sm:$0xf]
      %v688 = vsel %vm586, %v507, %v687
      %689 = vst [vmem:[%s583 + $0xa8] sm:$0xf] %v688
      %690 = vst.msk [vmem:[%s583 + $0xac] sm:$0xf] %vm172, %v516
      %v691 = vld [vmem:[%s583 + $0xb0] sm:$0x1]
      %v692 = vsel %vm592, %v517, %v691
      %693 = vst [vmem:[%s583 + $0xb0] sm:$0x1] %v692
      %v694 = vld [vmem:[%s583 + $0xb4] sm:$0xf]
      %v695 = vsel %vm586, %v524, %v694
      %696 = vst [vmem:[%s583 + $0xb4] sm:$0xf] %v695
      %697 = vst.msk [vmem:[%s583 + $0xb8] sm:$0xf] %vm172, %v533
      %v698 = vld [vmem:[%s583 + $0xbc] sm:$0x1]
      %v699 = vsel %vm592, %v534, %v698
      %700 = vst [vmem:[%s583 + $0xbc] sm:$0x1] %v699
      %v701 = vld [vmem:[#allocation2] sm:$0xf]
      %v702 = vld [vmem:[#allocation2 + $0x4] sm:$0xf]
      %v703 = vld [vmem:[#allocation2 + $0xc] sm:$0xf]
      %v704 = vld [vmem:[#allocation2 + $0x10] sm:$0xf]
      %v705 = vld [vmem:[#allocation2 + $0x18] sm:$0xf]
      %v706 = vld [vmem:[#allocation2 + $0x1c] sm:$0xf]
      %v707 = vld [vmem:[#allocation2 + $0x24] sm:$0xf]
      %v708 = vld [vmem:[#allocation2 + $0x28] sm:$0xf]
      %v709 = vld [vmem:[#allocation2 + $0x30] sm:$0xf]
      %v710 = vld [vmem:[#allocation2 + $0x34] sm:$0xf]
      %v711 = vld [vmem:[#allocation2 + $0x3c] sm:$0xf]
      %v712 = vld [vmem:[#allocation2 + $0x40] sm:$0xf]
      %v713 = vld [vmem:[#allocation2 + $0x48] sm:$0xf]
      %v714 = vld [vmem:[#allocation2 + $0x4c] sm:$0xf]
      %v715 = vld [vmem:[#allocation2 + $0x54] sm:$0xf]
      %v716 = vld [vmem:[#allocation2 + $0x58] sm:$0xf]
      %v717 = vld [vmem:[#allocation2 + $0x60] sm:$0xf]
      %v718 = vld [vmem:[#allocation2 + $0x64] sm:$0xf]
      %v719 = vld [vmem:[#allocation2 + $0x6c] sm:$0xf]
      %v720 = vld [vmem:[#allocation2 + $0x70] sm:$0xf]
      %v721 = vld [vmem:[#allocation2 + $0x78] sm:$0xf]
      %v722 = vld [vmem:[#allocation2 + $0x7c] sm:$0xf]
      %v723 = vld [vmem:[#allocation2 + $0x84] sm:$0xf]
      %v724 = vld [vmem:[#allocation2 + $0x88] sm:$0xf]
      %v725 = vld [vmem:[#allocation2 + $0x90] sm:$0xf]
      %v726 = vld [vmem:[#allocation2 + $0x94] sm:$0xf]
      %v727 = vld [vmem:[#allocation2 + $0x9c] sm:$0xf]
      %v728 = vld [vmem:[#allocation2 + $0xa0] sm:$0xf]
      %v729 = vld [vmem:[#allocation2 + $0xa8] sm:$0xf]
      %v730 = vld [vmem:[#allocation2 + $0xac] sm:$0xf]
      %v731 = vld [vmem:[#allocation2 + $0xb4] sm:$0xf]
      %v732 = vld [vmem:[#allocation2 + $0xb8] sm:$0xf]
      %v733 = vld [vmem:[#allocation2 + $0x8] sm:$0x1]
      %v734 = vld [vmem:[#allocation2 + $0x14] sm:$0x1]
      %v735 = vld [vmem:[#allocation2 + $0x20] sm:$0x1]
      %v736 = vld [vmem:[#allocation2 + $0x2c] sm:$0x1]
      %v737 = vld [vmem:[#allocation2 + $0x38] sm:$0x1]
      %v738 = vld [vmem:[#allocation2 + $0x44] sm:$0x1]
      %v739 = vld [vmem:[#allocation2 + $0x50] sm:$0x1]
      %v740 = vld [vmem:[#allocation2 + $0x5c] sm:$0x1]
      %v741 = vld [vmem:[#allocation2 + $0x68] sm:$0x1]
      %v742 = vld [vmem:[#allocation2 + $0x74] sm:$0x1]
      %v743 = vld [vmem:[#allocation2 + $0x80] sm:$0x1]
      %v744 = vld [vmem:[#allocation2 + $0x8c] sm:$0x1]
      %v745 = vld [vmem:[#allocation2 + $0x98] sm:$0x1]
      %v746 = vld [vmem:[#allocation2 + $0xa4] sm:$0x1]
      %v747 = vld [vmem:[#allocation2 + $0xb0] sm:$0x1]
      %v748 = vld [vmem:[#allocation2 + $0xbc] sm:$0x1]
      %v749 = vld [vmem:[#allocation2] sm:$0xe]
      %v750 = vld [vmem:[#allocation2 + $0xc] sm:$0xe]
      %v751 = vld [vmem:[#allocation2 + $0x18] sm:$0xe]
      %v752 = vld [vmem:[#allocation2 + $0x24] sm:$0xe]
      %v753 = vld [vmem:[#allocation2 + $0x30] sm:$0xe]
      %v754 = vld [vmem:[#allocation2 + $0x3c] sm:$0xe]
      %v755 = vld [vmem:[#allocation2 + $0x48] sm:$0xe]
      %v756 = vld [vmem:[#allocation2 + $0x54] sm:$0xe]
      %v757 = vld [vmem:[#allocation2 + $0x60] sm:$0xe]
      %v758 = vld [vmem:[#allocation2 + $0x6c] sm:$0xe]
      %v759 = vld [vmem:[#allocation2 + $0x78] sm:$0xe]
      %v760 = vld [vmem:[#allocation2 + $0x84] sm:$0xe]
      %v761 = vld [vmem:[#allocation2 + $0x90] sm:$0xe]
      %v762 = vld [vmem:[#allocation2 + $0x9c] sm:$0xe]
      %v763 = vld [vmem:[#allocation2 + $0xa8] sm:$0xe]
      %v764 = vld [vmem:[#allocation2 + $0xb4] sm:$0xe]
      %v797 = vunpack.c.l.b16 %v701
      %v798 = vunpack.c.l.b16 %v702
      %v799 = vunpack.c.l.b16 %v703
      %v800 = vunpack.c.l.b16 %v704
      %v801 = vunpack.c.l.b16 %v705
      %v802 = vunpack.c.l.b16 %v706
      %v803 = vunpack.c.l.b16 %v707
      %v804 = vunpack.c.l.b16 %v708
      %v805 = vunpack.c.l.b16 %v709
      %v806 = vunpack.c.l.b16 %v710
      %v807 = vunpack.c.l.b16 %v711
      %v808 = vunpack.c.l.b16 %v712
      %v809 = vunpack.c.l.b16 %v713
      %v810 = vunpack.c.l.b16 %v714
      %v811 = vunpack.c.l.b16 %v715
      %v812 = vunpack.c.l.b16 %v716
      %v813 = vunpack.c.l.b16 %v717
      %v814 = vunpack.c.l.b16 %v718
      %v815 = vunpack.c.l.b16 %v719
      %v816 = vunpack.c.l.b16 %v720
      %v817 = vunpack.c.l.b16 %v721
      %v818 = vunpack.c.l.b16 %v722
      %v819 = vunpack.c.l.b16 %v723
      %v820 = vunpack.c.l.b16 %v724
      %v821 = vunpack.c.l.b16 %v725
      %v822 = vunpack.c.l.b16 %v726
      %v823 = vunpack.c.l.b16 %v727
      %v824 = vunpack.c.l.b16 %v728
      %v825 = vunpack.c.l.b16 %v729
      %v826 = vunpack.c.l.b16 %v730
      %v827 = vunpack.c.l.b16 %v731
      %v828 = vunpack.c.l.b16 %v732
      %v829 = vpack.c.b16 %v798, %v797
      %v830 = vpack.c.b16 %v800, %v799
      %v831 = vpack.c.b16 %v802, %v801
      %v832 = vpack.c.b16 %v804, %v803
      %v833 = vpack.c.b16 %v806, %v805
      %v834 = vpack.c.b16 %v808, %v807
      %v835 = vpack.c.b16 %v810, %v809
      %v836 = vpack.c.b16 %v812, %v811
      %v837 = vpack.c.b16 %v814, %v813
      %v838 = vpack.c.b16 %v816, %v815
      %v839 = vpack.c.b16 %v818, %v817
      %v840 = vpack.c.b16 %v820, %v819
      %v841 = vpack.c.b16 %v822, %v821
      %v842 = vpack.c.b16 %v824, %v823
      %v843 = vpack.c.b16 %v826, %v825
      %v844 = vpack.c.b16 %v828, %v827
      %v861 = vunpack.c.l.b16 %v733
      %v862 = vunpack.c.l.b16 %v734
      %v863 = vunpack.c.l.b16 %v735
      %v864 = vunpack.c.l.b16 %v736
      %v865 = vunpack.c.l.b16 %v737
      %v866 = vunpack.c.l.b16 %v738
      %v867 = vunpack.c.l.b16 %v739
      %v868 = vunpack.c.l.b16 %v740
      %v869 = vunpack.c.l.b16 %v741
      %v870 = vunpack.c.l.b16 %v742
      %v871 = vunpack.c.l.b16 %v743
      %v872 = vunpack.c.l.b16 %v744
      %v873 = vunpack.c.l.b16 %v745
      %v874 = vunpack.c.l.b16 %v746
      %v875 = vunpack.c.l.b16 %v747
      %v876 = vunpack.c.l.b16 %v748
      %v877 = vpack.c.b16 %v861, %v861
      %v878 = vpack.c.b16 %v862, %v862
      %v879 = vpack.c.b16 %v863, %v863
      %v880 = vpack.c.b16 %v864, %v864
      %v881 = vpack.c.b16 %v865, %v865
      %v882 = vpack.c.b16 %v866, %v866
      %v883 = vpack.c.b16 %v867, %v867
      %v884 = vpack.c.b16 %v868, %v868
      %v885 = vpack.c.b16 %v869, %v869
      %v886 = vpack.c.b16 %v870, %v870
      %v887 = vpack.c.b16 %v871, %v871
      %v888 = vpack.c.b16 %v872, %v872
      %v889 = vpack.c.b16 %v873, %v873
      %v890 = vpack.c.b16 %v874, %v874
      %v891 = vpack.c.b16 %v875, %v875
      %v892 = vpack.c.b16 %v876, %v876
      %vm893 = vsmask.f32 7424
      %v895 = vshrl.u32 %v829, 16
      %v897 = vshll.u32 %v829, 16
      %v899 = vrot.slane %v897, 1
      %v900 = vor.u32 %v895, %v899
      %v902 = vshll.u32 %v877, 16
      %v904 = vrot.slane %v902, 1
      %v905 = vsel %vm893, %v900, %v904
      %v907 = vshrl.u32 %v830, 16
      %v909 = vshll.u32 %v830, 16
      %v911 = vrot.slane %v909, 1
      %v912 = vor.u32 %v907, %v911
      %v914 = vshll.u32 %v878, 16
      %v916 = vrot.slane %v914, 1
      %v917 = vsel %vm893, %v912, %v916
      %v919 = vshrl.u32 %v831, 16
      %v921 = vshll.u32 %v831, 16
      %v923 = vrot.slane %v921, 1
      %v924 = vor.u32 %v919, %v923
      %v926 = vshll.u32 %v879, 16
      %v928 = vrot.slane %v926, 1
      %v929 = vsel %vm893, %v924, %v928
      %v931 = vshrl.u32 %v832, 16
      %v933 = vshll.u32 %v832, 16
      %v935 = vrot.slane %v933, 1
      %v936 = vor.u32 %v931, %v935
      %v938 = vshll.u32 %v880, 16
      %v940 = vrot.slane %v938, 1
      %v941 = vsel %vm893, %v936, %v940
      %v943 = vshrl.u32 %v833, 16
      %v945 = vshll.u32 %v833, 16
      %v947 = vrot.slane %v945, 1
      %v948 = vor.u32 %v943, %v947
      %v950 = vshll.u32 %v881, 16
      %v952 = vrot.slane %v950, 1
      %v953 = vsel %vm893, %v948, %v952
      %v955 = vshrl.u32 %v834, 16
      %v957 = vshll.u32 %v834, 16
      %v959 = vrot.slane %v957, 1
      %v960 = vor.u32 %v955, %v959
      %v962 = vshll.u32 %v882, 16
      %v964 = vrot.slane %v962, 1
      %v965 = vsel %vm893, %v960, %v964
      %v967 = vshrl.u32 %v835, 16
      %v969 = vshll.u32 %v835, 16
      %v971 = vrot.slane %v969, 1
      %v972 = vor.u32 %v967, %v971
      %v974 = vshll.u32 %v883, 16
      %v976 = vrot.slane %v974, 1
      %v977 = vsel %vm893, %v972, %v976
      %v979 = vshrl.u32 %v836, 16
      %v981 = vshll.u32 %v836, 16
      %v983 = vrot.slane %v981, 1
      %v984 = vor.u32 %v979, %v983
      %v986 = vshll.u32 %v884, 16
      %v988 = vrot.slane %v986, 1
      %v989 = vsel %vm893, %v984, %v988
      %v991 = vshrl.u32 %v837, 16
      %v993 = vshll.u32 %v837, 16
      %v995 = vrot.slane %v993, 1
      %v996 = vor.u32 %v991, %v995
      %v998 = vshll.u32 %v885, 16
      %v1000 = vrot.slane %v998, 1
      %v1001 = vsel %vm893, %v996, %v1000
      %v1003 = vshrl.u32 %v838, 16
      %v1005 = vshll.u32 %v838, 16
      %v1007 = vrot.slane %v1005, 1
      %v1008 = vor.u32 %v1003, %v1007
      %v1010 = vshll.u32 %v886, 16
      %v1012 = vrot.slane %v1010, 1
      %v1013 = vsel %vm893, %v1008, %v1012
      %v1015 = vshrl.u32 %v839, 16
      %v1017 = vshll.u32 %v839, 16
      %v1019 = vrot.slane %v1017, 1
      %v1020 = vor.u32 %v1015, %v1019
      %v1022 = vshll.u32 %v887, 16
      %v1024 = vrot.slane %v1022, 1
      %v1025 = vsel %vm893, %v1020, %v1024
      %v1027 = vshrl.u32 %v840, 16
      %v1029 = vshll.u32 %v840, 16
      %v1031 = vrot.slane %v1029, 1
      %v1032 = vor.u32 %v1027, %v1031
      %v1034 = vshll.u32 %v888, 16
      %v1036 = vrot.slane %v1034, 1
      %v1037 = vsel %vm893, %v1032, %v1036
      %v1039 = vshrl.u32 %v841, 16
      %v1041 = vshll.u32 %v841, 16
      %v1043 = vrot.slane %v1041, 1
      %v1044 = vor.u32 %v1039, %v1043
      %v1046 = vshll.u32 %v889, 16
      %v1048 = vrot.slane %v1046, 1
      %v1049 = vsel %vm893, %v1044, %v1048
      %v1051 = vshrl.u32 %v842, 16
      %v1053 = vshll.u32 %v842, 16
      %v1055 = vrot.slane %v1053, 1
      %v1056 = vor.u32 %v1051, %v1055
      %v1058 = vshll.u32 %v890, 16
      %v1060 = vrot.slane %v1058, 1
      %v1061 = vsel %vm893, %v1056, %v1060
      %v1063 = vshrl.u32 %v843, 16
      %v1065 = vshll.u32 %v843, 16
      %v1067 = vrot.slane %v1065, 1
      %v1068 = vor.u32 %v1063, %v1067
      %v1070 = vshll.u32 %v891, 16
      %v1072 = vrot.slane %v1070, 1
      %v1073 = vsel %vm893, %v1068, %v1072
      %v1075 = vshrl.u32 %v844, 16
      %v1077 = vshll.u32 %v844, 16
      %v1079 = vrot.slane %v1077, 1
      %v1080 = vor.u32 %v1075, %v1079
      %v1082 = vshll.u32 %v892, 16
      %v1084 = vrot.slane %v1082, 1
      %v1085 = vsel %vm893, %v1080, %v1084
      %1086 = vrot.lane.b32.xlu0 %v905, 4
      %v1087 = vpop.permute.xlu0 %1086
      %1088 = vrot.lane.b32.xlu0 %v917, 4
      %v1089 = vpop.permute.xlu0 %1088
      %1090 = vrot.lane.b32.xlu0 %v929, 4
      %v1091 = vpop.permute.xlu0 %1090
      %1092 = vrot.lane.b32.xlu0 %v941, 4
      %v1093 = vpop.permute.xlu0 %1092
      %1094 = vrot.lane.b32.xlu0 %v953, 4
      %v1095 = vpop.permute.xlu0 %1094
      %1096 = vrot.lane.b32.xlu0 %v965, 4
      %v1097 = vpop.permute.xlu0 %1096
      %1098 = vrot.lane.b32.xlu0 %v977, 4
      %v1099 = vpop.permute.xlu0 %1098
      %1100 = vrot.lane.b32.xlu0 %v989, 4
      %v1101 = vpop.permute.xlu0 %1100
      %1102 = vrot.lane.b32.xlu0 %v1001, 4
      %v1103 = vpop.permute.xlu0 %1102
      %1104 = vrot.lane.b32.xlu0 %v1013, 4
      %v1105 = vpop.permute.xlu0 %1104
      %1106 = vrot.lane.b32.xlu0 %v1025, 4
      %v1107 = vpop.permute.xlu0 %1106
      %1108 = vrot.lane.b32.xlu0 %v1037, 4
      %v1109 = vpop.permute.xlu0 %1108
      %1110 = vrot.lane.b32.xlu0 %v1049, 4
      %v1111 = vpop.permute.xlu0 %1110
      %1112 = vrot.lane.b32.xlu0 %v1061, 4
      %v1113 = vpop.permute.xlu0 %1112
      %1114 = vrot.lane.b32.xlu0 %v1073, 4
      %v1115 = vpop.permute.xlu0 %1114
      %1116 = vrot.lane.b32.xlu0 %v1085, 4
      %v1117 = vpop.permute.xlu0 %1116
      %v1134 = vunpack.c.l.b16 %v749
      %v1135 = vunpack.c.l.b16 %v750
      %v1136 = vunpack.c.l.b16 %v751
      %v1137 = vunpack.c.l.b16 %v752
      %v1138 = vunpack.c.l.b16 %v753
      %v1139 = vunpack.c.l.b16 %v754
      %v1140 = vunpack.c.l.b16 %v755
      %v1141 = vunpack.c.l.b16 %v756
      %v1142 = vunpack.c.l.b16 %v757
      %v1143 = vunpack.c.l.b16 %v758
      %v1144 = vunpack.c.l.b16 %v759
      %v1145 = vunpack.c.l.b16 %v760
      %v1146 = vunpack.c.l.b16 %v761
      %v1147 = vunpack.c.l.b16 %v762
      %v1148 = vunpack.c.l.b16 %v763
      %v1149 = vunpack.c.l.b16 %v764
      %v1150 = vpack.c.b16 %v798, %v1134
      %v1151 = vpack.c.b16 %v800, %v1135
      %v1152 = vpack.c.b16 %v802, %v1136
      %v1153 = vpack.c.b16 %v804, %v1137
      %v1154 = vpack.c.b16 %v806, %v1138
      %v1155 = vpack.c.b16 %v808, %v1139
      %v1156 = vpack.c.b16 %v810, %v1140
      %v1157 = vpack.c.b16 %v812, %v1141
      %v1158 = vpack.c.b16 %v814, %v1142
      %v1159 = vpack.c.b16 %v816, %v1143
      %v1160 = vpack.c.b16 %v818, %v1144
      %v1161 = vpack.c.b16 %v820, %v1145
      %v1162 = vpack.c.b16 %v822, %v1146
      %v1163 = vpack.c.b16 %v824, %v1147
      %v1164 = vpack.c.b16 %v826, %v1148
      %v1165 = vpack.c.b16 %v828, %v1149
      %vm1166 = vcmask 1046528
      %v1167 = vrot.slane %v1150, 1
      %v1168 = vrot.slane %v877, 1
      %v1169 = vsel %vm1166, %v1167, %v1168
      %v1170 = vrot.slane %v1151, 1
      %v1171 = vrot.slane %v878, 1
      %v1172 = vsel %vm1166, %v1170, %v1171
      %v1173 = vrot.slane %v1152, 1
      %v1174 = vrot.slane %v879, 1
      %v1175 = vsel %vm1166, %v1173, %v1174
      %v1176 = vrot.slane %v1153, 1
      %v1177 = vrot.slane %v880, 1
      %v1178 = vsel %vm1166, %v1176, %v1177
      %v1179 = vrot.slane %v1154, 1
      %v1180 = vrot.slane %v881, 1
      %v1181 = vsel %vm1166, %v1179, %v1180
      %v1182 = vrot.slane %v1155, 1
      %v1183 = vrot.slane %v882, 1
      %v1184 = vsel %vm1166, %v1182, %v1183
      %v1185 = vrot.slane %v1156, 1
      %v1186 = vrot.slane %v883, 1
      %v1187 = vsel %vm1166, %v1185, %v1186
      %v1188 = vrot.slane %v1157, 1
      %v1189 = vrot.slane %v884, 1
      %v1190 = vsel %vm1166, %v1188, %v1189
      %v1191 = vrot.slane %v1158, 1
      %v1192 = vrot.slane %v885, 1
      %v1193 = vsel %vm1166, %v1191, %v1192
      %v1194 = vrot.slane %v1159, 1
      %v1195 = vrot.slane %v886, 1
      %v1196 = vsel %vm1166, %v1194, %v1195
      %v1197 = vrot.slane %v1160, 1
      %v1198 = vrot.slane %v887, 1
      %v1199 = vsel %vm1166, %v1197, %v1198
      %v1200 = vrot.slane %v1161, 1
      %v1201 = vrot.slane %v888, 1
      %v1202 = vsel %vm1166, %v1200, %v1201
      %v1203 = vrot.slane %v1162, 1
      %v1204 = vrot.slane %v889, 1
      %v1205 = vsel %vm1166, %v1203, %v1204
      %v1206 = vrot.slane %v1163, 1
      %v1207 = vrot.slane %v890, 1
      %v1208 = vsel %vm1166, %v1206, %v1207
      %v1209 = vrot.slane %v1164, 1
      %v1210 = vrot.slane %v891, 1
      %v1211 = vsel %vm1166, %v1209, %v1210
      %v1212 = vrot.slane %v1165, 1
      %v1213 = vrot.slane %v892, 1
      %v1214 = vsel %vm1166, %v1212, %v1213
      %1215 = vrot.lane.b32.xlu0 %v1169, 8
      %v1216 = vpop.permute.xlu0 %1215
      %1217 = vrot.lane.b32.xlu0 %v1172, 8
      %v1218 = vpop.permute.xlu0 %1217
      %1219 = vrot.lane.b32.xlu0 %v1175, 8
      %v1220 = vpop.permute.xlu0 %1219
      %1221 = vrot.lane.b32.xlu0 %v1178, 8
      %v1222 = vpop.permute.xlu0 %1221
      %1223 = vrot.lane.b32.xlu0 %v1181, 8
      %v1224 = vpop.permute.xlu0 %1223
      %1225 = vrot.lane.b32.xlu0 %v1184, 8
      %v1226 = vpop.permute.xlu0 %1225
      %1227 = vrot.lane.b32.xlu0 %v1187, 8
      %v1228 = vpop.permute.xlu0 %1227
      %1229 = vrot.lane.b32.xlu0 %v1190, 8
      %v1230 = vpop.permute.xlu0 %1229
      %1231 = vrot.lane.b32.xlu0 %v1193, 8
      %v1232 = vpop.permute.xlu0 %1231
      %1233 = vrot.lane.b32.xlu0 %v1196, 8
      %v1234 = vpop.permute.xlu0 %1233
      %1235 = vrot.lane.b32.xlu0 %v1199, 8
      %v1236 = vpop.permute.xlu0 %1235
      %1237 = vrot.lane.b32.xlu0 %v1202, 8
      %v1238 = vpop.permute.xlu0 %1237
      %1239 = vrot.lane.b32.xlu0 %v1205, 8
      %v1240 = vpop.permute.xlu0 %1239
      %1241 = vrot.lane.b32.xlu0 %v1208, 8
      %v1242 = vpop.permute.xlu0 %1241
      %1243 = vrot.lane.b32.xlu0 %v1211, 8
      %v1244 = vpop.permute.xlu0 %1243
      %1245 = vrot.lane.b32.xlu0 %v1214, 8
      %v1246 = vpop.permute.xlu0 %1245
      %vm1247 = vcmask 31744
      %v1249 = vsel %vm1247, %v829, %v1087
      %v1251 = vsel %vm1247, %v830, %v1089
      %v1253 = vsel %vm1247, %v831, %v1091
      %v1255 = vsel %vm1247, %v832, %v1093
      %v1257 = vsel %vm1247, %v833, %v1095
      %v1259 = vsel %vm1247, %v834, %v1097
      %v1261 = vsel %vm1247, %v835, %v1099
      %v1263 = vsel %vm1247, %v836, %v1101
      %v1265 = vsel %vm1247, %v837, %v1103
      %v1267 = vsel %vm1247, %v838, %v1105
      %v1269 = vsel %vm1247, %v839, %v1107
      %v1271 = vsel %vm1247, %v840, %v1109
      %v1273 = vsel %vm1247, %v841, %v1111
      %v1275 = vsel %vm1247, %v842, %v1113
      %v1277 = vsel %vm1247, %v843, %v1115
      %v1279 = vsel %vm1247, %v844, %v1117
      %vm1280 = vcmask 64512
      %v1282 = vsel %vm1280, %v1249, %v1216
      %v1284 = vsel %vm1280, %v1251, %v1218
      %v1286 = vsel %vm1280, %v1253, %v1220
      %v1288 = vsel %vm1280, %v1255, %v1222
      %v1290 = vsel %vm1280, %v1257, %v1224
      %v1292 = vsel %vm1280, %v1259, %v1226
      %v1294 = vsel %vm1280, %v1261, %v1228
      %v1296 = vsel %vm1280, %v1263, %v1230
      %v1298 = vsel %vm1280, %v1265, %v1232
      %v1300 = vsel %vm1280, %v1267, %v1234
      %v1302 = vsel %vm1280, %v1269, %v1236
      %v1304 = vsel %vm1280, %v1271, %v1238
      %v1306 = vsel %vm1280, %v1273, %v1240
      %v1308 = vsel %vm1280, %v1275, %v1242
      %v1310 = vsel %vm1280, %v1277, %v1244
      %v1312 = vsel %vm1280, %v1279, %v1246
      %v1313 = vld [vmem:[%s1] sm:$0xf]
      %v1314 = vld [vmem:[%s1 + $0x4] sm:$0x3]
      %v1315 = vld [vmem:[%s583] sm:$0xf]
      %v1316 = vld [vmem:[%s583 + $0x4] sm:$0xf]
      %v1317 = vld [vmem:[%s583 + $0xc] sm:$0xf]
      %v1318 = vld [vmem:[%s583 + $0x10] sm:$0xf]
      %v1319 = vld [vmem:[%s583 + $0x18] sm:$0xf]
      %v1320 = vld [vmem:[%s583 + $0x1c] sm:$0xf]
      %v1321 = vld [vmem:[%s583 + $0x24] sm:$0xf]
      %v1322 = vld [vmem:[%s583 + $0x28] sm:$0xf]
      %v1323 = vld [vmem:[%s583 + $0x30] sm:$0xf]
      %v1324 = vld [vmem:[%s583 + $0x34] sm:$0xf]
      %v1325 = vld [vmem:[%s583 + $0x3c] sm:$0xf]
      %v1326 = vld [vmem:[%s583 + $0x40] sm:$0xf]
      %v1327 = vld [vmem:[%s583 + $0x48] sm:$0xf]
      %v1328 = vld [vmem:[%s583 + $0x4c] sm:$0xf]
      %v1329 = vld [vmem:[%s583 + $0x54] sm:$0xf]
      %v1330 = vld [vmem:[%s583 + $0x58] sm:$0xf]
      %v1331 = vld [vmem:[%s583 + $0x60] sm:$0xf]
      %v1332 = vld [vmem:[%s583 + $0x64] sm:$0xf]
      %v1333 = vld [vmem:[%s583 + $0x6c] sm:$0xf]
      %v1334 = vld [vmem:[%s583 + $0x70] sm:$0xf]
      %v1335 = vld [vmem:[%s583 + $0x78] sm:$0xf]
      %v1336 = vld [vmem:[%s583 + $0x7c] sm:$0xf]
      %v1337 = vld [vmem:[%s583 + $0x84] sm:$0xf]
      %v1338 = vld [vmem:[%s583 + $0x88] sm:$0xf]
      %v1339 = vld [vmem:[%s583 + $0x90] sm:$0xf]
      %v1340 = vld [vmem:[%s583 + $0x94] sm:$0xf]
      %v1341 = vld [vmem:[%s583 + $0x9c] sm:$0xf]
      %v1342 = vld [vmem:[%s583 + $0xa0] sm:$0xf]
      %v1343 = vld [vmem:[%s583 + $0xa8] sm:$0xf]
      %v1344 = vld [vmem:[%s583 + $0xac] sm:$0xf]
      %v1345 = vld [vmem:[%s583 + $0xb4] sm:$0xf]
      %v1346 = vld [vmem:[%s583 + $0xb8] sm:$0xf]
      %v1347 = vld [vmem:[%s583 + $0x8] sm:$0x1]
      %v1348 = vld [vmem:[%s583 + $0x14] sm:$0x1]
      %v1349 = vld [vmem:[%s583 + $0x20] sm:$0x1]
      %v1350 = vld [vmem:[%s583 + $0x2c] sm:$0x1]
      %v1351 = vld [vmem:[%s583 + $0x38] sm:$0x1]
      %v1352 = vld [vmem:[%s583 + $0x44] sm:$0x1]
      %v1353 = vld [vmem:[%s583 + $0x50] sm:$0x1]
      %v1354 = vld [vmem:[%s583 + $0x5c] sm:$0x1]
      %v1355 = vld [vmem:[%s583 + $0x68] sm:$0x1]
      %v1356 = vld [vmem:[%s583 + $0x74] sm:$0x1]
      %v1357 = vld [vmem:[%s583 + $0x80] sm:$0x1]
      %v1358 = vld [vmem:[%s583 + $0x8c] sm:$0x1]
      %v1359 = vld [vmem:[%s583 + $0x98] sm:$0x1]
      %v1360 = vld [vmem:[%s583 + $0xa4] sm:$0x1]
      %v1361 = vld [vmem:[%s583 + $0xb0] sm:$0x1]
      %v1362 = vld [vmem:[%s583 + $0xbc] sm:$0x1]
      %v1363 = vld [vmem:[%s583] sm:$0xe]
      %v1364 = vld [vmem:[%s583 + $0xc] sm:$0xe]
      %v1365 = vld [vmem:[%s583 + $0x18] sm:$0xe]
      %v1366 = vld [vmem:[%s583 + $0x24] sm:$0xe]
      %v1367 = vld [vmem:[%s583 + $0x30] sm:$0xe]
      %v1368 = vld [vmem:[%s583 + $0x3c] sm:$0xe]
      %v1369 = vld [vmem:[%s583 + $0x48] sm:$0xe]
      %v1370 = vld [vmem:[%s583 + $0x54] sm:$0xe]
      %v1371 = vld [vmem:[%s583 + $0x60] sm:$0xe]
      %v1372 = vld [vmem:[%s583 + $0x6c] sm:$0xe]
      %v1373 = vld [vmem:[%s583 + $0x78] sm:$0xe]
      %v1374 = vld [vmem:[%s583 + $0x84] sm:$0xe]
      %v1375 = vld [vmem:[%s583 + $0x90] sm:$0xe]
      %v1376 = vld [vmem:[%s583 + $0x9c] sm:$0xe]
      %v1377 = vld [vmem:[%s583 + $0xa8] sm:$0xe]
      %v1378 = vld [vmem:[%s583 + $0xb4] sm:$0xe]
      %v1411 = vunpack.c.l.b16 %v1315
      %v1412 = vunpack.c.l.b16 %v1316
      %v1413 = vunpack.c.l.b16 %v1317
      %v1414 = vunpack.c.l.b16 %v1318
      %v1415 = vunpack.c.l.b16 %v1319
      %v1416 = vunpack.c.l.b16 %v1320
      %v1417 = vunpack.c.l.b16 %v1321
      %v1418 = vunpack.c.l.b16 %v1322
      %v1419 = vunpack.c.l.b16 %v1323
      %v1420 = vunpack.c.l.b16 %v1324
      %v1421 = vunpack.c.l.b16 %v1325
      %v1422 = vunpack.c.l.b16 %v1326
      %v1423 = vunpack.c.l.b16 %v1327
      %v1424 = vunpack.c.l.b16 %v1328
      %v1425 = vunpack.c.l.b16 %v1329
      %v1426 = vunpack.c.l.b16 %v1330
      %v1427 = vunpack.c.l.b16 %v1331
      %v1428 = vunpack.c.l.b16 %v1332
      %v1429 = vunpack.c.l.b16 %v1333
      %v1430 = vunpack.c.l.b16 %v1334
      %v1431 = vunpack.c.l.b16 %v1335
      %v1432 = vunpack.c.l.b16 %v1336
      %v1433 = vunpack.c.l.b16 %v1337
      %v1434 = vunpack.c.l.b16 %v1338
      %v1435 = vunpack.c.l.b16 %v1339
      %v1436 = vunpack.c.l.b16 %v1340
      %v1437 = vunpack.c.l.b16 %v1341
      %v1438 = vunpack.c.l.b16 %v1342
      %v1439 = vunpack.c.l.b16 %v1343
      %v1440 = vunpack.c.l.b16 %v1344
      %v1441 = vunpack.c.l.b16 %v1345
      %v1442 = vunpack.c.l.b16 %v1346
      %v1443 = vpack.c.b16 %v1412, %v1411
      %v1444 = vpack.c.b16 %v1414, %v1413
      %v1445 = vpack.c.b16 %v1416, %v1415
      %v1446 = vpack.c.b16 %v1418, %v1417
      %v1447 = vpack.c.b16 %v1420, %v1419
      %v1448 = vpack.c.b16 %v1422, %v1421
      %v1449 = vpack.c.b16 %v1424, %v1423
      %v1450 = vpack.c.b16 %v1426, %v1425
      %v1451 = vpack.c.b16 %v1428, %v1427
      %v1452 = vpack.c.b16 %v1430, %v1429
      %v1453 = vpack.c.b16 %v1432, %v1431
      %v1454 = vpack.c.b16 %v1434, %v1433
      %v1455 = vpack.c.b16 %v1436, %v1435
      %v1456 = vpack.c.b16 %v1438, %v1437
      %v1457 = vpack.c.b16 %v1440, %v1439
      %v1458 = vpack.c.b16 %v1442, %v1441
      %v1475 = vunpack.c.l.b16 %v1347
      %v1476 = vunpack.c.l.b16 %v1348
      %v1477 = vunpack.c.l.b16 %v1349
      %v1478 = vunpack.c.l.b16 %v1350
      %v1479 = vunpack.c.l.b16 %v1351
      %v1480 = vunpack.c.l.b16 %v1352
      %v1481 = vunpack.c.l.b16 %v1353
      %v1482 = vunpack.c.l.b16 %v1354
      %v1483 = vunpack.c.l.b16 %v1355
      %v1484 = vunpack.c.l.b16 %v1356
      %v1485 = vunpack.c.l.b16 %v1357
      %v1486 = vunpack.c.l.b16 %v1358
      %v1487 = vunpack.c.l.b16 %v1359
      %v1488 = vunpack.c.l.b16 %v1360
      %v1489 = vunpack.c.l.b16 %v1361
      %v1490 = vunpack.c.l.b16 %v1362
      %v1491 = vpack.c.b16 %v1475, %v1475
      %v1492 = vpack.c.b16 %v1476, %v1476
      %v1493 = vpack.c.b16 %v1477, %v1477
      %v1494 = vpack.c.b16 %v1478, %v1478
      %v1495 = vpack.c.b16 %v1479, %v1479
      %v1496 = vpack.c.b16 %v1480, %v1480
      %v1497 = vpack.c.b16 %v1481, %v1481
      %v1498 = vpack.c.b16 %v1482, %v1482
      %v1499 = vpack.c.b16 %v1483, %v1483
      %v1500 = vpack.c.b16 %v1484, %v1484
      %v1501 = vpack.c.b16 %v1485, %v1485
      %v1502 = vpack.c.b16 %v1486, %v1486
      %v1503 = vpack.c.b16 %v1487, %v1487
      %v1504 = vpack.c.b16 %v1488, %v1488
      %v1505 = vpack.c.b16 %v1489, %v1489
      %v1506 = vpack.c.b16 %v1490, %v1490
      %v1508 = vshrl.u32 %v1443, 16
      %v1510 = vshll.u32 %v1443, 16
      %v1512 = vrot.slane %v1510, 1
      %v1513 = vor.u32 %v1508, %v1512
      %v1515 = vshll.u32 %v1491, 16
      %v1517 = vrot.slane %v1515, 1
      %v1518 = vsel %vm893, %v1513, %v1517
      %v1520 = vshrl.u32 %v1444, 16
      %v1522 = vshll.u32 %v1444, 16
      %v1524 = vrot.slane %v1522, 1
      %v1525 = vor.u32 %v1520, %v1524
      %v1527 = vshll.u32 %v1492, 16
      %v1529 = vrot.slane %v1527, 1
      %v1530 = vsel %vm893, %v1525, %v1529
      %v1532 = vshrl.u32 %v1445, 16
      %v1534 = vshll.u32 %v1445, 16
      %v1536 = vrot.slane %v1534, 1
      %v1537 = vor.u32 %v1532, %v1536
      %v1539 = vshll.u32 %v1493, 16
      %v1541 = vrot.slane %v1539, 1
      %v1542 = vsel %vm893, %v1537, %v1541
      %v1544 = vshrl.u32 %v1446, 16
      %v1546 = vshll.u32 %v1446, 16
      %v1548 = vrot.slane %v1546, 1
      %v1549 = vor.u32 %v1544, %v1548
      %v1551 = vshll.u32 %v1494, 16
      %v1553 = vrot.slane %v1551, 1
      %v1554 = vsel %vm893, %v1549, %v1553
      %v1556 = vshrl.u32 %v1447, 16
      %v1558 = vshll.u32 %v1447, 16
      %v1560 = vrot.slane %v1558, 1
      %v1561 = vor.u32 %v1556, %v1560
      %v1563 = vshll.u32 %v1495, 16
      %v1565 = vrot.slane %v1563, 1
      %v1566 = vsel %vm893, %v1561, %v1565
      %v1568 = vshrl.u32 %v1448, 16
      %v1570 = vshll.u32 %v1448, 16
      %v1572 = vrot.slane %v1570, 1
      %v1573 = vor.u32 %v1568, %v1572
      %v1575 = vshll.u32 %v1496, 16
      %v1577 = vrot.slane %v1575, 1
      %v1578 = vsel %vm893, %v1573, %v1577
      %v1580 = vshrl.u32 %v1449, 16
      %v1582 = vshll.u32 %v1449, 16
      %v1584 = vrot.slane %v1582, 1
      %v1585 = vor.u32 %v1580, %v1584
      %v1587 = vshll.u32 %v1497, 16
      %v1589 = vrot.slane %v1587, 1
      %v1590 = vsel %vm893, %v1585, %v1589
      %v1592 = vshrl.u32 %v1450, 16
      %v1594 = vshll.u32 %v1450, 16
      %v1596 = vrot.slane %v1594, 1
      %v1597 = vor.u32 %v1592, %v1596
      %v1599 = vshll.u32 %v1498, 16
      %v1601 = vrot.slane %v1599, 1
      %v1602 = vsel %vm893, %v1597, %v1601
      %v1604 = vshrl.u32 %v1451, 16
      %v1606 = vshll.u32 %v1451, 16
      %v1608 = vrot.slane %v1606, 1
      %v1609 = vor.u32 %v1604, %v1608
      %v1611 = vshll.u32 %v1499, 16
      %v1613 = vrot.slane %v1611, 1
      %v1614 = vsel %vm893, %v1609, %v1613
      %v1616 = vshrl.u32 %v1452, 16
      %v1618 = vshll.u32 %v1452, 16
      %v1620 = vrot.slane %v1618, 1
      %v1621 = vor.u32 %v1616, %v1620
      %v1623 = vshll.u32 %v1500, 16
      %v1625 = vrot.slane %v1623, 1
      %v1626 = vsel %vm893, %v1621, %v1625
      %v1628 = vshrl.u32 %v1453, 16
      %v1630 = vshll.u32 %v1453, 16
      %v1632 = vrot.slane %v1630, 1
      %v1633 = vor.u32 %v1628, %v1632
      %v1635 = vshll.u32 %v1501, 16
      %v1637 = vrot.slane %v1635, 1
      %v1638 = vsel %vm893, %v1633, %v1637
      %v1640 = vshrl.u32 %v1454, 16
      %v1642 = vshll.u32 %v1454, 16
      %v1644 = vrot.slane %v1642, 1
      %v1645 = vor.u32 %v1640, %v1644
      %v1647 = vshll.u32 %v1502, 16
      %v1649 = vrot.slane %v1647, 1
      %v1650 = vsel %vm893, %v1645, %v1649
      %v1652 = vshrl.u32 %v1455, 16
      %v1654 = vshll.u32 %v1455, 16
      %v1656 = vrot.slane %v1654, 1
      %v1657 = vor.u32 %v1652, %v1656
      %v1659 = vshll.u32 %v1503, 16
      %v1661 = vrot.slane %v1659, 1
      %v1662 = vsel %vm893, %v1657, %v1661
      %v1664 = vshrl.u32 %v1456, 16
      %v1666 = vshll.u32 %v1456, 16
      %v1668 = vrot.slane %v1666, 1
      %v1669 = vor.u32 %v1664, %v1668
      %v1671 = vshll.u32 %v1504, 16
      %v1673 = vrot.slane %v1671, 1
      %v1674 = vsel %vm893, %v1669, %v1673
      %v1676 = vshrl.u32 %v1457, 16
      %v1678 = vshll.u32 %v1457, 16
      %v1680 = vrot.slane %v1678, 1
      %v1681 = vor.u32 %v1676, %v1680
      %v1683 = vshll.u32 %v1505, 16
      %v1685 = vrot.slane %v1683, 1
      %v1686 = vsel %vm893, %v1681, %v1685
      %v1688 = vshrl.u32 %v1458, 16
      %v1690 = vshll.u32 %v1458, 16
      %v1692 = vrot.slane %v1690, 1
      %v1693 = vor.u32 %v1688, %v1692
      %v1695 = vshll.u32 %v1506, 16
      %v1697 = vrot.slane %v1695, 1
      %v1698 = vsel %vm893, %v1693, %v1697
      %1699 = vrot.lane.b32.xlu0 %v1518, 4
      %v1700 = vpop.permute.xlu0 %1699
      %1701 = vrot.lane.b32.xlu0 %v1530, 4
      %v1702 = vpop.permute.xlu0 %1701
      %1703 = vrot.lane.b32.xlu0 %v1542, 4
      %v1704 = vpop.permute.xlu0 %1703
      %1705 = vrot.lane.b32.xlu0 %v1554, 4
      %v1706 = vpop.permute.xlu0 %1705
      %1707 = vrot.lane.b32.xlu0 %v1566, 4
      %v1708 = vpop.permute.xlu0 %1707
      %1709 = vrot.lane.b32.xlu0 %v1578, 4
      %v1710 = vpop.permute.xlu0 %1709
      %1711 = vrot.lane.b32.xlu0 %v1590, 4
      %v1712 = vpop.permute.xlu0 %1711
      %1713 = vrot.lane.b32.xlu0 %v1602, 4
      %v1714 = vpop.permute.xlu0 %1713
      %1715 = vrot.lane.b32.xlu0 %v1614, 4
      %v1716 = vpop.permute.xlu0 %1715
      %1717 = vrot.lane.b32.xlu0 %v1626, 4
      %v1718 = vpop.permute.xlu0 %1717
      %1719 = vrot.lane.b32.xlu0 %v1638, 4
      %v1720 = vpop.permute.xlu0 %1719
      %1721 = vrot.lane.b32.xlu0 %v1650, 4
      %v1722 = vpop.permute.xlu0 %1721
      %1723 = vrot.lane.b32.xlu0 %v1662, 4
      %v1724 = vpop.permute.xlu0 %1723
      %1725 = vrot.lane.b32.xlu0 %v1674, 4
      %v1726 = vpop.permute.xlu0 %1725
      %1727 = vrot.lane.b32.xlu0 %v1686, 4
      %v1728 = vpop.permute.xlu0 %1727
      %1729 = vrot.lane.b32.xlu0 %v1698, 4
      %v1730 = vpop.permute.xlu0 %1729
      %v1747 = vunpack.c.l.b16 %v1363
      %v1748 = vunpack.c.l.b16 %v1364
      %v1749 = vunpack.c.l.b16 %v1365
      %v1750 = vunpack.c.l.b16 %v1366
      %v1751 = vunpack.c.l.b16 %v1367
      %v1752 = vunpack.c.l.b16 %v1368
      %v1753 = vunpack.c.l.b16 %v1369
      %v1754 = vunpack.c.l.b16 %v1370
      %v1755 = vunpack.c.l.b16 %v1371
      %v1756 = vunpack.c.l.b16 %v1372
      %v1757 = vunpack.c.l.b16 %v1373
      %v1758 = vunpack.c.l.b16 %v1374
      %v1759 = vunpack.c.l.b16 %v1375
      %v1760 = vunpack.c.l.b16 %v1376
      %v1761 = vunpack.c.l.b16 %v1377
      %v1762 = vunpack.c.l.b16 %v1378
      %v1763 = vpack.c.b16 %v1412, %v1747
      %v1764 = vpack.c.b16 %v1414, %v1748
      %v1765 = vpack.c.b16 %v1416, %v1749
      %v1766 = vpack.c.b16 %v1418, %v1750
      %v1767 = vpack.c.b16 %v1420, %v1751
      %v1768 = vpack.c.b16 %v1422, %v1752
      %v1769 = vpack.c.b16 %v1424, %v1753
      %v1770 = vpack.c.b16 %v1426, %v1754
      %v1771 = vpack.c.b16 %v1428, %v1755
      %v1772 = vpack.c.b16 %v1430, %v1756
      %v1773 = vpack.c.b16 %v1432, %v1757
      %v1774 = vpack.c.b16 %v1434, %v1758
      %v1775 = vpack.c.b16 %v1436, %v1759
      %v1776 = vpack.c.b16 %v1438, %v1760
      %v1777 = vpack.c.b16 %v1440, %v1761
      %v1778 = vpack.c.b16 %v1442, %v1762
      %v1779 = vrot.slane %v1763, 1
      %v1780 = vrot.slane %v1491, 1
      %v1781 = vsel %vm1166, %v1779, %v1780
      %v1782 = vrot.slane %v1764, 1
      %v1783 = vrot.slane %v1492, 1
      %v1784 = vsel %vm1166, %v1782, %v1783
      %v1785 = vrot.slane %v1765, 1
      %v1786 = vrot.slane %v1493, 1
      %v1787 = vsel %vm1166, %v1785, %v1786
      %v1788 = vrot.slane %v1766, 1
      %v1789 = vrot.slane %v1494, 1
      %v1790 = vsel %vm1166, %v1788, %v1789
      %v1791 = vrot.slane %v1767, 1
      %v1792 = vrot.slane %v1495, 1
      %v1793 = vsel %vm1166, %v1791, %v1792
      %v1794 = vrot.slane %v1768, 1
      %v1795 = vrot.slane %v1496, 1
      %v1796 = vsel %vm1166, %v1794, %v1795
      %v1797 = vrot.slane %v1769, 1
      %v1798 = vrot.slane %v1497, 1
      %v1799 = vsel %vm1166, %v1797, %v1798
      %v1800 = vrot.slane %v1770, 1
      %v1801 = vrot.slane %v1498, 1
      %v1802 = vsel %vm1166, %v1800, %v1801
      %v1803 = vrot.slane %v1771, 1
      %v1804 = vrot.slane %v1499, 1
      %v1805 = vsel %vm1166, %v1803, %v1804
      %v1806 = vrot.slane %v1772, 1
      %v1807 = vrot.slane %v1500, 1
      %v1808 = vsel %vm1166, %v1806, %v1807
      %v1809 = vrot.slane %v1773, 1
      %v1810 = vrot.slane %v1501, 1
      %v1811 = vsel %vm1166, %v1809, %v1810
      %v1812 = vrot.slane %v1774, 1
      %v1813 = vrot.slane %v1502, 1
      %v1814 = vsel %vm1166, %v1812, %v1813
      %v1815 = vrot.slane %v1775, 1
      %v1816 = vrot.slane %v1503, 1
      %v1817 = vsel %vm1166, %v1815, %v1816
      %v1818 = vrot.slane %v1776, 1
      %v1819 = vrot.slane %v1504, 1
      %v1820 = vsel %vm1166, %v1818, %v1819
      %v1821 = vrot.slane %v1777, 1
      %v1822 = vrot.slane %v1505, 1
      %v1823 = vsel %vm1166, %v1821, %v1822
      %v1824 = vrot.slane %v1778, 1
      %v1825 = vrot.slane %v1506, 1
      %v1826 = vsel %vm1166, %v1824, %v1825
      %1827 = vrot.lane.b32.xlu0 %v1781, 8
      %v1828 = vpop.permute.xlu0 %1827
      %1829 = vrot.lane.b32.xlu0 %v1784, 8
      %v1830 = vpop.permute.xlu0 %1829
      %1831 = vrot.lane.b32.xlu0 %v1787, 8
      %v1832 = vpop.permute.xlu0 %1831
      %1833 = vrot.lane.b32.xlu0 %v1790, 8
      %v1834 = vpop.permute.xlu0 %1833
      %1835 = vrot.lane.b32.xlu0 %v1793, 8
      %v1836 = vpop.permute.xlu0 %1835
      %1837 = vrot.lane.b32.xlu0 %v1796, 8
      %v1838 = vpop.permute.xlu0 %1837
      %1839 = vrot.lane.b32.xlu0 %v1799, 8
      %v1840 = vpop.permute.xlu0 %1839
      %1841 = vrot.lane.b32.xlu0 %v1802, 8
      %v1842 = vpop.permute.xlu0 %1841
      %1843 = vrot.lane.b32.xlu0 %v1805, 8
      %v1844 = vpop.permute.xlu0 %1843
      %1845 = vrot.lane.b32.xlu0 %v1808, 8
      %v1846 = vpop.permute.xlu0 %1845
      %1847 = vrot.lane.b32.xlu0 %v1811, 8
      %v1848 = vpop.permute.xlu0 %1847
      %1849 = vrot.lane.b32.xlu0 %v1814, 8
      %v1850 = vpop.permute.xlu0 %1849
      %1851 = vrot.lane.b32.xlu0 %v1817, 8
      %v1852 = vpop.permute.xlu0 %1851
      %1853 = vrot.lane.b32.xlu0 %v1820, 8
      %v1854 = vpop.permute.xlu0 %1853
      %1855 = vrot.lane.b32.xlu0 %v1823, 8
      %v1856 = vpop.permute.xlu0 %1855
      %1857 = vrot.lane.b32.xlu0 %v1826, 8
      %v1858 = vpop.permute.xlu0 %1857
      %v1860 = vsel %vm1247, %v1443, %v1700
      %v1862 = vsel %vm1247, %v1444, %v1702
      %v1864 = vsel %vm1247, %v1445, %v1704
      %v1866 = vsel %vm1247, %v1446, %v1706
      %v1868 = vsel %vm1247, %v1447, %v1708
      %v1870 = vsel %vm1247, %v1448, %v1710
      %v1872 = vsel %vm1247, %v1449, %v1712
      %v1874 = vsel %vm1247, %v1450, %v1714
      %v1876 = vsel %vm1247, %v1451, %v1716
      %v1878 = vsel %vm1247, %v1452, %v1718
      %v1880 = vsel %vm1247, %v1453, %v1720
      %v1882 = vsel %vm1247, %v1454, %v1722
      %v1884 = vsel %vm1247, %v1455, %v1724
      %v1886 = vsel %vm1247, %v1456, %v1726
      %v1888 = vsel %vm1247, %v1457, %v1728
      %v1890 = vsel %vm1247, %v1458, %v1730
      %v1892 = vsel %vm1280, %v1860, %v1828
      %v1894 = vsel %vm1280, %v1862, %v1830
      %v1896 = vsel %vm1280, %v1864, %v1832
      %v1898 = vsel %vm1280, %v1866, %v1834
      %v1900 = vsel %vm1280, %v1868, %v1836
      %v1902 = vsel %vm1280, %v1870, %v1838
      %v1904 = vsel %vm1280, %v1872, %v1840
      %v1906 = vsel %vm1280, %v1874, %v1842
      %v1908 = vsel %vm1280, %v1876, %v1844
      %v1910 = vsel %vm1280, %v1878, %v1846
      %v1912 = vsel %vm1280, %v1880, %v1848
      %v1914 = vsel %vm1280, %v1882, %v1850
      %v1916 = vsel %vm1280, %v1884, %v1852
      %v1918 = vsel %vm1280, %v1886, %v1854
      %v1920 = vsel %vm1280, %v1888, %v1856
      %v1922 = vsel %vm1280, %v1890, %v1858
      %s1923 = scalar_lea.vmem %s1, 8
      %v1924 = vld [vmem:[%s1923] sm:$0xf]
      %v1925 = vld [vmem:[%s1923 + $0x4] sm:$0x3]
      %v1928 = vunpack.c.l.b16 %v1924
      %v1929 = vunpack.c.l.b16 %v1925
      %v1930 = vpack.c.b16 %v1929, %v1928
      %vm1931 = vcmask 97280
      %v1932 = vsel %vm1931, %v1892, 0
      %v1934 = vsel %vm1931, %v1894, 0
      %v1936 = vsel %vm1931, %v1896, 0
      %v1938 = vsel %vm1931, %v1898, 0
      %v1940 = vsel %vm1931, %v1900, 0
      %v1942 = vsel %vm1931, %v1902, 0
      %v1944 = vsel %vm1931, %v1904, 0
      %v1946 = vsel %vm1931, %v1906, 0
      %v1948 = vsel %vm1931, %v1908, 0
      %v1950 = vsel %vm1931, %v1910, 0
      %v1952 = vsel %vm1931, %v1912, 0
      %v1954 = vsel %vm1931, %v1914, 0
      %v1956 = vsel %vm1931, %v1916, 0
      %v1958 = vsel %vm1931, %v1918, 0
      %v1960 = vsel %vm1931, %v1920, 0
      %v1962 = vsel %vm1931, %v1922, 0
      %vm1964 = vcmask 1045504
      %v1966 = vsel %vm1964, %v1930, 0
      %1968 = vmatpush.bf16.msra.mxu0 0
      %1969 = vmatpush.bf16.msra.mxu0 0
      %1970 = vmatpush.bf16.msra.mxu0 0
      %1971 = vmatpush.bf16.msra.mxu0 0
      %1972 = vmatpush.bf16.msra.mxu0 0
      %1973 = vmatpush.bf16.msra.mxu0 0
      %1974 = vmatpush.bf16.msra.mxu0 0
      %1975 = vmatpush.bf16.msra.mxu0 %v1966
      %1976 = vmatmul.bf16.gmra.mxu0 %v1932
      %v1977 = vpop.f32.mrf.mxu0
      %v1978 = vadd.f32 0.0, %v1977
      %v1979 = vpop.f32.mrf.mxu0
      %v1980 = vadd.f32 0.0, %v1979
      %1981 = vmatmul.bf16.gmra.mxu0 %v1934
      %v1982 = vpop.f32.mrf.mxu0
      %v1983 = vadd.f32 0.0, %v1982
      %v1984 = vpop.f32.mrf.mxu0
      %v1985 = vadd.f32 0.0, %v1984
      %1986 = vmatmul.bf16.gmra.mxu0 %v1936
      %v1987 = vpop.f32.mrf.mxu0
      %v1988 = vadd.f32 0.0, %v1987
      %v1989 = vpop.f32.mrf.mxu0
      %v1990 = vadd.f32 0.0, %v1989
      %1991 = vmatmul.bf16.gmra.mxu0 %v1938
      %v1992 = vpop.f32.mrf.mxu0
      %v1993 = vadd.f32 0.0, %v1992
      %v1994 = vpop.f32.mrf.mxu0
      %v1995 = vadd.f32 0.0, %v1994
      %1996 = vmatmul.bf16.gmra.mxu0 %v1940
      %v1997 = vpop.f32.mrf.mxu0
      %v1998 = vadd.f32 0.0, %v1997
      %v1999 = vpop.f32.mrf.mxu0
      %v2000 = vadd.f32 0.0, %v1999
      %2001 = vmatmul.bf16.gmra.mxu0 %v1942
      %v2002 = vpop.f32.mrf.mxu0
      %v2003 = vadd.f32 0.0, %v2002
      %v2004 = vpop.f32.mrf.mxu0
      %v2005 = vadd.f32 0.0, %v2004
      %2006 = vmatmul.bf16.gmra.mxu0 %v1944
      %v2007 = vpop.f32.mrf.mxu0
      %v2008 = vadd.f32 0.0, %v2007
      %v2009 = vpop.f32.mrf.mxu0
      %v2010 = vadd.f32 0.0, %v2009
      %2011 = vmatmul.bf16.gmra.mxu0 %v1946
      %v2012 = vpop.f32.mrf.mxu0
      %v2013 = vadd.f32 0.0, %v2012
      %v2014 = vpop.f32.mrf.mxu0
      %v2015 = vadd.f32 0.0, %v2014
      %2016 = vmatmul.bf16.gmra.mxu0 %v1948
      %v2017 = vpop.f32.mrf.mxu0
      %v2018 = vadd.f32 0.0, %v2017
      %v2019 = vpop.f32.mrf.mxu0
      %v2020 = vadd.f32 0.0, %v2019
      %2021 = vmatmul.bf16.gmra.mxu0 %v1950
      %v2022 = vpop.f32.mrf.mxu0
      %v2023 = vadd.f32 0.0, %v2022
      %v2024 = vpop.f32.mrf.mxu0
      %v2025 = vadd.f32 0.0, %v2024
      %2026 = vmatmul.bf16.gmra.mxu0 %v1952
      %v2027 = vpop.f32.mrf.mxu0
      %v2028 = vadd.f32 0.0, %v2027
      %v2029 = vpop.f32.mrf.mxu0
      %v2030 = vadd.f32 0.0, %v2029
      %2031 = vmatmul.bf16.gmra.mxu0 %v1954
      %v2032 = vpop.f32.mrf.mxu0
      %v2033 = vadd.f32 0.0, %v2032
      %v2034 = vpop.f32.mrf.mxu0
      %v2035 = vadd.f32 0.0, %v2034
      %2036 = vmatmul.bf16.gmra.mxu0 %v1956
      %v2037 = vpop.f32.mrf.mxu0
      %v2038 = vadd.f32 0.0, %v2037
      %v2039 = vpop.f32.mrf.mxu0
      %v2040 = vadd.f32 0.0, %v2039
      %2041 = vmatmul.bf16.gmra.mxu0 %v1958
      %v2042 = vpop.f32.mrf.mxu0
      %v2043 = vadd.f32 0.0, %v2042
      %v2044 = vpop.f32.mrf.mxu0
      %v2045 = vadd.f32 0.0, %v2044
      %2046 = vmatmul.bf16.gmra.mxu0 %v1960
      %v2047 = vpop.f32.mrf.mxu0
      %v2048 = vadd.f32 0.0, %v2047
      %v2049 = vpop.f32.mrf.mxu0
      %v2050 = vadd.f32 0.0, %v2049
      %2051 = vmatmul.bf16.gmra.mxu0 %v1962
      %v2052 = vpop.f32.mrf.mxu0
      %v2053 = vadd.f32 0.0, %v2052
      %v2054 = vpop.f32.mrf.mxu0
      %v2055 = vadd.f32 0.0, %v2054
      %2056 = vdwg.mxu0
      %v2059 = vunpack.c.l.b16 %v1313
      %v2060 = vunpack.c.l.b16 %v1314
      %v2061 = vpack.c.b16 %v2060, %v2059
      %v2062 = vsel %vm1931, %v1282, 0
      %v2064 = vsel %vm1931, %v1284, 0
      %v2066 = vsel %vm1931, %v1286, 0
      %v2068 = vsel %vm1931, %v1288, 0
      %v2070 = vsel %vm1931, %v1290, 0
      %v2072 = vsel %vm1931, %v1292, 0
      %v2074 = vsel %vm1931, %v1294, 0
      %v2076 = vsel %vm1931, %v1296, 0
      %v2078 = vsel %vm1931, %v1298, 0
      %v2080 = vsel %vm1931, %v1300, 0
      %v2082 = vsel %vm1931, %v1302, 0
      %v2084 = vsel %vm1931, %v1304, 0
      %v2086 = vsel %vm1931, %v1306, 0
      %v2088 = vsel %vm1931, %v1308, 0
      %v2090 = vsel %vm1931, %v1310, 0
      %v2092 = vsel %vm1931, %v1312, 0
      %v2095 = vsel %vm1964, %v2061, 0
      %2097 = vmatpush.bf16.msra.mxu0 0
      %2098 = vmatpush.bf16.msra.mxu0 0
      %2099 = vmatpush.bf16.msra.mxu0 0
      %2100 = vmatpush.bf16.msra.mxu0 0
      %2101 = vmatpush.bf16.msra.mxu0 0
      %2102 = vmatpush.bf16.msra.mxu0 0
      %2103 = vmatpush.bf16.msra.mxu0 0
      %2104 = vmatpush.bf16.msra.mxu0 %v2095
      %2105 = vmatmul.bf16.gmra.mxu0 %v2062
      %v2106 = vpop.f32.mrf.mxu0
      %v2107 = vadd.f32 %v1978, %v2106
      %v2108 = vpop.f32.mrf.mxu0
      %v2109 = vadd.f32 %v1980, %v2108
      %2110 = vmatmul.bf16.gmra.mxu0 %v2064
      %v2111 = vpop.f32.mrf.mxu0
      %v2112 = vadd.f32 %v1983, %v2111
      %v2113 = vpop.f32.mrf.mxu0
      %v2114 = vadd.f32 %v1985, %v2113
      %2115 = vmatmul.bf16.gmra.mxu0 %v2066
      %v2116 = vpop.f32.mrf.mxu0
      %v2117 = vadd.f32 %v1988, %v2116
      %v2118 = vpop.f32.mrf.mxu0
      %v2119 = vadd.f32 %v1990, %v2118
      %2120 = vmatmul.bf16.gmra.mxu0 %v2068
      %v2121 = vpop.f32.mrf.mxu0
      %v2122 = vadd.f32 %v1993, %v2121
      %v2123 = vpop.f32.mrf.mxu0
      %v2124 = vadd.f32 %v1995, %v2123
      %2125 = vmatmul.bf16.gmra.mxu0 %v2070
      %v2126 = vpop.f32.mrf.mxu0
      %v2127 = vadd.f32 %v1998, %v2126
      %v2128 = vpop.f32.mrf.mxu0
      %v2129 = vadd.f32 %v2000, %v2128
      %2130 = vmatmul.bf16.gmra.mxu0 %v2072
      %v2131 = vpop.f32.mrf.mxu0
      %v2132 = vadd.f32 %v2003, %v2131
      %v2133 = vpop.f32.mrf.mxu0
      %v2134 = vadd.f32 %v2005, %v2133
      %2135 = vmatmul.bf16.gmra.mxu0 %v2074
      %v2136 = vpop.f32.mrf.mxu0
      %v2137 = vadd.f32 %v2008, %v2136
      %v2138 = vpop.f32.mrf.mxu0
      %v2139 = vadd.f32 %v2010, %v2138
      %2140 = vmatmul.bf16.gmra.mxu0 %v2076
      %v2141 = vpop.f32.mrf.mxu0
      %v2142 = vadd.f32 %v2013, %v2141
      %v2143 = vpop.f32.mrf.mxu0
      %v2144 = vadd.f32 %v2015, %v2143
      %2145 = vmatmul.bf16.gmra.mxu0 %v2078
      %v2146 = vpop.f32.mrf.mxu0
      %v2147 = vadd.f32 %v2018, %v2146
      %v2148 = vpop.f32.mrf.mxu0
      %v2149 = vadd.f32 %v2020, %v2148
      %2150 = vmatmul.bf16.gmra.mxu0 %v2080
      %v2151 = vpop.f32.mrf.mxu0
      %v2152 = vadd.f32 %v2023, %v2151
      %v2153 = vpop.f32.mrf.mxu0
      %v2154 = vadd.f32 %v2025, %v2153
      %2155 = vmatmul.bf16.gmra.mxu0 %v2082
      %v2156 = vpop.f32.mrf.mxu0
      %v2157 = vadd.f32 %v2028, %v2156
      %v2158 = vpop.f32.mrf.mxu0
      %v2159 = vadd.f32 %v2030, %v2158
      %2160 = vmatmul.bf16.gmra.mxu0 %v2084
      %v2161 = vpop.f32.mrf.mxu0
      %v2162 = vadd.f32 %v2033, %v2161
      %v2163 = vpop.f32.mrf.mxu0
      %v2164 = vadd.f32 %v2035, %v2163
      %2165 = vmatmul.bf16.gmra.mxu0 %v2086
      %v2166 = vpop.f32.mrf.mxu0
      %v2167 = vadd.f32 %v2038, %v2166
      %v2168 = vpop.f32.mrf.mxu0
      %v2169 = vadd.f32 %v2040, %v2168
      %2170 = vmatmul.bf16.gmra.mxu0 %v2088
      %v2171 = vpop.f32.mrf.mxu0
      %v2172 = vadd.f32 %v2043, %v2171
      %v2173 = vpop.f32.mrf.mxu0
      %v2174 = vadd.f32 %v2045, %v2173
      %2175 = vmatmul.bf16.gmra.mxu0 %v2090
      %v2176 = vpop.f32.mrf.mxu0
      %v2177 = vadd.f32 %v2048, %v2176
      %v2178 = vpop.f32.mrf.mxu0
      %v2179 = vadd.f32 %v2050, %v2178
      %2180 = vmatmul.bf16.gmra.mxu0 %v2092
      %v2181 = vpop.f32.mrf.mxu0
      %v2182 = vadd.f32 %v2053, %v2181
      %v2183 = vpop.f32.mrf.mxu0
      %v2184 = vadd.f32 %v2055, %v2183
      %2185 = vdwg.mxu0
      %s2186 = scalar_lea.vmem [#allocation2], 24
      %v2187 = vld [vmem:[%s2186] sm:$0xf]
      %v2188 = vld [vmem:[%s2186 + $0x4] sm:$0xf]
      %v2189 = vld [vmem:[%s2186 + $0xc] sm:$0xf]
      %v2190 = vld [vmem:[%s2186 + $0x10] sm:$0xf]
      %v2191 = vld [vmem:[%s2186 + $0x18] sm:$0xf]
      %v2192 = vld [vmem:[%s2186 + $0x1c] sm:$0xf]
      %v2193 = vld [vmem:[%s2186 + $0x24] sm:$0xf]
      %v2194 = vld [vmem:[%s2186 + $0x28] sm:$0xf]
      %v2195 = vld [vmem:[%s2186 + $0x30] sm:$0xf]
      %v2196 = vld [vmem:[%s2186 + $0x34] sm:$0xf]
      %v2197 = vld [vmem:[%s2186 + $0x3c] sm:$0xf]
      %v2198 = vld [vmem:[%s2186 + $0x40] sm:$0xf]
      %v2199 = vld [vmem:[%s2186 + $0x48] sm:$0xf]
      %v2200 = vld [vmem:[%s2186 + $0x4c] sm:$0xf]
      %v2201 = vld [vmem:[%s2186 + $0x54] sm:$0xf]
      %v2202 = vld [vmem:[%s2186 + $0x58] sm:$0xf]
      %v2203 = vld [vmem:[%s2186 + $0x60] sm:$0xf]
      %v2204 = vld [vmem:[%s2186 + $0x64] sm:$0xf]
      %v2205 = vld [vmem:[%s2186 + $0x6c] sm:$0xf]
      %v2206 = vld [vmem:[%s2186 + $0x70] sm:$0xf]
      %v2207 = vld [vmem:[%s2186 + $0x78] sm:$0xf]
      %v2208 = vld [vmem:[%s2186 + $0x7c] sm:$0xf]
      %v2209 = vld [vmem:[%s2186 + $0x84] sm:$0xf]
      %v2210 = vld [vmem:[%s2186 + $0x88] sm:$0xf]
      %v2211 = vld [vmem:[%s2186 + $0x90] sm:$0xf]
      %v2212 = vld [vmem:[%s2186 + $0x94] sm:$0xf]
      %v2213 = vld [vmem:[%s2186 + $0x9c] sm:$0xf]
      %v2214 = vld [vmem:[%s2186 + $0xa0] sm:$0xf]
      %v2215 = vld [vmem:[%s2186 + $0xa8] sm:$0xf]
      %v2216 = vld [vmem:[%s2186 + $0xac] sm:$0xf]
      %v2217 = vld [vmem:[%s2186 + $0xb4] sm:$0xf]
      %v2218 = vld [vmem:[%s2186 + $0xb8] sm:$0xf]
      %v2219 = vld [vmem:[%s2186 + $0x8] sm:$0x1]
      %v2220 = vld [vmem:[%s2186 + $0x14] sm:$0x1]
      %v2221 = vld [vmem:[%s2186 + $0x20] sm:$0x1]
      %v2222 = vld [vmem:[%s2186 + $0x2c] sm:$0x1]
      %v2223 = vld [vmem:[%s2186 + $0x38] sm:$0x1]
      %v2224 = vld [vmem:[%s2186 + $0x44] sm:$0x1]
      %v2225 = vld [vmem:[%s2186 + $0x50] sm:$0x1]
      %v2226 = vld [vmem:[%s2186 + $0x5c] sm:$0x1]
      %v2227 = vld [vmem:[%s2186 + $0x68] sm:$0x1]
      %v2228 = vld [vmem:[%s2186 + $0x74] sm:$0x1]
      %v2229 = vld [vmem:[%s2186 + $0x80] sm:$0x1]
      %v2230 = vld [vmem:[%s2186 + $0x8c] sm:$0x1]
      %v2231 = vld [vmem:[%s2186 + $0x98] sm:$0x1]
      %v2232 = vld [vmem:[%s2186 + $0xa4] sm:$0x1]
      %v2233 = vld [vmem:[%s2186 + $0xb0] sm:$0x1]
      %v2234 = vld [vmem:[%s2186 + $0xbc] sm:$0x1]
      %v2235 = vld [vmem:[%s2186] sm:$0xe]
      %v2236 = vld [vmem:[%s2186 + $0xc] sm:$0xe]
      %v2237 = vld [vmem:[%s2186 + $0x18] sm:$0xe]
      %v2238 = vld [vmem:[%s2186 + $0x24] sm:$0xe]
      %v2239 = vld [vmem:[%s2186 + $0x30] sm:$0xe]
      %v2240 = vld [vmem:[%s2186 + $0x3c] sm:$0xe]
      %v2241 = vld [vmem:[%s2186 + $0x48] sm:$0xe]
      %v2242 = vld [vmem:[%s2186 + $0x54] sm:$0xe]
      %v2243 = vld [vmem:[%s2186 + $0x60] sm:$0xe]
      %v2244 = vld [vmem:[%s2186 + $0x6c] sm:$0xe]
      %v2245 = vld [vmem:[%s2186 + $0x78] sm:$0xe]
      %v2246 = vld [vmem:[%s2186 + $0x84] sm:$0xe]
      %v2247 = vld [vmem:[%s2186 + $0x90] sm:$0xe]
      %v2248 = vld [vmem:[%s2186 + $0x9c] sm:$0xe]
      %v2249 = vld [vmem:[%s2186 + $0xa8] sm:$0xe]
      %v2250 = vld [vmem:[%s2186 + $0xb4] sm:$0xe]
      %v2283 = vunpack.c.l.b16 %v2187
      %v2284 = vunpack.c.l.b16 %v2188
      %v2285 = vunpack.c.l.b16 %v2189
      %v2286 = vunpack.c.l.b16 %v2190
      %v2287 = vunpack.c.l.b16 %v2191
      %v2288 = vunpack.c.l.b16 %v2192
      %v2289 = vunpack.c.l.b16 %v2193
      %v2290 = vunpack.c.l.b16 %v2194
      %v2291 = vunpack.c.l.b16 %v2195
      %v2292 = vunpack.c.l.b16 %v2196
      %v2293 = vunpack.c.l.b16 %v2197
      %v2294 = vunpack.c.l.b16 %v2198
      %v2295 = vunpack.c.l.b16 %v2199
      %v2296 = vunpack.c.l.b16 %v2200
      %v2297 = vunpack.c.l.b16 %v2201
      %v2298 = vunpack.c.l.b16 %v2202
      %v2299 = vunpack.c.l.b16 %v2203
      %v2300 = vunpack.c.l.b16 %v2204
      %v2301 = vunpack.c.l.b16 %v2205
      %v2302 = vunpack.c.l.b16 %v2206
      %v2303 = vunpack.c.l.b16 %v2207
      %v2304 = vunpack.c.l.b16 %v2208
      %v2305 = vunpack.c.l.b16 %v2209
      %v2306 = vunpack.c.l.b16 %v2210
      %v2307 = vunpack.c.l.b16 %v2211
      %v2308 = vunpack.c.l.b16 %v2212
      %v2309 = vunpack.c.l.b16 %v2213
      %v2310 = vunpack.c.l.b16 %v2214
      %v2311 = vunpack.c.l.b16 %v2215
      %v2312 = vunpack.c.l.b16 %v2216
      %v2313 = vunpack.c.l.b16 %v2217
      %v2314 = vunpack.c.l.b16 %v2218
      %v2315 = vpack.c.b16 %v2284, %v2283
      %v2316 = vpack.c.b16 %v2286, %v2285
      %v2317 = vpack.c.b16 %v2288, %v2287
      %v2318 = vpack.c.b16 %v2290, %v2289
      %v2319 = vpack.c.b16 %v2292, %v2291
      %v2320 = vpack.c.b16 %v2294, %v2293
      %v2321 = vpack.c.b16 %v2296, %v2295
      %v2322 = vpack.c.b16 %v2298, %v2297
      %v2323 = vpack.c.b16 %v2300, %v2299
      %v2324 = vpack.c.b16 %v2302, %v2301
      %v2325 = vpack.c.b16 %v2304, %v2303
      %v2326 = vpack.c.b16 %v2306, %v2305
      %v2327 = vpack.c.b16 %v2308, %v2307
      %v2328 = vpack.c.b16 %v2310, %v2309
      %v2329 = vpack.c.b16 %v2312, %v2311
      %v2330 = vpack.c.b16 %v2314, %v2313
      %v2347 = vunpack.c.l.b16 %v2219
      %v2348 = vunpack.c.l.b16 %v2220
      %v2349 = vunpack.c.l.b16 %v2221
      %v2350 = vunpack.c.l.b16 %v2222
      %v2351 = vunpack.c.l.b16 %v2223
      %v2352 = vunpack.c.l.b16 %v2224
      %v2353 = vunpack.c.l.b16 %v2225
      %v2354 = vunpack.c.l.b16 %v2226
      %v2355 = vunpack.c.l.b16 %v2227
      %v2356 = vunpack.c.l.b16 %v2228
      %v2357 = vunpack.c.l.b16 %v2229
      %v2358 = vunpack.c.l.b16 %v2230
      %v2359 = vunpack.c.l.b16 %v2231
      %v2360 = vunpack.c.l.b16 %v2232
      %v2361 = vunpack.c.l.b16 %v2233
      %v2362 = vunpack.c.l.b16 %v2234
      %v2363 = vpack.c.b16 %v2347, %v2347
      %v2364 = vpack.c.b16 %v2348, %v2348
      %v2365 = vpack.c.b16 %v2349, %v2349
      %v2366 = vpack.c.b16 %v2350, %v2350
      %v2367 = vpack.c.b16 %v2351, %v2351
      %v2368 = vpack.c.b16 %v2352, %v2352
      %v2369 = vpack.c.b16 %v2353, %v2353
      %v2370 = vpack.c.b16 %v2354, %v2354
      %v2371 = vpack.c.b16 %v2355, %v2355
      %v2372 = vpack.c.b16 %v2356, %v2356
      %v2373 = vpack.c.b16 %v2357, %v2357
      %v2374 = vpack.c.b16 %v2358, %v2358
      %v2375 = vpack.c.b16 %v2359, %v2359
      %v2376 = vpack.c.b16 %v2360, %v2360
      %v2377 = vpack.c.b16 %v2361, %v2361
      %v2378 = vpack.c.b16 %v2362, %v2362
      %v2380 = vshrl.u32 %v2315, 16
      %v2382 = vshll.u32 %v2315, 16
      %v2384 = vrot.slane %v2382, 1
      %v2385 = vor.u32 %v2380, %v2384
      %v2387 = vshll.u32 %v2363, 16
      %v2389 = vrot.slane %v2387, 1
      %v2390 = vsel %vm893, %v2385, %v2389
      %v2392 = vshrl.u32 %v2316, 16
      %v2394 = vshll.u32 %v2316, 16
      %v2396 = vrot.slane %v2394, 1
      %v2397 = vor.u32 %v2392, %v2396
      %v2399 = vshll.u32 %v2364, 16
      %v2401 = vrot.slane %v2399, 1
      %v2402 = vsel %vm893, %v2397, %v2401
      %v2404 = vshrl.u32 %v2317, 16
      %v2406 = vshll.u32 %v2317, 16
      %v2408 = vrot.slane %v2406, 1
      %v2409 = vor.u32 %v2404, %v2408
      %v2411 = vshll.u32 %v2365, 16
      %v2413 = vrot.slane %v2411, 1
      %v2414 = vsel %vm893, %v2409, %v2413
      %v2416 = vshrl.u32 %v2318, 16
      %v2418 = vshll.u32 %v2318, 16
      %v2420 = vrot.slane %v2418, 1
      %v2421 = vor.u32 %v2416, %v2420
      %v2423 = vshll.u32 %v2366, 16
      %v2425 = vrot.slane %v2423, 1
      %v2426 = vsel %vm893, %v2421, %v2425
      %v2428 = vshrl.u32 %v2319, 16
      %v2430 = vshll.u32 %v2319, 16
      %v2432 = vrot.slane %v2430, 1
      %v2433 = vor.u32 %v2428, %v2432
      %v2435 = vshll.u32 %v2367, 16
      %v2437 = vrot.slane %v2435, 1
      %v2438 = vsel %vm893, %v2433, %v2437
      %v2440 = vshrl.u32 %v2320, 16
      %v2442 = vshll.u32 %v2320, 16
      %v2444 = vrot.slane %v2442, 1
      %v2445 = vor.u32 %v2440, %v2444
      %v2447 = vshll.u32 %v2368, 16
      %v2449 = vrot.slane %v2447, 1
      %v2450 = vsel %vm893, %v2445, %v2449
      %v2452 = vshrl.u32 %v2321, 16
      %v2454 = vshll.u32 %v2321, 16
      %v2456 = vrot.slane %v2454, 1
      %v2457 = vor.u32 %v2452, %v2456
      %v2459 = vshll.u32 %v2369, 16
      %v2461 = vrot.slane %v2459, 1
      %v2462 = vsel %vm893, %v2457, %v2461
      %v2464 = vshrl.u32 %v2322, 16
      %v2466 = vshll.u32 %v2322, 16
      %v2468 = vrot.slane %v2466, 1
      %v2469 = vor.u32 %v2464, %v2468
      %v2471 = vshll.u32 %v2370, 16
      %v2473 = vrot.slane %v2471, 1
      %v2474 = vsel %vm893, %v2469, %v2473
      %v2476 = vshrl.u32 %v2323, 16
      %v2478 = vshll.u32 %v2323, 16
      %v2480 = vrot.slane %v2478, 1
      %v2481 = vor.u32 %v2476, %v2480
      %v2483 = vshll.u32 %v2371, 16
      %v2485 = vrot.slane %v2483, 1
      %v2486 = vsel %vm893, %v2481, %v2485
      %v2488 = vshrl.u32 %v2324, 16
      %v2490 = vshll.u32 %v2324, 16
      %v2492 = vrot.slane %v2490, 1
      %v2493 = vor.u32 %v2488, %v2492
      %v2495 = vshll.u32 %v2372, 16
      %v2497 = vrot.slane %v2495, 1
      %v2498 = vsel %vm893, %v2493, %v2497
      %v2500 = vshrl.u32 %v2325, 16
      %v2502 = vshll.u32 %v2325, 16
      %v2504 = vrot.slane %v2502, 1
      %v2505 = vor.u32 %v2500, %v2504
      %v2507 = vshll.u32 %v2373, 16
      %v2509 = vrot.slane %v2507, 1
      %v2510 = vsel %vm893, %v2505, %v2509
      %v2512 = vshrl.u32 %v2326, 16
      %v2514 = vshll.u32 %v2326, 16
      %v2516 = vrot.slane %v2514, 1
      %v2517 = vor.u32 %v2512, %v2516
      %v2519 = vshll.u32 %v2374, 16
      %v2521 = vrot.slane %v2519, 1
      %v2522 = vsel %vm893, %v2517, %v2521
      %v2524 = vshrl.u32 %v2327, 16
      %v2526 = vshll.u32 %v2327, 16
      %v2528 = vrot.slane %v2526, 1
      %v2529 = vor.u32 %v2524, %v2528
      %v2531 = vshll.u32 %v2375, 16
      %v2533 = vrot.slane %v2531, 1
      %v2534 = vsel %vm893, %v2529, %v2533
      %v2536 = vshrl.u32 %v2328, 16
      %v2538 = vshll.u32 %v2328, 16
      %v2540 = vrot.slane %v2538, 1
      %v2541 = vor.u32 %v2536, %v2540
      %v2543 = vshll.u32 %v2376, 16
      %v2545 = vrot.slane %v2543, 1
      %v2546 = vsel %vm893, %v2541, %v2545
      %v2548 = vshrl.u32 %v2329, 16
      %v2550 = vshll.u32 %v2329, 16
      %v2552 = vrot.slane %v2550, 1
      %v2553 = vor.u32 %v2548, %v2552
      %v2555 = vshll.u32 %v2377, 16
      %v2557 = vrot.slane %v2555, 1
      %v2558 = vsel %vm893, %v2553, %v2557
      %v2560 = vshrl.u32 %v2330, 16
      %v2562 = vshll.u32 %v2330, 16
      %v2564 = vrot.slane %v2562, 1
      %v2565 = vor.u32 %v2560, %v2564
      %v2567 = vshll.u32 %v2378, 16
      %v2569 = vrot.slane %v2567, 1
      %v2570 = vsel %vm893, %v2565, %v2569
      %2571 = vrot.lane.b32.xlu0 %v2390, 4
      %v2572 = vpop.permute.xlu0 %2571
      %2573 = vrot.lane.b32.xlu0 %v2402, 4
      %v2574 = vpop.permute.xlu0 %2573
      %2575 = vrot.lane.b32.xlu0 %v2414, 4
      %v2576 = vpop.permute.xlu0 %2575
      %2577 = vrot.lane.b32.xlu0 %v2426, 4
      %v2578 = vpop.permute.xlu0 %2577
      %2579 = vrot.lane.b32.xlu0 %v2438, 4
      %v2580 = vpop.permute.xlu0 %2579
      %2581 = vrot.lane.b32.xlu0 %v2450, 4
      %v2582 = vpop.permute.xlu0 %2581
      %2583 = vrot.lane.b32.xlu0 %v2462, 4
      %v2584 = vpop.permute.xlu0 %2583
      %2585 = vrot.lane.b32.xlu0 %v2474, 4
      %v2586 = vpop.permute.xlu0 %2585
      %2587 = vrot.lane.b32.xlu0 %v2486, 4
      %v2588 = vpop.permute.xlu0 %2587
      %2589 = vrot.lane.b32.xlu0 %v2498, 4
      %v2590 = vpop.permute.xlu0 %2589
      %2591 = vrot.lane.b32.xlu0 %v2510, 4
      %v2592 = vpop.permute.xlu0 %2591
      %2593 = vrot.lane.b32.xlu0 %v2522, 4
      %v2594 = vpop.permute.xlu0 %2593
      %2595 = vrot.lane.b32.xlu0 %v2534, 4
      %v2596 = vpop.permute.xlu0 %2595
      %2597 = vrot.lane.b32.xlu0 %v2546, 4
      %v2598 = vpop.permute.xlu0 %2597
      %2599 = vrot.lane.b32.xlu0 %v2558, 4
      %v2600 = vpop.permute.xlu0 %2599
      %2601 = vrot.lane.b32.xlu0 %v2570, 4
      %v2602 = vpop.permute.xlu0 %2601
      %v2619 = vunpack.c.l.b16 %v2235
      %v2620 = vunpack.c.l.b16 %v2236
      %v2621 = vunpack.c.l.b16 %v2237
      %v2622 = vunpack.c.l.b16 %v2238
      %v2623 = vunpack.c.l.b16 %v2239
      %v2624 = vunpack.c.l.b16 %v2240
      %v2625 = vunpack.c.l.b16 %v2241
      %v2626 = vunpack.c.l.b16 %v2242
      %v2627 = vunpack.c.l.b16 %v2243
      %v2628 = vunpack.c.l.b16 %v2244
      %v2629 = vunpack.c.l.b16 %v2245
      %v2630 = vunpack.c.l.b16 %v2246
      %v2631 = vunpack.c.l.b16 %v2247
      %v2632 = vunpack.c.l.b16 %v2248
      %v2633 = vunpack.c.l.b16 %v2249
      %v2634 = vunpack.c.l.b16 %v2250
      %v2635 = vpack.c.b16 %v2284, %v2619
      %v2636 = vpack.c.b16 %v2286, %v2620
      %v2637 = vpack.c.b16 %v2288, %v2621
      %v2638 = vpack.c.b16 %v2290, %v2622
      %v2639 = vpack.c.b16 %v2292, %v2623
      %v2640 = vpack.c.b16 %v2294, %v2624
      %v2641 = vpack.c.b16 %v2296, %v2625
      %v2642 = vpack.c.b16 %v2298, %v2626
      %v2643 = vpack.c.b16 %v2300, %v2627
      %v2644 = vpack.c.b16 %v2302, %v2628
      %v2645 = vpack.c.b16 %v2304, %v2629
      %v2646 = vpack.c.b16 %v2306, %v2630
      %v2647 = vpack.c.b16 %v2308, %v2631
      %v2648 = vpack.c.b16 %v2310, %v2632
      %v2649 = vpack.c.b16 %v2312, %v2633
      %v2650 = vpack.c.b16 %v2314, %v2634
      %v2651 = vrot.slane %v2635, 1
      %v2652 = vrot.slane %v2363, 1
      %v2653 = vsel %vm1166, %v2651, %v2652
      %v2654 = vrot.slane %v2636, 1
      %v2655 = vrot.slane %v2364, 1
      %v2656 = vsel %vm1166, %v2654, %v2655
      %v2657 = vrot.slane %v2637, 1
      %v2658 = vrot.slane %v2365, 1
      %v2659 = vsel %vm1166, %v2657, %v2658
      %v2660 = vrot.slane %v2638, 1
      %v2661 = vrot.slane %v2366, 1
      %v2662 = vsel %vm1166, %v2660, %v2661
      %v2663 = vrot.slane %v2639, 1
      %v2664 = vrot.slane %v2367, 1
      %v2665 = vsel %vm1166, %v2663, %v2664
      %v2666 = vrot.slane %v2640, 1
      %v2667 = vrot.slane %v2368, 1
      %v2668 = vsel %vm1166, %v2666, %v2667
      %v2669 = vrot.slane %v2641, 1
      %v2670 = vrot.slane %v2369, 1
      %v2671 = vsel %vm1166, %v2669, %v2670
      %v2672 = vrot.slane %v2642, 1
      %v2673 = vrot.slane %v2370, 1
      %v2674 = vsel %vm1166, %v2672, %v2673
      %v2675 = vrot.slane %v2643, 1
      %v2676 = vrot.slane %v2371, 1
      %v2677 = vsel %vm1166, %v2675, %v2676
      %v2678 = vrot.slane %v2644, 1
      %v2679 = vrot.slane %v2372, 1
      %v2680 = vsel %vm1166, %v2678, %v2679
      %v2681 = vrot.slane %v2645, 1
      %v2682 = vrot.slane %v2373, 1
      %v2683 = vsel %vm1166, %v2681, %v2682
      %v2684 = vrot.slane %v2646, 1
      %v2685 = vrot.slane %v2374, 1
      %v2686 = vsel %vm1166, %v2684, %v2685
      %v2687 = vrot.slane %v2647, 1
      %v2688 = vrot.slane %v2375, 1
      %v2689 = vsel %vm1166, %v2687, %v2688
      %v2690 = vrot.slane %v2648, 1
      %v2691 = vrot.slane %v2376, 1
      %v2692 = vsel %vm1166, %v2690, %v2691
      %v2693 = vrot.slane %v2649, 1
      %v2694 = vrot.slane %v2377, 1
      %v2695 = vsel %vm1166, %v2693, %v2694
      %v2696 = vrot.slane %v2650, 1
      %v2697 = vrot.slane %v2378, 1
      %v2698 = vsel %vm1166, %v2696, %v2697
      %2699 = vrot.lane.b32.xlu0 %v2653, 8
      %v2700 = vpop.permute.xlu0 %2699
      %2701 = vrot.lane.b32.xlu0 %v2656, 8
      %v2702 = vpop.permute.xlu0 %2701
      %2703 = vrot.lane.b32.xlu0 %v2659, 8
      %v2704 = vpop.permute.xlu0 %2703
      %2705 = vrot.lane.b32.xlu0 %v2662, 8
      %v2706 = vpop.permute.xlu0 %2705
      %2707 = vrot.lane.b32.xlu0 %v2665, 8
      %v2708 = vpop.permute.xlu0 %2707
      %2709 = vrot.lane.b32.xlu0 %v2668, 8
      %v2710 = vpop.permute.xlu0 %2709
      %2711 = vrot.lane.b32.xlu0 %v2671, 8
      %v2712 = vpop.permute.xlu0 %2711
      %2713 = vrot.lane.b32.xlu0 %v2674, 8
      %v2714 = vpop.permute.xlu0 %2713
      %2715 = vrot.lane.b32.xlu0 %v2677, 8
      %v2716 = vpop.permute.xlu0 %2715
      %2717 = vrot.lane.b32.xlu0 %v2680, 8
      %v2718 = vpop.permute.xlu0 %2717
      %2719 = vrot.lane.b32.xlu0 %v2683, 8
      %v2720 = vpop.permute.xlu0 %2719
      %2721 = vrot.lane.b32.xlu0 %v2686, 8
      %v2722 = vpop.permute.xlu0 %2721
      %2723 = vrot.lane.b32.xlu0 %v2689, 8
      %v2724 = vpop.permute.xlu0 %2723
      %2725 = vrot.lane.b32.xlu0 %v2692, 8
      %v2726 = vpop.permute.xlu0 %2725
      %2727 = vrot.lane.b32.xlu0 %v2695, 8
      %v2728 = vpop.permute.xlu0 %2727
      %2729 = vrot.lane.b32.xlu0 %v2698, 8
      %v2730 = vpop.permute.xlu0 %2729
      %v2732 = vsel %vm1247, %v2315, %v2572
      %v2734 = vsel %vm1247, %v2316, %v2574
      %v2736 = vsel %vm1247, %v2317, %v2576
      %v2738 = vsel %vm1247, %v2318, %v2578
      %v2740 = vsel %vm1247, %v2319, %v2580
      %v2742 = vsel %vm1247, %v2320, %v2582
      %v2744 = vsel %vm1247, %v2321, %v2584
      %v2746 = vsel %vm1247, %v2322, %v2586
      %v2748 = vsel %vm1247, %v2323, %v2588
      %v2750 = vsel %vm1247, %v2324, %v2590
      %v2752 = vsel %vm1247, %v2325, %v2592
      %v2754 = vsel %vm1247, %v2326, %v2594
      %v2756 = vsel %vm1247, %v2327, %v2596
      %v2758 = vsel %vm1247, %v2328, %v2598
      %v2760 = vsel %vm1247, %v2329, %v2600
      %v2762 = vsel %vm1247, %v2330, %v2602
      %v2764 = vsel %vm1280, %v2732, %v2700
      %v2766 = vsel %vm1280, %v2734, %v2702
      %v2768 = vsel %vm1280, %v2736, %v2704
      %v2770 = vsel %vm1280, %v2738, %v2706
      %v2772 = vsel %vm1280, %v2740, %v2708
      %v2774 = vsel %vm1280, %v2742, %v2710
      %v2776 = vsel %vm1280, %v2744, %v2712
      %v2778 = vsel %vm1280, %v2746, %v2714
      %v2780 = vsel %vm1280, %v2748, %v2716
      %v2782 = vsel %vm1280, %v2750, %v2718
      %v2784 = vsel %vm1280, %v2752, %v2720
      %v2786 = vsel %vm1280, %v2754, %v2722
      %v2788 = vsel %vm1280, %v2756, %v2724
      %v2790 = vsel %vm1280, %v2758, %v2726
      %v2792 = vsel %vm1280, %v2760, %v2728
      %v2794 = vsel %vm1280, %v2762, %v2730
      %s2795 = scalar_lea.vmem %s1, 16
      %v2796 = vld [vmem:[%s2795] sm:$0xf]
      %v2797 = vld [vmem:[%s2795 + $0x4] sm:$0x3]
      %v2800 = vunpack.c.l.b16 %v2796
      %v2801 = vunpack.c.l.b16 %v2797
      %v2802 = vpack.c.b16 %v2801, %v2800
      %v2803 = vsel %vm1931, %v2764, 0
      %v2805 = vsel %vm1931, %v2766, 0
      %v2807 = vsel %vm1931, %v2768, 0
      %v2809 = vsel %vm1931, %v2770, 0
      %v2811 = vsel %vm1931, %v2772, 0
      %v2813 = vsel %vm1931, %v2774, 0
      %v2815 = vsel %vm1931, %v2776, 0
      %v2817 = vsel %vm1931, %v2778, 0
      %v2819 = vsel %vm1931, %v2780, 0
      %v2821 = vsel %vm1931, %v2782, 0
      %v2823 = vsel %vm1931, %v2784, 0
      %v2825 = vsel %vm1931, %v2786, 0
      %v2827 = vsel %vm1931, %v2788, 0
      %v2829 = vsel %vm1931, %v2790, 0
      %v2831 = vsel %vm1931, %v2792, 0
      %v2833 = vsel %vm1931, %v2794, 0
      %v2836 = vsel %vm1964, %v2802, 0
      %2838 = vmatpush.bf16.msra.mxu0 0
      %2839 = vmatpush.bf16.msra.mxu0 0
      %2840 = vmatpush.bf16.msra.mxu0 0
      %2841 = vmatpush.bf16.msra.mxu0 0
      %2842 = vmatpush.bf16.msra.mxu0 0
      %2843 = vmatpush.bf16.msra.mxu0 0
      %2844 = vmatpush.bf16.msra.mxu0 0
      %2845 = vmatpush.bf16.msra.mxu0 %v2836
      %2846 = vmatmul.bf16.gmra.mxu0 %v2803
      %v2847 = vpop.f32.mrf.mxu0
      %v2848 = vadd.f32 0.0, %v2847
      %v2849 = vpop.f32.mrf.mxu0
      %v2850 = vadd.f32 0.0, %v2849
      %2851 = vmatmul.bf16.gmra.mxu0 %v2805
      %v2852 = vpop.f32.mrf.mxu0
      %v2853 = vadd.f32 0.0, %v2852
      %v2854 = vpop.f32.mrf.mxu0
      %v2855 = vadd.f32 0.0, %v2854
      %2856 = vmatmul.bf16.gmra.mxu0 %v2807
      %v2857 = vpop.f32.mrf.mxu0
      %v2858 = vadd.f32 0.0, %v2857
      %v2859 = vpop.f32.mrf.mxu0
      %v2860 = vadd.f32 0.0, %v2859
      %2861 = vmatmul.bf16.gmra.mxu0 %v2809
      %v2862 = vpop.f32.mrf.mxu0
      %v2863 = vadd.f32 0.0, %v2862
      %v2864 = vpop.f32.mrf.mxu0
      %v2865 = vadd.f32 0.0, %v2864
      %2866 = vmatmul.bf16.gmra.mxu0 %v2811
      %v2867 = vpop.f32.mrf.mxu0
      %v2868 = vadd.f32 0.0, %v2867
      %v2869 = vpop.f32.mrf.mxu0
      %v2870 = vadd.f32 0.0, %v2869
      %2871 = vmatmul.bf16.gmra.mxu0 %v2813
      %v2872 = vpop.f32.mrf.mxu0
      %v2873 = vadd.f32 0.0, %v2872
      %v2874 = vpop.f32.mrf.mxu0
      %v2875 = vadd.f32 0.0, %v2874
      %2876 = vmatmul.bf16.gmra.mxu0 %v2815
      %v2877 = vpop.f32.mrf.mxu0
      %v2878 = vadd.f32 0.0, %v2877
      %v2879 = vpop.f32.mrf.mxu0
      %v2880 = vadd.f32 0.0, %v2879
      %2881 = vmatmul.bf16.gmra.mxu0 %v2817
      %v2882 = vpop.f32.mrf.mxu0
      %v2883 = vadd.f32 0.0, %v2882
      %v2884 = vpop.f32.mrf.mxu0
      %v2885 = vadd.f32 0.0, %v2884
      %2886 = vmatmul.bf16.gmra.mxu0 %v2819
      %v2887 = vpop.f32.mrf.mxu0
      %v2888 = vadd.f32 0.0, %v2887
      %v2889 = vpop.f32.mrf.mxu0
      %v2890 = vadd.f32 0.0, %v2889
      %2891 = vmatmul.bf16.gmra.mxu0 %v2821
      %v2892 = vpop.f32.mrf.mxu0
      %v2893 = vadd.f32 0.0, %v2892
      %v2894 = vpop.f32.mrf.mxu0
      %v2895 = vadd.f32 0.0, %v2894
      %2896 = vmatmul.bf16.gmra.mxu0 %v2823
      %v2897 = vpop.f32.mrf.mxu0
      %v2898 = vadd.f32 0.0, %v2897
      %v2899 = vpop.f32.mrf.mxu0
      %v2900 = vadd.f32 0.0, %v2899
      %2901 = vmatmul.bf16.gmra.mxu0 %v2825
      %v2902 = vpop.f32.mrf.mxu0
      %v2903 = vadd.f32 0.0, %v2902
      %v2904 = vpop.f32.mrf.mxu0
      %v2905 = vadd.f32 0.0, %v2904
      %2906 = vmatmul.bf16.gmra.mxu0 %v2827
      %v2907 = vpop.f32.mrf.mxu0
      %v2908 = vadd.f32 0.0, %v2907
      %v2909 = vpop.f32.mrf.mxu0
      %v2910 = vadd.f32 0.0, %v2909
      %2911 = vmatmul.bf16.gmra.mxu0 %v2829
      %v2912 = vpop.f32.mrf.mxu0
      %v2913 = vadd.f32 0.0, %v2912
      %v2914 = vpop.f32.mrf.mxu0
      %v2915 = vadd.f32 0.0, %v2914
      %2916 = vmatmul.bf16.gmra.mxu0 %v2831
      %v2917 = vpop.f32.mrf.mxu0
      %v2918 = vadd.f32 0.0, %v2917
      %v2919 = vpop.f32.mrf.mxu0
      %v2920 = vadd.f32 0.0, %v2919
      %2921 = vmatmul.bf16.gmra.mxu0 %v2833
      %v2922 = vpop.f32.mrf.mxu0
      %v2923 = vadd.f32 0.0, %v2922
      %v2924 = vpop.f32.mrf.mxu0
      %v2925 = vadd.f32 0.0, %v2924
      %2926 = vdwg.mxu0
      %v2927 = vadd.f32 %v2107, %v2848
      %v2928 = vadd.f32 %v2109, %v2850
      %v2929 = vadd.f32 %v2112, %v2853
      %v2930 = vadd.f32 %v2114, %v2855
      %v2931 = vadd.f32 %v2117, %v2858
      %v2932 = vadd.f32 %v2119, %v2860
      %v2933 = vadd.f32 %v2122, %v2863
      %v2934 = vadd.f32 %v2124, %v2865
      %v2935 = vadd.f32 %v2127, %v2868
      %v2936 = vadd.f32 %v2129, %v2870
      %v2937 = vadd.f32 %v2132, %v2873
      %v2938 = vadd.f32 %v2134, %v2875
      %v2939 = vadd.f32 %v2137, %v2878
      %v2940 = vadd.f32 %v2139, %v2880
      %v2941 = vadd.f32 %v2142, %v2883
      %v2942 = vadd.f32 %v2144, %v2885
      %v2943 = vadd.f32 %v2147, %v2888
      %v2944 = vadd.f32 %v2149, %v2890
      %v2945 = vadd.f32 %v2152, %v2893
      %v2946 = vadd.f32 %v2154, %v2895
      %v2947 = vadd.f32 %v2157, %v2898
      %v2948 = vadd.f32 %v2159, %v2900
      %v2949 = vadd.f32 %v2162, %v2903
      %v2950 = vadd.f32 %v2164, %v2905
      %v2951 = vadd.f32 %v2167, %v2908
      %v2952 = vadd.f32 %v2169, %v2910
      %v2953 = vadd.f32 %v2172, %v2913
      %v2954 = vadd.f32 %v2174, %v2915
      %v2955 = vadd.f32 %v2177, %v2918
      %v2956 = vadd.f32 %v2179, %v2920
      %v2957 = vadd.f32 %v2182, %v2923
      %v2958 = vadd.f32 %v2184, %v2925
      %v2959 = vld [vmem:[%s2] sm:$0x1]
      %v2961 = vperm.slane %v2959, 0
      %v2963 = vadd.f32 %v2927, %v2961
      %v2964 = vadd.f32 %v2928, %v2961
      %v2965 = vadd.f32 %v2929, %v2961
      %v2966 = vadd.f32 %v2930, %v2961
      %v2967 = vadd.f32 %v2931, %v2961
      %v2968 = vadd.f32 %v2932, %v2961
      %v2969 = vadd.f32 %v2933, %v2961
      %v2970 = vadd.f32 %v2934, %v2961
      %v2971 = vadd.f32 %v2935, %v2961
      %v2972 = vadd.f32 %v2936, %v2961
      %v2973 = vadd.f32 %v2937, %v2961
      %v2974 = vadd.f32 %v2938, %v2961
      %v2975 = vadd.f32 %v2939, %v2961
      %v2976 = vadd.f32 %v2940, %v2961
      %v2977 = vadd.f32 %v2941, %v2961
      %v2978 = vadd.f32 %v2942, %v2961
      %v2979 = vadd.f32 %v2943, %v2961
      %v2980 = vadd.f32 %v2944, %v2961
      %v2981 = vadd.f32 %v2945, %v2961
      %v2982 = vadd.f32 %v2946, %v2961
      %v2983 = vadd.f32 %v2947, %v2961
      %v2984 = vadd.f32 %v2948, %v2961
      %v2985 = vadd.f32 %v2949, %v2961
      %v2986 = vadd.f32 %v2950, %v2961
      %v2987 = vadd.f32 %v2951, %v2961
      %v2988 = vadd.f32 %v2952, %v2961
      %v2989 = vadd.f32 %v2953, %v2961
      %v2990 = vadd.f32 %v2954, %v2961
      %v2991 = vadd.f32 %v2955, %v2961
      %v2992 = vadd.f32 %v2956, %v2961
      %v2993 = vadd.f32 %v2957, %v2961
      %v2994 = vadd.f32 %v2958, %v2961
      %v2995 = vmax.f32 %v2963, 0.0
      %v2996 = vmax.f32 %v2964, 0.0
      %v2997 = vmax.f32 %v2965, 0.0
      %v2998 = vmax.f32 %v2966, 0.0
      %v2999 = vmax.f32 %v2967, 0.0
      %v3000 = vmax.f32 %v2968, 0.0
      %v3001 = vmax.f32 %v2969, 0.0
      %v3002 = vmax.f32 %v2970, 0.0
      %v3003 = vmax.f32 %v2971, 0.0
      %v3004 = vmax.f32 %v2972, 0.0
      %v3005 = vmax.f32 %v2973, 0.0
      %v3006 = vmax.f32 %v2974, 0.0
      %v3007 = vmax.f32 %v2975, 0.0
      %v3008 = vmax.f32 %v2976, 0.0
      %v3009 = vmax.f32 %v2977, 0.0
      %v3010 = vmax.f32 %v2978, 0.0
      %v3011 = vmax.f32 %v2979, 0.0
      %v3012 = vmax.f32 %v2980, 0.0
      %v3013 = vmax.f32 %v2981, 0.0
      %v3014 = vmax.f32 %v2982, 0.0
      %v3015 = vmax.f32 %v2983, 0.0
      %v3016 = vmax.f32 %v2984, 0.0
      %v3017 = vmax.f32 %v2985, 0.0
      %v3018 = vmax.f32 %v2986, 0.0
      %v3019 = vmax.f32 %v2987, 0.0
      %v3020 = vmax.f32 %v2988, 0.0
      %v3021 = vmax.f32 %v2989, 0.0
      %v3022 = vmax.f32 %v2990, 0.0
      %v3023 = vmax.f32 %v2991, 0.0
      %v3024 = vmax.f32 %v2992, 0.0
      %v3025 = vmax.f32 %v2993, 0.0
      %v3026 = vmax.f32 %v2994, 0.0
      %v3027 = vpack.c.bf16 %v2995, %v2995
      %v3028 = vpack.c.bf16 %v2996, %v2996
      %v3029 = vpack.c.bf16 %v2997, %v2997
      %v3030 = vpack.c.bf16 %v2998, %v2998
      %v3031 = vpack.c.bf16 %v2999, %v2999
      %v3032 = vpack.c.bf16 %v3000, %v3000
      %v3033 = vpack.c.bf16 %v3001, %v3001
      %v3034 = vpack.c.bf16 %v3002, %v3002
      %v3035 = vpack.c.bf16 %v3003, %v3003
      %v3036 = vpack.c.bf16 %v3004, %v3004
      %v3037 = vpack.c.bf16 %v3005, %v3005
      %v3038 = vpack.c.bf16 %v3006, %v3006
      %v3039 = vpack.c.bf16 %v3007, %v3007
      %v3040 = vpack.c.bf16 %v3008, %v3008
      %v3041 = vpack.c.bf16 %v3009, %v3009
      %v3042 = vpack.c.bf16 %v3010, %v3010
      %v3043 = vpack.c.bf16 %v3011, %v3011
      %v3044 = vpack.c.bf16 %v3012, %v3012
      %v3045 = vpack.c.bf16 %v3013, %v3013
      %v3046 = vpack.c.bf16 %v3014, %v3014
      %v3047 = vpack.c.bf16 %v3015, %v3015
      %v3048 = vpack.c.bf16 %v3016, %v3016
      %v3049 = vpack.c.bf16 %v3017, %v3017
      %v3050 = vpack.c.bf16 %v3018, %v3018
      %v3051 = vpack.c.bf16 %v3019, %v3019
      %v3052 = vpack.c.bf16 %v3020, %v3020
      %v3053 = vpack.c.bf16 %v3021, %v3021
      %v3054 = vpack.c.bf16 %v3022, %v3022
      %v3055 = vpack.c.bf16 %v3023, %v3023
      %v3056 = vpack.c.bf16 %v3024, %v3024
      %v3057 = vpack.c.bf16 %v3025, %v3025
      %v3058 = vpack.c.bf16 %v3026, %v3026
      %3059 = vst.msk [vmem:[%s170] sm:$0xf] %vm172, %v3027
      %3060 = vst.msk [vmem:[%s170 + $0x4] sm:$0xf] %vm172, %v3028
      %3061 = vst.msk [vmem:[%s170 + $0x8] sm:$0xf] %vm172, %v3029
      %3062 = vst.msk [vmem:[%s170 + $0xc] sm:$0xf] %vm172, %v3030
      %3063 = vst.msk [vmem:[%s170 + $0x10] sm:$0xf] %vm172, %v3031
      %3064 = vst.msk [vmem:[%s170 + $0x14] sm:$0xf] %vm172, %v3032
      %3065 = vst.msk [vmem:[%s170 + $0x18] sm:$0xf] %vm172, %v3033
      %3066 = vst.msk [vmem:[%s170 + $0x1c] sm:$0xf] %vm172, %v3034
      %3067 = vst.msk [vmem:[%s170 + $0x20] sm:$0xf] %vm172, %v3035
      %3068 = vst.msk [vmem:[%s170 + $0x24] sm:$0xf] %vm172, %v3036
      %3069 = vst.msk [vmem:[%s170 + $0x28] sm:$0xf] %vm172, %v3037
      %3070 = vst.msk [vmem:[%s170 + $0x2c] sm:$0xf] %vm172, %v3038
      %3071 = vst.msk [vmem:[%s170 + $0x30] sm:$0xf] %vm172, %v3039
      %3072 = vst.msk [vmem:[%s170 + $0x34] sm:$0xf] %vm172, %v3040
      %3073 = vst.msk [vmem:[%s170 + $0x38] sm:$0xf] %vm172, %v3041
      %3074 = vst.msk [vmem:[%s170 + $0x3c] sm:$0xf] %vm172, %v3042
      %3075 = vst.msk [vmem:[%s170 + $0x40] sm:$0xf] %vm172, %v3043
      %3076 = vst.msk [vmem:[%s170 + $0x44] sm:$0xf] %vm172, %v3044
      %3077 = vst.msk [vmem:[%s170 + $0x48] sm:$0xf] %vm172, %v3045
      %3078 = vst.msk [vmem:[%s170 + $0x4c] sm:$0xf] %vm172, %v3046
      %3079 = vst.msk [vmem:[%s170 + $0x50] sm:$0xf] %vm172, %v3047
      %3080 = vst.msk [vmem:[%s170 + $0x54] sm:$0xf] %vm172, %v3048
      %3081 = vst.msk [vmem:[%s170 + $0x58] sm:$0xf] %vm172, %v3049
      %3082 = vst.msk [vmem:[%s170 + $0x5c] sm:$0xf] %vm172, %v3050
      %3083 = vst.msk [vmem:[%s170 + $0x60] sm:$0xf] %vm172, %v3051
      %3084 = vst.msk [vmem:[%s170 + $0x64] sm:$0xf] %vm172, %v3052
      %3085 = vst.msk [vmem:[%s170 + $0x68] sm:$0xf] %vm172, %v3053
      %3086 = vst.msk [vmem:[%s170 + $0x6c] sm:$0xf] %vm172, %v3054
      %3087 = vst.msk [vmem:[%s170 + $0x70] sm:$0xf] %vm172, %v3055
      %3088 = vst.msk [vmem:[%s170 + $0x74] sm:$0xf] %vm172, %v3056
      %3089 = vst.msk [vmem:[%s170 + $0x78] sm:$0xf] %vm172, %v3057
      %3090 = vst.msk [vmem:[%s170 + $0x7c] sm:$0xf] %vm172, %v3058
      %p3091 = scmp.lt.s32.totalorder %s14, 1
      %s3092 = scalar_select %p3091, %s14, 1
      %s3093 = smul.addr %s3092, 32
      %s3094 = smul.addr %s3093, 4
      %s3095 = scalar_lea.vmem %s3, %s3094
      // Predicated region
      $region33: #{_lambda_.4} parent=31 // pred_check
        %p3096 = pneg %p100
      $region34: #{_lambda_.4} parent=31 // pred_check_branch
        %3098 = sbr.rel (%p3096) target = $region36
      $region35: #{_lambda_.4} parent=31 // pred_region
        _
      $region36: #{_lambda_.4} parent=31 // pred_fallthru
        _
    $region32: #{_lambda_.4} parent=5 // pred_fallthru
      _
    %p3099 = scmp.le.s32.totalorder 2, %s9
    // Predicated region
    $region37: #{_lambda_.4} parent=5 // pred_check
      %p3100 = pneg %p3099
    $region38: #{_lambda_.4} parent=5 // pred_check_branch
      %3102 = sbr.rel (%p3100) target = $region40
    $region39: #{_lambda_.4} parent=5 // pred_region
      %s3103 = ssub.s32 %s9, 2
      // Predicated region
      $region41: #{_lambda_.4} parent=39 // pred_check
        %p3104 = pneg %p106
      $region42: #{_lambda_.4} parent=39 // pred_check_branch
        %3106 = sbr.rel (%p3104) target = $region44
      $region43: #{_lambda_.4} parent=39 // pred_region
        %p3107 = scmp.lt.s32.totalorder %s15, 1
        %s3108 = scalar_select %p3107, %s15, 1
        %s3109 = smul.addr %s3108, 32
        %s3110 = smul.addr %s3109, 4
        %s3111 = scalar_lea.vmem %s3, %s3110
      $region44: #{_lambda_.4} parent=39 // pred_fallthru
        _
    $region40: #{_lambda_.4} parent=5 // pred_fallthru
      _
  $region6: #{_lambda_.4} parent=0 // loop_footer
    %s13 = sadd.s32 1, %s9
  $region7: #{_lambda_.4} parent=0 // loop_footer_branch
    %8 = sbr.rel target = $region3
  $region8: #{_lambda_.4} parent=0 // loop_exit
    _

</llo_original>
